<compile_context>
chip_gen: v7x
topology: tpu7x:2x2x1
jax: 0.10.0
libtpu: 0.0.40
codegen_flags: <defaults>
</compile_context>

<pallas_src>
import numpy as np
import jax
import jax.numpy as jnp
from jax import lax
from jax.experimental import pallas as pl
from jax.experimental.pallas import tpu as pltpu

# ----- SSIM constants (torchmetrics StructuralSimilarityIndexMeasure defaults, data_range=1.0)
_SSIM_K = 11
_SSIM_SIGMA = 1.5
_C1 = (0.01 * 1.0) ** 2
_C2 = (0.03 * 1.0) ** 2


def _gaussian_taps():
    d = np.arange(_SSIM_K, dtype=np.float64) - (_SSIM_K - 1) / 2.0
    g = np.exp(-(d / _SSIM_SIGMA) ** 2 / 2.0)
    g = g / g.sum()
    return [float(v) for v in g]


def _choose_tiling(N, H, W):
    """Split the batch into (groups G, steps S, samples/step Bt); N == G * S * Bt."""
    G = 2 if (N >= 2 and N % 2 == 0) else 1       # 2-way group split -> both v7x TCs
    S0 = N // G
    per_sample = 160 * H * W                      # rough per-sample VMEM working set
    budget = max(1, (32 << 20) // per_sample)
    bt_cap = max(1, min(S0, 4, budget))
    Bt = 1
    for cand in range(bt_cap, 0, -1):
        if S0 % cand == 0:
            Bt = cand
            break
    return G, S0 // Bt, Bt


def _make_kernel(Bt, S, H, W):
    """Build the Fusionloss kernel closed over static shapes."""
    Hv, Wv = H - _SSIM_K + 1, W - _SSIM_K + 1     # SSIM "valid" window counts
    g_taps = _gaussian_taps()
    f32 = jnp.float32
    bf16 = jnp.bfloat16

    def kernel(vis_ref, ir_ref, gen_ref, crcb_ref, out_ref,
               srd_ref, dc_ref, sc_ref, gh_ref, gw_ref,
               acc_in, acc_grad, acc_color, acc_ssim):
        step = pl.program_id(1)

        # ------- init: build constant band matrices in VMEM + zero accumulators -------
        @pl.when(step == 0)
        def _init():
            ri = lax.broadcasted_iota(jnp.int32, (H, H), 0)
            ci = lax.broadcasted_iota(jnp.int32, (H, H), 1)
            dh = ci - ri
            sr = jnp.where(dh == 0, 2.0, jnp.where(jnp.abs(dh) == 1, 1.0, 0.0))  # [1,2,1]
            dr = jnp.where(dh == -1, 1.0, jnp.where(dh == 1, -1.0, 0.0))          # [1,0,-1]
            srd_ref[...] = jnp.concatenate([sr, dr], axis=0).astype(bf16)

            gh = jnp.zeros((H, H), f32)
            for t in range(_SSIM_K):
                gh = gh + jnp.where(dh == t, g_taps[t], 0.0)
            gh_ref[...] = jnp.where(ri < Hv, gh, 0.0).astype(f32)   # valid row windows only

            rk = lax.broadcasted_iota(jnp.int32, (W, W), 0)
            cj = lax.broadcasted_iota(jnp.int32, (W, W), 1)
            dw = cj - rk
            dc_ref[...] = jnp.where(dw == 1, -1.0,
                                    jnp.where(dw == -1, 1.0, 0.0)).astype(bf16)   # [-1,0,1]
            sc_ref[...] = jnp.where(dw == 0, 2.0,
                                    jnp.where(jnp.abs(dw) == 1, 1.0, 0.0)).astype(bf16)

            gw = jnp.zeros((W, W), f32)
            for t in range(_SSIM_K):
                gw = gw + jnp.where(rk - cj == t, g_taps[t], 0.0)
            gw_ref[...] = jnp.where(cj < Wv, gw, 0.0).astype(f32)   # valid col windows only

            acc_in[...] = jnp.zeros_like(acc_in)
            acc_grad[...] = jnp.zeros_like(acc_grad)
            acc_color[...] = jnp.zeros_like(acc_color)
            acc_ssim[...] = jnp.zeros_like(acc_ssim)

        SRD = srd_ref[...]   # (2H, H) bf16: [row smooth ; row diff]
        DC = dc_ref[...]     # (W, W)  bf16: col diff
        SC = sc_ref[...]     # (W, W)  bf16: col smooth
        GH = gh_ref[...]     # (H, H)  f32 : Gaussian rows (valid-only)
        GW = gw_ref[...]     # (W, W)  f32 : Gaussian cols (valid-only)

        def mm(a, b):
            return jnp.dot(a, b, preferred_element_type=f32)

        # ------- load this step's samples (native dtype DMA, upcast in-kernel) --------
        Ys, IRs, GENs, Ps = [], [], [], []
        for b in range(Bt):
            Ys.append(vis_ref[b, 0].astype(f32))     # image_y == R channel
            IRs.append(ir_ref[b, 0].astype(f32))
            GENs.append(gen_ref[b, 0].astype(f32))
            Ps.append(jnp.maximum(Ys[b], IRs[b]))    # x_in_max

        # ------- loss_in = L1(max(image_y, image_ir), generate_img) -------------------
        s_in = jnp.zeros((1, 1), f32)
        for b in range(Bt):
            s_in = s_in + jnp.sum(jnp.abs(Ps[b] - GENs[b]), keepdims=True)
        acc_in[...] += s_in

        # ------- color loss: adjust_gamma(vis, 0.5, 1) -> RGB2YCrCb -> L1 -------------
        s_col = jnp.zeros((1, 1), f32)
        for b in range(Bt):
            Rg = jnp.clip(jnp.sqrt(Ys[b]), 0.0, 1.0)
            Gg = jnp.clip(jnp.sqrt(vis_ref[b, 1].astype(f32)), 0.0, 1.0)
            Bg = jnp.clip(jnp.sqrt(vis_ref[b, 2].astype(f32)), 0.0, 1.0)
            Yv = 0.299 * Rg + 0.587 * Gg + 0.114 * Bg
            Crv = (Rg - Yv) * 0.713 + 0.5
            Cbv = (Bg - Yv) * 0.564 + 0.5
            cr_f = crcb_ref[b, 0].astype(f32)
            cb_f = crcb_ref[b, 1].astype(f32)
            s_col = s_col + jnp.sum(jnp.abs(cb_f - Cbv) + jnp.abs(cr_f - Crv),
                                    keepdims=True)
        acc_color[...] += s_col

        # ------- Sobel-gradient L1: banded bf16 matmuls on the MXU --------------------
        planes = []
        for b in range(Bt):
            planes += [Ys[b], IRs[b], GENs[b]]
        P3 = len(planes)                                              # 3 * Bt
        rs, rd = [], []
        for p in range(P3):
            rp = mm(SRD, planes[p].astype(bf16))                      # (2H, W) f32
            rs.append(rp[0:H, :])                                     # row-smoothed
            rd.append(rp[H:2 * H, :])                                 # row-diffed
        gx_all = mm(jnp.concatenate(rs, axis=0).astype(bf16), DC)     # (P3*H, W)
        gy_all = mm(jnp.concatenate(rd, axis=0).astype(bf16), SC)     # (P3*H, W)

        def grad_of(p):
            return (jnp.abs(gx_all[p * H:(p + 1) * H, :])
                    + jnp.abs(gy_all[p * H:(p + 1) * H, :]))

        s_grad = jnp.zeros((1, 1), f32)
        for b in range(Bt):
            g_joint = jnp.maximum(grad_of(3 * b), grad_of(3 * b + 1))
            s_grad = s_grad + jnp.sum(jnp.abs(g_joint - grad_of(3 * b + 2)),
                                      keepdims=True)
        acc_grad[...] += s_grad

        # ------- SSIM(x_in_max, generate_img): f32 separable 11x11 Gaussian -----------
        gops = []
        for b in range(Bt):
            pimg, timg = Ps[b], GENs[b]
            gops += [pimg, timg, pimg * pimg, timg * timg, pimg * timg]
        Q = len(gops)                                                 # 5 * Bt
        row_blur = [mm(GH, gops[q]) for q in range(Q)]                # (H, W) each
        blur = mm(jnp.concatenate(row_blur, axis=0), GW)              # (Q*H, W)

        s_ssim = jnp.zeros((1, 1), f32)
        for b in range(Bt):
            base = 5 * b
            mu_p = blur[(base + 0) * H:(base + 1) * H, :]
            mu_t = blur[(base + 1) * H:(base + 2) * H, :]
            e_pp = blur[(base + 2) * H:(base + 3) * H, :]
            e_tt = blur[(base + 3) * H:(base + 4) * H, :]
            e_pt = blur[(base + 4) * H:(base + 5) * H, :]
            s_pp = e_pp - mu_p * mu_p
            s_tt = e_tt - mu_t * mu_t
            s_pt = e_pt - mu_p * mu_t
            num = (2.0 * mu_p * mu_t + _C1) * (2.0 * s_pt + _C2)
            den = (mu_p * mu_p + mu_t * mu_t + _C1) * (s_pp + s_tt + _C2)
            # Outside the Hv x Wv valid band all blurred stats are exactly 0, so
            # num/den == 1 exactly; the constant excess is subtracted in the wrapper.
            s_ssim = s_ssim + jnp.sum(num / den, keepdims=True)
        acc_ssim[...] += s_ssim

        # ------- finalize: emit this group's raw partial sums (lane-dense row) --------
        @pl.when(step == S - 1)
        def _finalize():
            sub = lax.broadcasted_iota(jnp.int32, (8, 128), 0)
            lane = lax.broadcasted_iota(jnp.int32, (8, 128), 1)
            row0 = sub == 0
            out_ref[0] = (jnp.where(row0 & (lane == 0), acc_in[...], 0.0)
                          + jnp.where(row0 & (lane == 1), acc_grad[...], 0.0)
                          + jnp.where(row0 & (lane == 2), acc_color[...], 0.0)
                          + jnp.where(row0 & (lane == 3), acc_ssim[...], 0.0))

    return kernel


def fusionloss(image_vis, image_ir, labels, generate_img, i, fusion_ycrcb):
    """JAX/Pallas equivalent of Fusionloss.forward.

    Returns (loss_total, loss_in, loss_grad, color_loss, loss_ssim) as scalars.
    `labels` and `i` are unused by the reference forward pass (kept for parity).
    """
    del labels, i  # unused in the PyTorch forward
    N, C, H, W = image_vis.shape
    if C != 3:
        raise ValueError("image_vis must have 3 channels (RGB)")
    if H < _SSIM_K or W < _SSIM_K:
        raise ValueError("H and W must be >= 11 for the 11x11 SSIM window")

    G, S, Bt = _choose_tiling(N, H, W)
    Hv, Wv = H - _SSIM_K + 1, W - _SSIM_K + 1

    fusion_crcb = fusion_ycrcb[:, 1:3]  # only Cr/Cb are read; skip DMAing channel 0
    kernel = _make_kernel(Bt, S, H, W)

    # VMEM budget: double-buffered input blocks + scratch band matrices + working set.
    itemsize = int(np.dtype(image_vis.dtype).itemsize)
    in_bytes = Bt * 7 * H * W * itemsize
    mat_bytes = (2 * H * H + 2 * W * W) * 2 + (H * H + W * W) * 4
    work_bytes = 160 * Bt * H * W
    need = 2 * in_bytes + mat_bytes + work_bytes + (4 << 20)
    vmem_cap = 64 << 20
    try:
        vmem_cap = int(getattr(pltpu.get_tpu_info(), "vmem_capacity_bytes", vmem_cap))
    except Exception:
        pass
    if vmem_cap <= 0:
        vmem_cap = 64 << 20
    vmem_bytes = int(min(max(need, 32 << 20), (vmem_cap * 7) // 8))

    out = pl.pallas_call(
        kernel,
        out_shape=jax.ShapeDtypeStruct((G, 8, 128), jnp.float32),
        grid_spec=pltpu.PrefetchScalarGridSpec(
            num_scalar_prefetch=0,
            grid=(G, S),
            in_specs=[
                pl.BlockSpec((Bt, 3, H, W), lambda g, s: (g * S + s, 0, 0, 0)),  # image_vis
                pl.BlockSpec((Bt, 1, H, W), lambda g, s: (g * S + s, 0, 0, 0)),  # image_ir
                pl.BlockSpec((Bt, 1, H, W), lambda g, s: (g * S + s, 0, 0, 0)),  # generate_img
                pl.BlockSpec((Bt, 2, H, W), lambda g, s: (g * S + s, 0, 0, 0)),  # fusion Cr/Cb
            ],
            out_specs=pl.BlockSpec((1, 8, 128), lambda g, s: (g, 0, 0)),
            scratch_shapes=[
                pltpu.VMEM((2 * H, H), jnp.bfloat16),   # [SR; DR] stacked Sobel row mats
                pltpu.VMEM((W, W), jnp.bfloat16),       # DC Sobel col diff
                pltpu.VMEM((W, W), jnp.bfloat16),       # SC Sobel col smooth
                pltpu.VMEM((H, H), jnp.float32),        # GH Gaussian rows (valid-only)
                pltpu.VMEM((W, W), jnp.float32),        # GW Gaussian cols (valid-only)
                pltpu.VMEM((1, 1), jnp.float32),        # sum |max(y, ir) - gen|
                pltpu.VMEM((1, 1), jnp.float32),        # sum |max(grad) - grad(gen)|
                pltpu.VMEM((1, 1), jnp.float32),        # sum color L1
                pltpu.VMEM((1, 1), jnp.float32),        # sum SSIM map (unmasked)
            ],
        ),
        compiler_params=pltpu.CompilerParams(
            dimension_semantics=("parallel", "arbitrary"),
            vmem_limit_bytes=vmem_bytes),
    )(image_vis, image_ir, generate_img, fusion_crcb)

    # Combine per-group (per-core) partial sums and normalize.
    totals = jnp.sum(out[:, 0, :4], axis=0)
    inv_px = 1.0 / float(N * H * W)
    inv_win = 1.0 / float(N * Hv * Wv)
    loss_in = totals[0] * inv_px
    loss_grad = totals[1] * inv_px
    color_loss = totals[2] * inv_px
    ssim_excess = float(N * (H * W - Hv * Wv))   # SSIM map == 1 exactly outside valid band
    loss_ssim = 1.0 - (totals[3] - ssim_excess) * inv_win
    loss_total = loss_in + 10.0 * loss_grad + 10.0 * color_loss + loss_ssim
    return loss_total, loss_in, loss_grad, color_loss, loss_ssim


if __name__ == "__main__":
    key = jax.random.PRNGKey(0)
    k1, k2, k3, k4 = jax.random.split(key, 4)
    # Small shapes; N=16 exercises the full tiling (G=2 groups, S=2 steps, Bt=4 samples/step).
    N, H, W = 16, 16, 16

    image_vis = jax.random.uniform(k1, (N, 3, H, W), dtype=jnp.float32)    # RGB in [0, 1]
    image_ir = jax.random.uniform(k2, (N, 1, H, W), dtype=jnp.float32)
    generate_img = jax.random.uniform(k3, (N, 1, H, W), dtype=jnp.float32)
    fusion_ycrcb = jax.random.uniform(k4, (N, 3, H, W), dtype=jnp.float32)
    labels = jnp.zeros((N, H, W), dtype=jnp.int32)  # unused by forward
    step_i = 0                                      # unused by forward

    losses = fusionloss(image_vis, image_ir, labels, generate_img, step_i, fusion_ycrcb)
    losses = jax.block_until_ready(losses)
    print("KERNEL_OK")
</pallas_src>

<mosaic_0001>
module attributes {stable_mosaic.version = 11 : i64} {
  func.func @kernel(%arg0: i32, %arg1: i32, %arg2: memref<4x3x16x16xf32, #tpu.memory_space<vmem>>, %arg3: memref<4x1x16x16xf32, #tpu.memory_space<vmem>>, %arg4: memref<4x1x16x16xf32, #tpu.memory_space<vmem>>, %arg5: memref<4x2x16x16xf32, #tpu.memory_space<vmem>>, %arg6: memref<1x8x128xf32, #tpu.memory_space<vmem>>, %arg7: memref<32x16xbf16, #tpu.memory_space<vmem>>, %arg8: memref<16x16xbf16, #tpu.memory_space<vmem>>, %arg9: memref<16x16xbf16, #tpu.memory_space<vmem>>, %arg10: memref<16x16xf32, #tpu.memory_space<vmem>>, %arg11: memref<16x16xf32, #tpu.memory_space<vmem>>, %arg12: memref<1x1xf32, #tpu.memory_space<vmem>>, %arg13: memref<1x1xf32, #tpu.memory_space<vmem>>, %arg14: memref<1x1xf32, #tpu.memory_space<vmem>>, %arg15: memref<1x1xf32, #tpu.memory_space<vmem>>) attributes {dimension_semantics = [#tpu.dimension_semantics<parallel>, #tpu.dimension_semantics<arbitrary>], iteration_bounds = array<i64: 2, 2>, scalar_prefetch = 0 : i64, scratch_operands = 9 : i64, tpu.core_type = #tpu.core_type<tc>, window_params = [{transform_indices = @transform_0, window_bounds = array<i64: 4, 3, 16, 16>}, {transform_indices = @transform_1, window_bounds = array<i64: 4, 1, 16, 16>}, {transform_indices = @transform_2, window_bounds = array<i64: 4, 1, 16, 16>}, {transform_indices = @transform_3, window_bounds = array<i64: 4, 2, 16, 16>}, {transform_indices = @transform_4, window_bounds = array<i64: 1, 8, 128>}]} {
    %c0_i32 = arith.constant 0 : i32
    %0 = arith.cmpi eq, %arg1, %c0_i32 : i32
    %1 = arith.extui %0 : i1 to i32
    %c0_i32_0 = arith.constant 0 : i32
    %2 = arith.cmpi ne, %1, %c0_i32_0 : i32
    scf.if %2 {
      %629 = tpu.iota {dimensions = array<i32: 0>} : vector<16x16xi32>
      %630 = tpu.iota {dimensions = array<i32: 1>} : vector<16x16xi32>
      %631 = arith.subi %630, %629 : vector<16x16xi32>
      %c0_i32_266 = arith.constant 0 : i32
      %632 = vector.broadcast %c0_i32_266 : i32 to vector<16x16xi32>
      %633 = arith.cmpi eq, %631, %632 : vector<16x16xi32>
      %634 = math.absi %631 : vector<16x16xi32>
      %c1_i32_267 = arith.constant 1 : i32
      %635 = vector.broadcast %c1_i32_267 : i32 to vector<16x16xi32>
      %636 = arith.cmpi eq, %634, %635 : vector<16x16xi32>
      %cst_268 = arith.constant 1.000000e+00 : f32
      %cst_269 = arith.constant 0.000000e+00 : f32
      %637 = vector.broadcast %cst_268 : f32 to vector<16x16xf32>
      %638 = vector.broadcast %cst_269 : f32 to vector<16x16xf32>
      %639 = arith.select %636, %637, %638 : vector<16x16xi1>, vector<16x16xf32>
      %cst_270 = arith.constant 2.000000e+00 : f32
      %640 = vector.broadcast %cst_270 : f32 to vector<16x16xf32>
      %641 = arith.select %633, %640, %639 : vector<16x16xi1>, vector<16x16xf32>
      %c-1_i32 = arith.constant -1 : i32
      %642 = vector.broadcast %c-1_i32 : i32 to vector<16x16xi32>
      %643 = arith.cmpi eq, %631, %642 : vector<16x16xi32>
      %c1_i32_271 = arith.constant 1 : i32
      %644 = vector.broadcast %c1_i32_271 : i32 to vector<16x16xi32>
      %645 = arith.cmpi eq, %631, %644 : vector<16x16xi32>
      %cst_272 = arith.constant -1.000000e+00 : f32
      %cst_273 = arith.constant 0.000000e+00 : f32
      %646 = vector.broadcast %cst_272 : f32 to vector<16x16xf32>
      %647 = vector.broadcast %cst_273 : f32 to vector<16x16xf32>
      %648 = arith.select %645, %646, %647 : vector<16x16xi1>, vector<16x16xf32>
      %cst_274 = arith.constant 1.000000e+00 : f32
      %649 = vector.broadcast %cst_274 : f32 to vector<16x16xf32>
      %650 = arith.select %643, %649, %648 : vector<16x16xi1>, vector<16x16xf32>
      %651 = tpu.concatenate %641, %650 in 0 : vector<16x16xf32>, vector<16x16xf32> -> vector<32x16xf32>
      %652 = arith.truncf %651 : vector<32x16xf32> to vector<32x16xbf16>
      %c0_275 = arith.constant 0 : index
      %c0_276 = arith.constant 0 : index
      %653 = vector.load %arg7[%c0_275, %c0_276] : memref<32x16xbf16, #tpu.memory_space<vmem>>, vector<32x16xbf16>
      tpu.vector_store %arg7[%c0_275, %c0_276], %652 {strides = array<i32>} : memref<32x16xbf16, #tpu.memory_space<vmem>>, vector<32x16xbf16>,
      %cst_277 = arith.constant 0.000000e+00 : f32
      %654 = vector.broadcast %cst_277 : f32 to vector<16x16xf32>
      %c0_i32_278 = arith.constant 0 : i32
      %655 = vector.broadcast %c0_i32_278 : i32 to vector<16x16xi32>
      %656 = arith.cmpi eq, %631, %655 : vector<16x16xi32>
      %cst_279 = arith.constant 0.00102838012 : f32
      %cst_280 = arith.constant 0.000000e+00 : f32
      %657 = vector.broadcast %cst_279 : f32 to vector<16x16xf32>
      %658 = vector.broadcast %cst_280 : f32 to vector<16x16xf32>
      %659 = arith.select %656, %657, %658 : vector<16x16xi1>, vector<16x16xf32>
      %660 = arith.addf %654, %659 : vector<16x16xf32>
      %c1_i32_281 = arith.constant 1 : i32
      %661 = vector.broadcast %c1_i32_281 : i32 to vector<16x16xi32>
      %662 = arith.cmpi eq, %631, %661 : vector<16x16xi32>
      %cst_282 = arith.constant 0.00759875821 : f32
      %cst_283 = arith.constant 0.000000e+00 : f32
      %663 = vector.broadcast %cst_282 : f32 to vector<16x16xf32>
      %664 = vector.broadcast %cst_283 : f32 to vector<16x16xf32>
      %665 = arith.select %662, %663, %664 : vector<16x16xi1>, vector<16x16xf32>
      %666 = arith.addf %660, %665 : vector<16x16xf32>
      %c2_i32 = arith.constant 2 : i32
      %667 = vector.broadcast %c2_i32 : i32 to vector<16x16xi32>
      %668 = arith.cmpi eq, %631, %667 : vector<16x16xi32>
      %cst_284 = arith.constant 0.0360007733 : f32
      %cst_285 = arith.constant 0.000000e+00 : f32
      %669 = vector.broadcast %cst_284 : f32 to vector<16x16xf32>
      %670 = vector.broadcast %cst_285 : f32 to vector<16x16xf32>
      %671 = arith.select %668, %669, %670 : vector<16x16xi1>, vector<16x16xf32>
      %672 = arith.addf %666, %671 : vector<16x16xf32>
      %c3_i32 = arith.constant 3 : i32
      %673 = vector.broadcast %c3_i32 : i32 to vector<16x16xi32>
      %674 = arith.cmpi eq, %631, %673 : vector<16x16xi32>
      %cst_286 = arith.constant 0.109360687 : f32
      %cst_287 = arith.constant 0.000000e+00 : f32
      %675 = vector.broadcast %cst_286 : f32 to vector<16x16xf32>
      %676 = vector.broadcast %cst_287 : f32 to vector<16x16xf32>
      %677 = arith.select %674, %675, %676 : vector<16x16xi1>, vector<16x16xf32>
      %678 = arith.addf %672, %677 : vector<16x16xf32>
      %c4_i32 = arith.constant 4 : i32
      %679 = vector.broadcast %c4_i32 : i32 to vector<16x16xi32>
      %680 = arith.cmpi eq, %631, %679 : vector<16x16xi32>
      %cst_288 = arith.constant 0.213005543 : f32
      %cst_289 = arith.constant 0.000000e+00 : f32
      %681 = vector.broadcast %cst_288 : f32 to vector<16x16xf32>
      %682 = vector.broadcast %cst_289 : f32 to vector<16x16xf32>
      %683 = arith.select %680, %681, %682 : vector<16x16xi1>, vector<16x16xf32>
      %684 = arith.addf %678, %683 : vector<16x16xf32>
      %c5_i32 = arith.constant 5 : i32
      %685 = vector.broadcast %c5_i32 : i32 to vector<16x16xi32>
      %686 = arith.cmpi eq, %631, %685 : vector<16x16xi32>
      %cst_290 = arith.constant 0.266011715 : f32
      %cst_291 = arith.constant 0.000000e+00 : f32
      %687 = vector.broadcast %cst_290 : f32 to vector<16x16xf32>
      %688 = vector.broadcast %cst_291 : f32 to vector<16x16xf32>
      %689 = arith.select %686, %687, %688 : vector<16x16xi1>, vector<16x16xf32>
      %690 = arith.addf %684, %689 : vector<16x16xf32>
      %c6_i32 = arith.constant 6 : i32
      %691 = vector.broadcast %c6_i32 : i32 to vector<16x16xi32>
      %692 = arith.cmpi eq, %631, %691 : vector<16x16xi32>
      %cst_292 = arith.constant 0.213005543 : f32
      %cst_293 = arith.constant 0.000000e+00 : f32
      %693 = vector.broadcast %cst_292 : f32 to vector<16x16xf32>
      %694 = vector.broadcast %cst_293 : f32 to vector<16x16xf32>
      %695 = arith.select %692, %693, %694 : vector<16x16xi1>, vector<16x16xf32>
      %696 = arith.addf %690, %695 : vector<16x16xf32>
      %c7_i32 = arith.constant 7 : i32
      %697 = vector.broadcast %c7_i32 : i32 to vector<16x16xi32>
      %698 = arith.cmpi eq, %631, %697 : vector<16x16xi32>
      %cst_294 = arith.constant 0.109360687 : f32
      %cst_295 = arith.constant 0.000000e+00 : f32
      %699 = vector.broadcast %cst_294 : f32 to vector<16x16xf32>
      %700 = vector.broadcast %cst_295 : f32 to vector<16x16xf32>
      %701 = arith.select %698, %699, %700 : vector<16x16xi1>, vector<16x16xf32>
      %702 = arith.addf %696, %701 : vector<16x16xf32>
      %c8_i32 = arith.constant 8 : i32
      %703 = vector.broadcast %c8_i32 : i32 to vector<16x16xi32>
      %704 = arith.cmpi eq, %631, %703 : vector<16x16xi32>
      %cst_296 = arith.constant 0.0360007733 : f32
      %cst_297 = arith.constant 0.000000e+00 : f32
      %705 = vector.broadcast %cst_296 : f32 to vector<16x16xf32>
      %706 = vector.broadcast %cst_297 : f32 to vector<16x16xf32>
      %707 = arith.select %704, %705, %706 : vector<16x16xi1>, vector<16x16xf32>
      %708 = arith.addf %702, %707 : vector<16x16xf32>
      %c9_i32 = arith.constant 9 : i32
      %709 = vector.broadcast %c9_i32 : i32 to vector<16x16xi32>
      %710 = arith.cmpi eq, %631, %709 : vector<16x16xi32>
      %cst_298 = arith.constant 0.00759875821 : f32
      %cst_299 = arith.constant 0.000000e+00 : f32
      %711 = vector.broadcast %cst_298 : f32 to vector<16x16xf32>
      %712 = vector.broadcast %cst_299 : f32 to vector<16x16xf32>
      %713 = arith.select %710, %711, %712 : vector<16x16xi1>, vector<16x16xf32>
      %714 = arith.addf %708, %713 : vector<16x16xf32>
      %c10_i32 = arith.constant 10 : i32
      %715 = vector.broadcast %c10_i32 : i32 to vector<16x16xi32>
      %716 = arith.cmpi eq, %631, %715 : vector<16x16xi32>
      %cst_300 = arith.constant 0.00102838012 : f32
      %cst_301 = arith.constant 0.000000e+00 : f32
      %717 = vector.broadcast %cst_300 : f32 to vector<16x16xf32>
      %718 = vector.broadcast %cst_301 : f32 to vector<16x16xf32>
      %719 = arith.select %716, %717, %718 : vector<16x16xi1>, vector<16x16xf32>
      %720 = arith.addf %714, %719 : vector<16x16xf32>
      %c6_i32_302 = arith.constant 6 : i32
      %721 = vector.broadcast %c6_i32_302 : i32 to vector<16x16xi32>
      %722 = arith.cmpi slt, %629, %721 : vector<16x16xi32>
      %cst_303 = arith.constant 0.000000e+00 : f32
      %723 = vector.broadcast %cst_303 : f32 to vector<16x16xf32>
      %724 = arith.select %722, %720, %723 : vector<16x16xi1>, vector<16x16xf32>
      %c0_304 = arith.constant 0 : index
      %c0_305 = arith.constant 0 : index
      %725 = vector.load %arg10[%c0_304, %c0_305] : memref<16x16xf32, #tpu.memory_space<vmem>>, vector<16x16xf32>
      tpu.vector_store %arg10[%c0_304, %c0_305], %724 {strides = array<i32>} : memref<16x16xf32, #tpu.memory_space<vmem>>, vector<16x16xf32>,
      %726 = tpu.iota {dimensions = array<i32: 0>} : vector<16x16xi32>
      %727 = tpu.iota {dimensions = array<i32: 1>} : vector<16x16xi32>
      %728 = arith.subi %727, %726 : vector<16x16xi32>
      %c1_i32_306 = arith.constant 1 : i32
      %729 = vector.broadcast %c1_i32_306 : i32 to vector<16x16xi32>
      %730 = arith.cmpi eq, %728, %729 : vector<16x16xi32>
      %c-1_i32_307 = arith.constant -1 : i32
      %731 = vector.broadcast %c-1_i32_307 : i32 to vector<16x16xi32>
      %732 = arith.cmpi eq, %728, %731 : vector<16x16xi32>
      %cst_308 = arith.constant 1.000000e+00 : f32
      %cst_309 = arith.constant 0.000000e+00 : f32
      %733 = vector.broadcast %cst_308 : f32 to vector<16x16xf32>
      %734 = vector.broadcast %cst_309 : f32 to vector<16x16xf32>
      %735 = arith.select %732, %733, %734 : vector<16x16xi1>, vector<16x16xf32>
      %cst_310 = arith.constant -1.000000e+00 : f32
      %736 = vector.broadcast %cst_310 : f32 to vector<16x16xf32>
      %737 = arith.select %730, %736, %735 : vector<16x16xi1>, vector<16x16xf32>
      %738 = arith.truncf %737 : vector<16x16xf32> to vector<16x16xbf16>
      %c0_311 = arith.constant 0 : index
      %c0_312 = arith.constant 0 : index
      %739 = vector.load %arg8[%c0_311, %c0_312] : memref<16x16xbf16, #tpu.memory_space<vmem>>, vector<16x16xbf16>
      tpu.vector_store %arg8[%c0_311, %c0_312], %738 {strides = array<i32>} : memref<16x16xbf16, #tpu.memory_space<vmem>>, vector<16x16xbf16>,
      %c0_i32_313 = arith.constant 0 : i32
      %740 = vector.broadcast %c0_i32_313 : i32 to vector<16x16xi32>
      %741 = arith.cmpi eq, %728, %740 : vector<16x16xi32>
      %742 = math.absi %728 : vector<16x16xi32>
      %c1_i32_314 = arith.constant 1 : i32
      %743 = vector.broadcast %c1_i32_314 : i32 to vector<16x16xi32>
      %744 = arith.cmpi eq, %742, %743 : vector<16x16xi32>
      %cst_315 = arith.constant 1.000000e+00 : f32
      %cst_316 = arith.constant 0.000000e+00 : f32
      %745 = vector.broadcast %cst_315 : f32 to vector<16x16xf32>
      %746 = vector.broadcast %cst_316 : f32 to vector<16x16xf32>
      %747 = arith.select %744, %745, %746 : vector<16x16xi1>, vector<16x16xf32>
      %cst_317 = arith.constant 2.000000e+00 : f32
      %748 = vector.broadcast %cst_317 : f32 to vector<16x16xf32>
      %749 = arith.select %741, %748, %747 : vector<16x16xi1>, vector<16x16xf32>
      %750 = arith.truncf %749 : vector<16x16xf32> to vector<16x16xbf16>
      %c0_318 = arith.constant 0 : index
      %c0_319 = arith.constant 0 : index
      %751 = vector.load %arg9[%c0_318, %c0_319] : memref<16x16xbf16, #tpu.memory_space<vmem>>, vector<16x16xbf16>
      tpu.vector_store %arg9[%c0_318, %c0_319], %750 {strides = array<i32>} : memref<16x16xbf16, #tpu.memory_space<vmem>>, vector<16x16xbf16>,
      %cst_320 = arith.constant 0.000000e+00 : f32
      %752 = vector.broadcast %cst_320 : f32 to vector<16x16xf32>
      %753 = arith.subi %726, %727 : vector<16x16xi32>
      %c0_i32_321 = arith.constant 0 : i32
      %754 = vector.broadcast %c0_i32_321 : i32 to vector<16x16xi32>
      %755 = arith.cmpi eq, %753, %754 : vector<16x16xi32>
      %cst_322 = arith.constant 0.00102838012 : f32
      %cst_323 = arith.constant 0.000000e+00 : f32
      %756 = vector.broadcast %cst_322 : f32 to vector<16x16xf32>
      %757 = vector.broadcast %cst_323 : f32 to vector<16x16xf32>
      %758 = arith.select %755, %756, %757 : vector<16x16xi1>, vector<16x16xf32>
      %759 = arith.addf %752, %758 : vector<16x16xf32>
      %760 = arith.subi %726, %727 : vector<16x16xi32>
      %c1_i32_324 = arith.constant 1 : i32
      %761 = vector.broadcast %c1_i32_324 : i32 to vector<16x16xi32>
      %762 = arith.cmpi eq, %760, %761 : vector<16x16xi32>
      %cst_325 = arith.constant 0.00759875821 : f32
      %cst_326 = arith.constant 0.000000e+00 : f32
      %763 = vector.broadcast %cst_325 : f32 to vector<16x16xf32>
      %764 = vector.broadcast %cst_326 : f32 to vector<16x16xf32>
      %765 = arith.select %762, %763, %764 : vector<16x16xi1>, vector<16x16xf32>
      %766 = arith.addf %759, %765 : vector<16x16xf32>
      %767 = arith.subi %726, %727 : vector<16x16xi32>
      %c2_i32_327 = arith.constant 2 : i32
      %768 = vector.broadcast %c2_i32_327 : i32 to vector<16x16xi32>
      %769 = arith.cmpi eq, %767, %768 : vector<16x16xi32>
      %cst_328 = arith.constant 0.0360007733 : f32
      %cst_329 = arith.constant 0.000000e+00 : f32
      %770 = vector.broadcast %cst_328 : f32 to vector<16x16xf32>
      %771 = vector.broadcast %cst_329 : f32 to vector<16x16xf32>
      %772 = arith.select %769, %770, %771 : vector<16x16xi1>, vector<16x16xf32>
      %773 = arith.addf %766, %772 : vector<16x16xf32>
      %774 = arith.subi %726, %727 : vector<16x16xi32>
      %c3_i32_330 = arith.constant 3 : i32
      %775 = vector.broadcast %c3_i32_330 : i32 to vector<16x16xi32>
      %776 = arith.cmpi eq, %774, %775 : vector<16x16xi32>
      %cst_331 = arith.constant 0.109360687 : f32
      %cst_332 = arith.constant 0.000000e+00 : f32
      %777 = vector.broadcast %cst_331 : f32 to vector<16x16xf32>
      %778 = vector.broadcast %cst_332 : f32 to vector<16x16xf32>
      %779 = arith.select %776, %777, %778 : vector<16x16xi1>, vector<16x16xf32>
      %780 = arith.addf %773, %779 : vector<16x16xf32>
      %781 = arith.subi %726, %727 : vector<16x16xi32>
      %c4_i32_333 = arith.constant 4 : i32
      %782 = vector.broadcast %c4_i32_333 : i32 to vector<16x16xi32>
      %783 = arith.cmpi eq, %781, %782 : vector<16x16xi32>
      %cst_334 = arith.constant 0.213005543 : f32
      %cst_335 = arith.constant 0.000000e+00 : f32
      %784 = vector.broadcast %cst_334 : f32 to vector<16x16xf32>
      %785 = vector.broadcast %cst_335 : f32 to vector<16x16xf32>
      %786 = arith.select %783, %784, %785 : vector<16x16xi1>, vector<16x16xf32>
      %787 = arith.addf %780, %786 : vector<16x16xf32>
      %788 = arith.subi %726, %727 : vector<16x16xi32>
      %c5_i32_336 = arith.constant 5 : i32
      %789 = vector.broadcast %c5_i32_336 : i32 to vector<16x16xi32>
      %790 = arith.cmpi eq, %788, %789 : vector<16x16xi32>
      %cst_337 = arith.constant 0.266011715 : f32
      %cst_338 = arith.constant 0.000000e+00 : f32
      %791 = vector.broadcast %cst_337 : f32 to vector<16x16xf32>
      %792 = vector.broadcast %cst_338 : f32 to vector<16x16xf32>
      %793 = arith.select %790, %791, %792 : vector<16x16xi1>, vector<16x16xf32>
      %794 = arith.addf %787, %793 : vector<16x16xf32>
      %795 = arith.subi %726, %727 : vector<16x16xi32>
      %c6_i32_339 = arith.constant 6 : i32
      %796 = vector.broadcast %c6_i32_339 : i32 to vector<16x16xi32>
      %797 = arith.cmpi eq, %795, %796 : vector<16x16xi32>
      %cst_340 = arith.constant 0.213005543 : f32
      %cst_341 = arith.constant 0.000000e+00 : f32
      %798 = vector.broadcast %cst_340 : f32 to vector<16x16xf32>
      %799 = vector.broadcast %cst_341 : f32 to vector<16x16xf32>
      %800 = arith.select %797, %798, %799 : vector<16x16xi1>, vector<16x16xf32>
      %801 = arith.addf %794, %800 : vector<16x16xf32>
      %802 = arith.subi %726, %727 : vector<16x16xi32>
      %c7_i32_342 = arith.constant 7 : i32
      %803 = vector.broadcast %c7_i32_342 : i32 to vector<16x16xi32>
      %804 = arith.cmpi eq, %802, %803 : vector<16x16xi32>
      %cst_343 = arith.constant 0.109360687 : f32
      %cst_344 = arith.constant 0.000000e+00 : f32
      %805 = vector.broadcast %cst_343 : f32 to vector<16x16xf32>
      %806 = vector.broadcast %cst_344 : f32 to vector<16x16xf32>
      %807 = arith.select %804, %805, %806 : vector<16x16xi1>, vector<16x16xf32>
      %808 = arith.addf %801, %807 : vector<16x16xf32>
      %809 = arith.subi %726, %727 : vector<16x16xi32>
      %c8_i32_345 = arith.constant 8 : i32
      %810 = vector.broadcast %c8_i32_345 : i32 to vector<16x16xi32>
      %811 = arith.cmpi eq, %809, %810 : vector<16x16xi32>
      %cst_346 = arith.constant 0.0360007733 : f32
      %cst_347 = arith.constant 0.000000e+00 : f32
      %812 = vector.broadcast %cst_346 : f32 to vector<16x16xf32>
      %813 = vector.broadcast %cst_347 : f32 to vector<16x16xf32>
      %814 = arith.select %811, %812, %813 : vector<16x16xi1>, vector<16x16xf32>
      %815 = arith.addf %808, %814 : vector<16x16xf32>
      %816 = arith.subi %726, %727 : vector<16x16xi32>
      %c9_i32_348 = arith.constant 9 : i32
      %817 = vector.broadcast %c9_i32_348 : i32 to vector<16x16xi32>
      %818 = arith.cmpi eq, %816, %817 : vector<16x16xi32>
      %cst_349 = arith.constant 0.00759875821 : f32
      %cst_350 = arith.constant 0.000000e+00 : f32
      %819 = vector.broadcast %cst_349 : f32 to vector<16x16xf32>
      %820 = vector.broadcast %cst_350 : f32 to vector<16x16xf32>
      %821 = arith.select %818, %819, %820 : vector<16x16xi1>, vector<16x16xf32>
      %822 = arith.addf %815, %821 : vector<16x16xf32>
      %823 = arith.subi %726, %727 : vector<16x16xi32>
      %c10_i32_351 = arith.constant 10 : i32
      %824 = vector.broadcast %c10_i32_351 : i32 to vector<16x16xi32>
      %825 = arith.cmpi eq, %823, %824 : vector<16x16xi32>
      %cst_352 = arith.constant 0.00102838012 : f32
      %cst_353 = arith.constant 0.000000e+00 : f32
      %826 = vector.broadcast %cst_352 : f32 to vector<16x16xf32>
      %827 = vector.broadcast %cst_353 : f32 to vector<16x16xf32>
      %828 = arith.select %825, %826, %827 : vector<16x16xi1>, vector<16x16xf32>
      %829 = arith.addf %822, %828 : vector<16x16xf32>
      %c6_i32_354 = arith.constant 6 : i32
      %830 = vector.broadcast %c6_i32_354 : i32 to vector<16x16xi32>
      %831 = arith.cmpi slt, %727, %830 : vector<16x16xi32>
      %cst_355 = arith.constant 0.000000e+00 : f32
      %832 = vector.broadcast %cst_355 : f32 to vector<16x16xf32>
      %833 = arith.select %831, %829, %832 : vector<16x16xi1>, vector<16x16xf32>
      %c0_356 = arith.constant 0 : index
      %c0_357 = arith.constant 0 : index
      %834 = vector.load %arg11[%c0_356, %c0_357] : memref<16x16xf32, #tpu.memory_space<vmem>>, vector<16x16xf32>
      tpu.vector_store %arg11[%c0_356, %c0_357], %833 {strides = array<i32>} : memref<16x16xf32, #tpu.memory_space<vmem>>, vector<16x16xf32>,
      %cst_358 = arith.constant 0.000000e+00 : f32
      %835 = vector.broadcast %cst_358 : f32 to vector<1x1xf32>
      %c0_359 = arith.constant 0 : index
      %c0_360 = arith.constant 0 : index
      %836 = vector.load %arg12[%c0_359, %c0_360] : memref<1x1xf32, #tpu.memory_space<vmem>>, vector<1x1xf32>
      tpu.vector_store %arg12[%c0_359, %c0_360], %835 {strides = array<i32>} : memref<1x1xf32, #tpu.memory_space<vmem>>, vector<1x1xf32>,
      %cst_361 = arith.constant 0.000000e+00 : f32
      %837 = vector.broadcast %cst_361 : f32 to vector<1x1xf32>
      %c0_362 = arith.constant 0 : index
      %c0_363 = arith.constant 0 : index
      %838 = vector.load %arg13[%c0_362, %c0_363] : memref<1x1xf32, #tpu.memory_space<vmem>>, vector<1x1xf32>
      tpu.vector_store %arg13[%c0_362, %c0_363], %837 {strides = array<i32>} : memref<1x1xf32, #tpu.memory_space<vmem>>, vector<1x1xf32>,
      %cst_364 = arith.constant 0.000000e+00 : f32
      %839 = vector.broadcast %cst_364 : f32 to vector<1x1xf32>
      %c0_365 = arith.constant 0 : index
      %c0_366 = arith.constant 0 : index
      %840 = vector.load %arg14[%c0_365, %c0_366] : memref<1x1xf32, #tpu.memory_space<vmem>>, vector<1x1xf32>
      tpu.vector_store %arg14[%c0_365, %c0_366], %839 {strides = array<i32>} : memref<1x1xf32, #tpu.memory_space<vmem>>, vector<1x1xf32>,
      %cst_367 = arith.constant 0.000000e+00 : f32
      %841 = vector.broadcast %cst_367 : f32 to vector<1x1xf32>
      %c0_368 = arith.constant 0 : index
      %c0_369 = arith.constant 0 : index
      %842 = vector.load %arg15[%c0_368, %c0_369] : memref<1x1xf32, #tpu.memory_space<vmem>>, vector<1x1xf32>
      tpu.vector_store %arg15[%c0_368, %c0_369], %841 {strides = array<i32>} : memref<1x1xf32, #tpu.memory_space<vmem>>, vector<1x1xf32>,
    } else {
    }
    %c0 = arith.constant 0 : index
    %c0_1 = arith.constant 0 : index
    %3 = vector.load %arg7[%c0, %c0_1] : memref<32x16xbf16, #tpu.memory_space<vmem>>, vector<32x16xbf16>
    %c0_2 = arith.constant 0 : index
    %c0_3 = arith.constant 0 : index
    %4 = vector.load %arg8[%c0_2, %c0_3] : memref<16x16xbf16, #tpu.memory_space<vmem>>, vector<16x16xbf16>
    %c0_4 = arith.constant 0 : index
    %c0_5 = arith.constant 0 : index
    %5 = vector.load %arg9[%c0_4, %c0_5] : memref<16x16xbf16, #tpu.memory_space<vmem>>, vector<16x16xbf16>
    %c0_6 = arith.constant 0 : index
    %c0_7 = arith.constant 0 : index
    %6 = vector.load %arg10[%c0_6, %c0_7] : memref<16x16xf32, #tpu.memory_space<vmem>>, vector<16x16xf32>
    %c0_8 = arith.constant 0 : index
    %c0_9 = arith.constant 0 : index
    %7 = vector.load %arg11[%c0_8, %c0_9] : memref<16x16xf32, #tpu.memory_space<vmem>>, vector<16x16xf32>
    %c0_10 = arith.constant 0 : index
    %c0_11 = arith.constant 0 : index
    %c0_12 = arith.constant 0 : index
    %c0_13 = arith.constant 0 : index
    %8 = vector.load %arg2[%c0_10, %c0_11, %c0_12, %c0_13] : memref<4x3x16x16xf32, #tpu.memory_space<vmem>>, vector<1x1x16x16xf32>
    %9 = vector.shape_cast %8 : vector<1x1x16x16xf32> to vector<16x16xf32>
    %c0_14 = arith.constant 0 : index
    %c0_15 = arith.constant 0 : index
    %c0_16 = arith.constant 0 : index
    %c0_17 = arith.constant 0 : index
    %10 = vector.load %arg3[%c0_14, %c0_15, %c0_16, %c0_17] : memref<4x1x16x16xf32, #tpu.memory_space<vmem>>, vector<1x1x16x16xf32>
    %11 = vector.shape_cast %10 : vector<1x1x16x16xf32> to vector<16x16xf32>
    %c0_18 = arith.constant 0 : index
    %c0_19 = arith.constant 0 : index
    %c0_20 = arith.constant 0 : index
    %c0_21 = arith.constant 0 : index
    %12 = vector.load %arg4[%c0_18, %c0_19, %c0_20, %c0_21] : memref<4x1x16x16xf32, #tpu.memory_space<vmem>>, vector<1x1x16x16xf32>
    %13 = vector.shape_cast %12 : vector<1x1x16x16xf32> to vector<16x16xf32>
    %14 = arith.maximumf %9, %11 : vector<16x16xf32>
    %c1 = arith.constant 1 : index
    %c0_22 = arith.constant 0 : index
    %c0_23 = arith.constant 0 : index
    %c0_24 = arith.constant 0 : index
    %15 = vector.load %arg2[%c1, %c0_22, %c0_23, %c0_24] : memref<4x3x16x16xf32, #tpu.memory_space<vmem>>, vector<1x1x16x16xf32>
    %16 = vector.shape_cast %15 : vector<1x1x16x16xf32> to vector<16x16xf32>
    %c1_25 = arith.constant 1 : index
    %c0_26 = arith.constant 0 : index
    %c0_27 = arith.constant 0 : index
    %c0_28 = arith.constant 0 : index
    %17 = vector.load %arg3[%c1_25, %c0_26, %c0_27, %c0_28] : memref<4x1x16x16xf32, #tpu.memory_space<vmem>>, vector<1x1x16x16xf32>
    %18 = vector.shape_cast %17 : vector<1x1x16x16xf32> to vector<16x16xf32>
    %c1_29 = arith.constant 1 : index
    %c0_30 = arith.constant 0 : index
    %c0_31 = arith.constant 0 : index
    %c0_32 = arith.constant 0 : index
    %19 = vector.load %arg4[%c1_29, %c0_30, %c0_31, %c0_32] : memref<4x1x16x16xf32, #tpu.memory_space<vmem>>, vector<1x1x16x16xf32>
    %20 = vector.shape_cast %19 : vector<1x1x16x16xf32> to vector<16x16xf32>
    %21 = arith.maximumf %16, %18 : vector<16x16xf32>
    %c2 = arith.constant 2 : index
    %c0_33 = arith.constant 0 : index
    %c0_34 = arith.constant 0 : index
    %c0_35 = arith.constant 0 : index
    %22 = vector.load %arg2[%c2, %c0_33, %c0_34, %c0_35] : memref<4x3x16x16xf32, #tpu.memory_space<vmem>>, vector<1x1x16x16xf32>
    %23 = vector.shape_cast %22 : vector<1x1x16x16xf32> to vector<16x16xf32>
    %c2_36 = arith.constant 2 : index
    %c0_37 = arith.constant 0 : index
    %c0_38 = arith.constant 0 : index
    %c0_39 = arith.constant 0 : index
    %24 = vector.load %arg3[%c2_36, %c0_37, %c0_38, %c0_39] : memref<4x1x16x16xf32, #tpu.memory_space<vmem>>, vector<1x1x16x16xf32>
    %25 = vector.shape_cast %24 : vector<1x1x16x16xf32> to vector<16x16xf32>
    %c2_40 = arith.constant 2 : index
    %c0_41 = arith.constant 0 : index
    %c0_42 = arith.constant 0 : index
    %c0_43 = arith.constant 0 : index
    %26 = vector.load %arg4[%c2_40, %c0_41, %c0_42, %c0_43] : memref<4x1x16x16xf32, #tpu.memory_space<vmem>>, vector<1x1x16x16xf32>
    %27 = vector.shape_cast %26 : vector<1x1x16x16xf32> to vector<16x16xf32>
    %28 = arith.maximumf %23, %25 : vector<16x16xf32>
    %c3 = arith.constant 3 : index
    %c0_44 = arith.constant 0 : index
    %c0_45 = arith.constant 0 : index
    %c0_46 = arith.constant 0 : index
    %29 = vector.load %arg2[%c3, %c0_44, %c0_45, %c0_46] : memref<4x3x16x16xf32, #tpu.memory_space<vmem>>, vector<1x1x16x16xf32>
    %30 = vector.shape_cast %29 : vector<1x1x16x16xf32> to vector<16x16xf32>
    %c3_47 = arith.constant 3 : index
    %c0_48 = arith.constant 0 : index
    %c0_49 = arith.constant 0 : index
    %c0_50 = arith.constant 0 : index
    %31 = vector.load %arg3[%c3_47, %c0_48, %c0_49, %c0_50] : memref<4x1x16x16xf32, #tpu.memory_space<vmem>>, vector<1x1x16x16xf32>
    %32 = vector.shape_cast %31 : vector<1x1x16x16xf32> to vector<16x16xf32>
    %c3_51 = arith.constant 3 : index
    %c0_52 = arith.constant 0 : index
    %c0_53 = arith.constant 0 : index
    %c0_54 = arith.constant 0 : index
    %33 = vector.load %arg4[%c3_51, %c0_52, %c0_53, %c0_54] : memref<4x1x16x16xf32, #tpu.memory_space<vmem>>, vector<1x1x16x16xf32>
    %34 = vector.shape_cast %33 : vector<1x1x16x16xf32> to vector<16x16xf32>
    %35 = arith.maximumf %30, %32 : vector<16x16xf32>
    %cst = arith.constant 0.000000e+00 : f32
    %36 = vector.broadcast %cst : f32 to vector<1x1xf32>
    %37 = arith.subf %14, %13 : vector<16x16xf32>
    %38 = math.absf %37 : vector<16x16xf32>
    %39 = vector.shape_cast %38 : vector<16x16xf32> to vector<1x16x16xf32>
    %cst_55 = arith.constant dense<0.000000e+00> : vector<1xf32>
    %40 = vector.multi_reduction <add>, %39, %cst_55 [1, 2] : vector<1x16x16xf32> to vector<1xf32>
    %41 = vector.shape_cast %40 : vector<1xf32> to vector<1x1x1xf32>
    %42 = vector.extract %41[0, 0, 0] : f32 from vector<1x1x1xf32>
    %43 = vector.broadcast %42 : f32 to vector<1x1xf32>
    %44 = arith.addf %36, %43 : vector<1x1xf32>
    %45 = arith.subf %21, %20 : vector<16x16xf32>
    %46 = math.absf %45 : vector<16x16xf32>
    %47 = vector.shape_cast %46 : vector<16x16xf32> to vector<1x16x16xf32>
    %cst_56 = arith.constant dense<0.000000e+00> : vector<1xf32>
    %48 = vector.multi_reduction <add>, %47, %cst_56 [1, 2] : vector<1x16x16xf32> to vector<1xf32>
    %49 = vector.shape_cast %48 : vector<1xf32> to vector<1x1x1xf32>
    %50 = vector.extract %49[0, 0, 0] : f32 from vector<1x1x1xf32>
    %51 = vector.broadcast %50 : f32 to vector<1x1xf32>
    %52 = arith.addf %44, %51 : vector<1x1xf32>
    %53 = arith.subf %28, %27 : vector<16x16xf32>
    %54 = math.absf %53 : vector<16x16xf32>
    %55 = vector.shape_cast %54 : vector<16x16xf32> to vector<1x16x16xf32>
    %cst_57 = arith.constant dense<0.000000e+00> : vector<1xf32>
    %56 = vector.multi_reduction <add>, %55, %cst_57 [1, 2] : vector<1x16x16xf32> to vector<1xf32>
    %57 = vector.shape_cast %56 : vector<1xf32> to vector<1x1x1xf32>
    %58 = vector.extract %57[0, 0, 0] : f32 from vector<1x1x1xf32>
    %59 = vector.broadcast %58 : f32 to vector<1x1xf32>
    %60 = arith.addf %52, %59 : vector<1x1xf32>
    %61 = arith.subf %35, %34 : vector<16x16xf32>
    %62 = math.absf %61 : vector<16x16xf32>
    %63 = vector.shape_cast %62 : vector<16x16xf32> to vector<1x16x16xf32>
    %cst_58 = arith.constant dense<0.000000e+00> : vector<1xf32>
    %64 = vector.multi_reduction <add>, %63, %cst_58 [1, 2] : vector<1x16x16xf32> to vector<1xf32>
    %65 = vector.shape_cast %64 : vector<1xf32> to vector<1x1x1xf32>
    %66 = vector.extract %65[0, 0, 0] : f32 from vector<1x1x1xf32>
    %67 = vector.broadcast %66 : f32 to vector<1x1xf32>
    %68 = arith.addf %60, %67 : vector<1x1xf32>
    %c0_59 = arith.constant 0 : index
    %c0_60 = arith.constant 0 : index
    %69 = vector.load %arg12[%c0_59, %c0_60] : memref<1x1xf32, #tpu.memory_space<vmem>>, vector<1x1xf32>
    %70 = arith.addf %69, %68 : vector<1x1xf32>
    %c0_61 = arith.constant 0 : index
    %c0_62 = arith.constant 0 : index
    %71 = vector.load %arg12[%c0_61, %c0_62] : memref<1x1xf32, #tpu.memory_space<vmem>>, vector<1x1xf32>
    tpu.vector_store %arg12[%c0_61, %c0_62], %70 {strides = array<i32>} : memref<1x1xf32, #tpu.memory_space<vmem>>, vector<1x1xf32>,
    %cst_63 = arith.constant 0.000000e+00 : f32
    %72 = vector.broadcast %cst_63 : f32 to vector<1x1xf32>
    %73 = math.sqrt %9 : vector<16x16xf32>
    %cst_64 = arith.constant 0.000000e+00 : f32
    %cst_65 = arith.constant 1.000000e+00 : f32
    %74 = vector.broadcast %cst_64 : f32 to vector<16x16xf32>
    %75 = arith.maximumf %74, %73 : vector<16x16xf32>
    %76 = vector.broadcast %cst_65 : f32 to vector<16x16xf32>
    %77 = arith.minimumf %76, %75 : vector<16x16xf32>
    %c0_66 = arith.constant 0 : index
    %c1_67 = arith.constant 1 : index
    %c0_68 = arith.constant 0 : index
    %c0_69 = arith.constant 0 : index
    %78 = vector.load %arg2[%c0_66, %c1_67, %c0_68, %c0_69] : memref<4x3x16x16xf32, #tpu.memory_space<vmem>>, vector<1x1x16x16xf32>
    %79 = vector.shape_cast %78 : vector<1x1x16x16xf32> to vector<16x16xf32>
    %80 = math.sqrt %79 : vector<16x16xf32>
    %cst_70 = arith.constant 0.000000e+00 : f32
    %cst_71 = arith.constant 1.000000e+00 : f32
    %81 = vector.broadcast %cst_70 : f32 to vector<16x16xf32>
    %82 = arith.maximumf %81, %80 : vector<16x16xf32>
    %83 = vector.broadcast %cst_71 : f32 to vector<16x16xf32>
    %84 = arith.minimumf %83, %82 : vector<16x16xf32>
    %c0_72 = arith.constant 0 : index
    %c2_73 = arith.constant 2 : index
    %c0_74 = arith.constant 0 : index
    %c0_75 = arith.constant 0 : index
    %85 = vector.load %arg2[%c0_72, %c2_73, %c0_74, %c0_75] : memref<4x3x16x16xf32, #tpu.memory_space<vmem>>, vector<1x1x16x16xf32>
    %86 = vector.shape_cast %85 : vector<1x1x16x16xf32> to vector<16x16xf32>
    %87 = math.sqrt %86 : vector<16x16xf32>
    %cst_76 = arith.constant 0.000000e+00 : f32
    %cst_77 = arith.constant 1.000000e+00 : f32
    %88 = vector.broadcast %cst_76 : f32 to vector<16x16xf32>
    %89 = arith.maximumf %88, %87 : vector<16x16xf32>
    %90 = vector.broadcast %cst_77 : f32 to vector<16x16xf32>
    %91 = arith.minimumf %90, %89 : vector<16x16xf32>
    %cst_78 = arith.constant 2.990000e-01 : f32
    %92 = vector.broadcast %cst_78 : f32 to vector<16x16xf32>
    %93 = arith.mulf %92, %77 : vector<16x16xf32>
    %cst_79 = arith.constant 5.870000e-01 : f32
    %94 = vector.broadcast %cst_79 : f32 to vector<16x16xf32>
    %95 = arith.mulf %94, %84 : vector<16x16xf32>
    %96 = arith.addf %93, %95 : vector<16x16xf32>
    %cst_80 = arith.constant 1.140000e-01 : f32
    %97 = vector.broadcast %cst_80 : f32 to vector<16x16xf32>
    %98 = arith.mulf %97, %91 : vector<16x16xf32>
    %99 = arith.addf %96, %98 : vector<16x16xf32>
    %100 = arith.subf %77, %99 : vector<16x16xf32>
    %cst_81 = arith.constant 0.712999999 : f32
    %101 = vector.broadcast %cst_81 : f32 to vector<16x16xf32>
    %102 = arith.mulf %100, %101 : vector<16x16xf32>
    %cst_82 = arith.constant 5.000000e-01 : f32
    %103 = vector.broadcast %cst_82 : f32 to vector<16x16xf32>
    %104 = arith.addf %102, %103 : vector<16x16xf32>
    %105 = arith.subf %91, %99 : vector<16x16xf32>
    %cst_83 = arith.constant 5.640000e-01 : f32
    %106 = vector.broadcast %cst_83 : f32 to vector<16x16xf32>
    %107 = arith.mulf %105, %106 : vector<16x16xf32>
    %cst_84 = arith.constant 5.000000e-01 : f32
    %108 = vector.broadcast %cst_84 : f32 to vector<16x16xf32>
    %109 = arith.addf %107, %108 : vector<16x16xf32>
    %c0_85 = arith.constant 0 : index
    %c0_86 = arith.constant 0 : index
    %c0_87 = arith.constant 0 : index
    %c0_88 = arith.constant 0 : index
    %110 = vector.load %arg5[%c0_85, %c0_86, %c0_87, %c0_88] : memref<4x2x16x16xf32, #tpu.memory_space<vmem>>, vector<1x1x16x16xf32>
    %111 = vector.shape_cast %110 : vector<1x1x16x16xf32> to vector<16x16xf32>
    %c0_89 = arith.constant 0 : index
    %c1_90 = arith.constant 1 : index
    %c0_91 = arith.constant 0 : index
    %c0_92 = arith.constant 0 : index
    %112 = vector.load %arg5[%c0_89, %c1_90, %c0_91, %c0_92] : memref<4x2x16x16xf32, #tpu.memory_space<vmem>>, vector<1x1x16x16xf32>
    %113 = vector.shape_cast %112 : vector<1x1x16x16xf32> to vector<16x16xf32>
    %114 = arith.subf %113, %109 : vector<16x16xf32>
    %115 = math.absf %114 : vector<16x16xf32>
    %116 = arith.subf %111, %104 : vector<16x16xf32>
    %117 = math.absf %116 : vector<16x16xf32>
    %118 = arith.addf %115, %117 : vector<16x16xf32>
    %119 = vector.shape_cast %118 : vector<16x16xf32> to vector<1x16x16xf32>
    %cst_93 = arith.constant dense<0.000000e+00> : vector<1xf32>
    %120 = vector.multi_reduction <add>, %119, %cst_93 [1, 2] : vector<1x16x16xf32> to vector<1xf32>
    %121 = vector.shape_cast %120 : vector<1xf32> to vector<1x1x1xf32>
    %122 = vector.extract %121[0, 0, 0] : f32 from vector<1x1x1xf32>
    %123 = vector.broadcast %122 : f32 to vector<1x1xf32>
    %124 = arith.addf %72, %123 : vector<1x1xf32>
    %125 = math.sqrt %16 : vector<16x16xf32>
    %cst_94 = arith.constant 0.000000e+00 : f32
    %cst_95 = arith.constant 1.000000e+00 : f32
    %126 = vector.broadcast %cst_94 : f32 to vector<16x16xf32>
    %127 = arith.maximumf %126, %125 : vector<16x16xf32>
    %128 = vector.broadcast %cst_95 : f32 to vector<16x16xf32>
    %129 = arith.minimumf %128, %127 : vector<16x16xf32>
    %c1_96 = arith.constant 1 : index
    %c1_97 = arith.constant 1 : index
    %c0_98 = arith.constant 0 : index
    %c0_99 = arith.constant 0 : index
    %130 = vector.load %arg2[%c1_96, %c1_97, %c0_98, %c0_99] : memref<4x3x16x16xf32, #tpu.memory_space<vmem>>, vector<1x1x16x16xf32>
    %131 = vector.shape_cast %130 : vector<1x1x16x16xf32> to vector<16x16xf32>
    %132 = math.sqrt %131 : vector<16x16xf32>
    %cst_100 = arith.constant 0.000000e+00 : f32
    %cst_101 = arith.constant 1.000000e+00 : f32
    %133 = vector.broadcast %cst_100 : f32 to vector<16x16xf32>
    %134 = arith.maximumf %133, %132 : vector<16x16xf32>
    %135 = vector.broadcast %cst_101 : f32 to vector<16x16xf32>
    %136 = arith.minimumf %135, %134 : vector<16x16xf32>
    %c1_102 = arith.constant 1 : index
    %c2_103 = arith.constant 2 : index
    %c0_104 = arith.constant 0 : index
    %c0_105 = arith.constant 0 : index
    %137 = vector.load %arg2[%c1_102, %c2_103, %c0_104, %c0_105] : memref<4x3x16x16xf32, #tpu.memory_space<vmem>>, vector<1x1x16x16xf32>
    %138 = vector.shape_cast %137 : vector<1x1x16x16xf32> to vector<16x16xf32>
    %139 = math.sqrt %138 : vector<16x16xf32>
    %cst_106 = arith.constant 0.000000e+00 : f32
    %cst_107 = arith.constant 1.000000e+00 : f32
    %140 = vector.broadcast %cst_106 : f32 to vector<16x16xf32>
    %141 = arith.maximumf %140, %139 : vector<16x16xf32>
    %142 = vector.broadcast %cst_107 : f32 to vector<16x16xf32>
    %143 = arith.minimumf %142, %141 : vector<16x16xf32>
    %cst_108 = arith.constant 2.990000e-01 : f32
    %144 = vector.broadcast %cst_108 : f32 to vector<16x16xf32>
    %145 = arith.mulf %144, %129 : vector<16x16xf32>
    %cst_109 = arith.constant 5.870000e-01 : f32
    %146 = vector.broadcast %cst_109 : f32 to vector<16x16xf32>
    %147 = arith.mulf %146, %136 : vector<16x16xf32>
    %148 = arith.addf %145, %147 : vector<16x16xf32>
    %cst_110 = arith.constant 1.140000e-01 : f32
    %149 = vector.broadcast %cst_110 : f32 to vector<16x16xf32>
    %150 = arith.mulf %149, %143 : vector<16x16xf32>
    %151 = arith.addf %148, %150 : vector<16x16xf32>
    %152 = arith.subf %129, %151 : vector<16x16xf32>
    %cst_111 = arith.constant 0.712999999 : f32
    %153 = vector.broadcast %cst_111 : f32 to vector<16x16xf32>
    %154 = arith.mulf %152, %153 : vector<16x16xf32>
    %cst_112 = arith.constant 5.000000e-01 : f32
    %155 = vector.broadcast %cst_112 : f32 to vector<16x16xf32>
    %156 = arith.addf %154, %155 : vector<16x16xf32>
    %157 = arith.subf %143, %151 : vector<16x16xf32>
    %cst_113 = arith.constant 5.640000e-01 : f32
    %158 = vector.broadcast %cst_113 : f32 to vector<16x16xf32>
    %159 = arith.mulf %157, %158 : vector<16x16xf32>
    %cst_114 = arith.constant 5.000000e-01 : f32
    %160 = vector.broadcast %cst_114 : f32 to vector<16x16xf32>
    %161 = arith.addf %159, %160 : vector<16x16xf32>
    %c1_115 = arith.constant 1 : index
    %c0_116 = arith.constant 0 : index
    %c0_117 = arith.constant 0 : index
    %c0_118 = arith.constant 0 : index
    %162 = vector.load %arg5[%c1_115, %c0_116, %c0_117, %c0_118] : memref<4x2x16x16xf32, #tpu.memory_space<vmem>>, vector<1x1x16x16xf32>
    %163 = vector.shape_cast %162 : vector<1x1x16x16xf32> to vector<16x16xf32>
    %c1_119 = arith.constant 1 : index
    %c1_120 = arith.constant 1 : index
    %c0_121 = arith.constant 0 : index
    %c0_122 = arith.constant 0 : index
    %164 = vector.load %arg5[%c1_119, %c1_120, %c0_121, %c0_122] : memref<4x2x16x16xf32, #tpu.memory_space<vmem>>, vector<1x1x16x16xf32>
    %165 = vector.shape_cast %164 : vector<1x1x16x16xf32> to vector<16x16xf32>
    %166 = arith.subf %165, %161 : vector<16x16xf32>
    %167 = math.absf %166 : vector<16x16xf32>
    %168 = arith.subf %163, %156 : vector<16x16xf32>
    %169 = math.absf %168 : vector<16x16xf32>
    %170 = arith.addf %167, %169 : vector<16x16xf32>
    %171 = vector.shape_cast %170 : vector<16x16xf32> to vector<1x16x16xf32>
    %cst_123 = arith.constant dense<0.000000e+00> : vector<1xf32>
    %172 = vector.multi_reduction <add>, %171, %cst_123 [1, 2] : vector<1x16x16xf32> to vector<1xf32>
    %173 = vector.shape_cast %172 : vector<1xf32> to vector<1x1x1xf32>
    %174 = vector.extract %173[0, 0, 0] : f32 from vector<1x1x1xf32>
    %175 = vector.broadcast %174 : f32 to vector<1x1xf32>
    %176 = arith.addf %124, %175 : vector<1x1xf32>
    %177 = math.sqrt %23 : vector<16x16xf32>
    %cst_124 = arith.constant 0.000000e+00 : f32
    %cst_125 = arith.constant 1.000000e+00 : f32
    %178 = vector.broadcast %cst_124 : f32 to vector<16x16xf32>
    %179 = arith.maximumf %178, %177 : vector<16x16xf32>
    %180 = vector.broadcast %cst_125 : f32 to vector<16x16xf32>
    %181 = arith.minimumf %180, %179 : vector<16x16xf32>
    %c2_126 = arith.constant 2 : index
    %c1_127 = arith.constant 1 : index
    %c0_128 = arith.constant 0 : index
    %c0_129 = arith.constant 0 : index
    %182 = vector.load %arg2[%c2_126, %c1_127, %c0_128, %c0_129] : memref<4x3x16x16xf32, #tpu.memory_space<vmem>>, vector<1x1x16x16xf32>
    %183 = vector.shape_cast %182 : vector<1x1x16x16xf32> to vector<16x16xf32>
    %184 = math.sqrt %183 : vector<16x16xf32>
    %cst_130 = arith.constant 0.000000e+00 : f32
    %cst_131 = arith.constant 1.000000e+00 : f32
    %185 = vector.broadcast %cst_130 : f32 to vector<16x16xf32>
    %186 = arith.maximumf %185, %184 : vector<16x16xf32>
    %187 = vector.broadcast %cst_131 : f32 to vector<16x16xf32>
    %188 = arith.minimumf %187, %186 : vector<16x16xf32>
    %c2_132 = arith.constant 2 : index
    %c2_133 = arith.constant 2 : index
    %c0_134 = arith.constant 0 : index
    %c0_135 = arith.constant 0 : index
    %189 = vector.load %arg2[%c2_132, %c2_133, %c0_134, %c0_135] : memref<4x3x16x16xf32, #tpu.memory_space<vmem>>, vector<1x1x16x16xf32>
    %190 = vector.shape_cast %189 : vector<1x1x16x16xf32> to vector<16x16xf32>
    %191 = math.sqrt %190 : vector<16x16xf32>
    %cst_136 = arith.constant 0.000000e+00 : f32
    %cst_137 = arith.constant 1.000000e+00 : f32
    %192 = vector.broadcast %cst_136 : f32 to vector<16x16xf32>
    %193 = arith.maximumf %192, %191 : vector<16x16xf32>
    %194 = vector.broadcast %cst_137 : f32 to vector<16x16xf32>
    %195 = arith.minimumf %194, %193 : vector<16x16xf32>
    %cst_138 = arith.constant 2.990000e-01 : f32
    %196 = vector.broadcast %cst_138 : f32 to vector<16x16xf32>
    %197 = arith.mulf %196, %181 : vector<16x16xf32>
    %cst_139 = arith.constant 5.870000e-01 : f32
    %198 = vector.broadcast %cst_139 : f32 to vector<16x16xf32>
    %199 = arith.mulf %198, %188 : vector<16x16xf32>
    %200 = arith.addf %197, %199 : vector<16x16xf32>
    %cst_140 = arith.constant 1.140000e-01 : f32
    %201 = vector.broadcast %cst_140 : f32 to vector<16x16xf32>
    %202 = arith.mulf %201, %195 : vector<16x16xf32>
    %203 = arith.addf %200, %202 : vector<16x16xf32>
    %204 = arith.subf %181, %203 : vector<16x16xf32>
    %cst_141 = arith.constant 0.712999999 : f32
    %205 = vector.broadcast %cst_141 : f32 to vector<16x16xf32>
    %206 = arith.mulf %204, %205 : vector<16x16xf32>
    %cst_142 = arith.constant 5.000000e-01 : f32
    %207 = vector.broadcast %cst_142 : f32 to vector<16x16xf32>
    %208 = arith.addf %206, %207 : vector<16x16xf32>
    %209 = arith.subf %195, %203 : vector<16x16xf32>
    %cst_143 = arith.constant 5.640000e-01 : f32
    %210 = vector.broadcast %cst_143 : f32 to vector<16x16xf32>
    %211 = arith.mulf %209, %210 : vector<16x16xf32>
    %cst_144 = arith.constant 5.000000e-01 : f32
    %212 = vector.broadcast %cst_144 : f32 to vector<16x16xf32>
    %213 = arith.addf %211, %212 : vector<16x16xf32>
    %c2_145 = arith.constant 2 : index
    %c0_146 = arith.constant 0 : index
    %c0_147 = arith.constant 0 : index
    %c0_148 = arith.constant 0 : index
    %214 = vector.load %arg5[%c2_145, %c0_146, %c0_147, %c0_148] : memref<4x2x16x16xf32, #tpu.memory_space<vmem>>, vector<1x1x16x16xf32>
    %215 = vector.shape_cast %214 : vector<1x1x16x16xf32> to vector<16x16xf32>
    %c2_149 = arith.constant 2 : index
    %c1_150 = arith.constant 1 : index
    %c0_151 = arith.constant 0 : index
    %c0_152 = arith.constant 0 : index
    %216 = vector.load %arg5[%c2_149, %c1_150, %c0_151, %c0_152] : memref<4x2x16x16xf32, #tpu.memory_space<vmem>>, vector<1x1x16x16xf32>
    %217 = vector.shape_cast %216 : vector<1x1x16x16xf32> to vector<16x16xf32>
    %218 = arith.subf %217, %213 : vector<16x16xf32>
    %219 = math.absf %218 : vector<16x16xf32>
    %220 = arith.subf %215, %208 : vector<16x16xf32>
    %221 = math.absf %220 : vector<16x16xf32>
    %222 = arith.addf %219, %221 : vector<16x16xf32>
    %223 = vector.shape_cast %222 : vector<16x16xf32> to vector<1x16x16xf32>
    %cst_153 = arith.constant dense<0.000000e+00> : vector<1xf32>
    %224 = vector.multi_reduction <add>, %223, %cst_153 [1, 2] : vector<1x16x16xf32> to vector<1xf32>
    %225 = vector.shape_cast %224 : vector<1xf32> to vector<1x1x1xf32>
    %226 = vector.extract %225[0, 0, 0] : f32 from vector<1x1x1xf32>
    %227 = vector.broadcast %226 : f32 to vector<1x1xf32>
    %228 = arith.addf %176, %227 : vector<1x1xf32>
    %229 = math.sqrt %30 : vector<16x16xf32>
    %cst_154 = arith.constant 0.000000e+00 : f32
    %cst_155 = arith.constant 1.000000e+00 : f32
    %230 = vector.broadcast %cst_154 : f32 to vector<16x16xf32>
    %231 = arith.maximumf %230, %229 : vector<16x16xf32>
    %232 = vector.broadcast %cst_155 : f32 to vector<16x16xf32>
    %233 = arith.minimumf %232, %231 : vector<16x16xf32>
    %c3_156 = arith.constant 3 : index
    %c1_157 = arith.constant 1 : index
    %c0_158 = arith.constant 0 : index
    %c0_159 = arith.constant 0 : index
    %234 = vector.load %arg2[%c3_156, %c1_157, %c0_158, %c0_159] : memref<4x3x16x16xf32, #tpu.memory_space<vmem>>, vector<1x1x16x16xf32>
    %235 = vector.shape_cast %234 : vector<1x1x16x16xf32> to vector<16x16xf32>
    %236 = math.sqrt %235 : vector<16x16xf32>
    %cst_160 = arith.constant 0.000000e+00 : f32
    %cst_161 = arith.constant 1.000000e+00 : f32
    %237 = vector.broadcast %cst_160 : f32 to vector<16x16xf32>
    %238 = arith.maximumf %237, %236 : vector<16x16xf32>
    %239 = vector.broadcast %cst_161 : f32 to vector<16x16xf32>
    %240 = arith.minimumf %239, %238 : vector<16x16xf32>
    %c3_162 = arith.constant 3 : index
    %c2_163 = arith.constant 2 : index
    %c0_164 = arith.constant 0 : index
    %c0_165 = arith.constant 0 : index
    %241 = vector.load %arg2[%c3_162, %c2_163, %c0_164, %c0_165] : memref<4x3x16x16xf32, #tpu.memory_space<vmem>>, vector<1x1x16x16xf32>
    %242 = vector.shape_cast %241 : vector<1x1x16x16xf32> to vector<16x16xf32>
    %243 = math.sqrt %242 : vector<16x16xf32>
    %cst_166 = arith.constant 0.000000e+00 : f32
    %cst_167 = arith.constant 1.000000e+00 : f32
    %244 = vector.broadcast %cst_166 : f32 to vector<16x16xf32>
    %245 = arith.maximumf %244, %243 : vector<16x16xf32>
    %246 = vector.broadcast %cst_167 : f32 to vector<16x16xf32>
    %247 = arith.minimumf %246, %245 : vector<16x16xf32>
    %cst_168 = arith.constant 2.990000e-01 : f32
    %248 = vector.broadcast %cst_168 : f32 to vector<16x16xf32>
    %249 = arith.mulf %248, %233 : vector<16x16xf32>
    %cst_169 = arith.constant 5.870000e-01 : f32
    %250 = vector.broadcast %cst_169 : f32 to vector<16x16xf32>
    %251 = arith.mulf %250, %240 : vector<16x16xf32>
    %252 = arith.addf %249, %251 : vector<16x16xf32>
    %cst_170 = arith.constant 1.140000e-01 : f32
    %253 = vector.broadcast %cst_170 : f32 to vector<16x16xf32>
    %254 = arith.mulf %253, %247 : vector<16x16xf32>
    %255 = arith.addf %252, %254 : vector<16x16xf32>
    %256 = arith.subf %233, %255 : vector<16x16xf32>
    %cst_171 = arith.constant 0.712999999 : f32
    %257 = vector.broadcast %cst_171 : f32 to vector<16x16xf32>
    %258 = arith.mulf %256, %257 : vector<16x16xf32>
    %cst_172 = arith.constant 5.000000e-01 : f32
    %259 = vector.broadcast %cst_172 : f32 to vector<16x16xf32>
    %260 = arith.addf %258, %259 : vector<16x16xf32>
    %261 = arith.subf %247, %255 : vector<16x16xf32>
    %cst_173 = arith.constant 5.640000e-01 : f32
    %262 = vector.broadcast %cst_173 : f32 to vector<16x16xf32>
    %263 = arith.mulf %261, %262 : vector<16x16xf32>
    %cst_174 = arith.constant 5.000000e-01 : f32
    %264 = vector.broadcast %cst_174 : f32 to vector<16x16xf32>
    %265 = arith.addf %263, %264 : vector<16x16xf32>
    %c3_175 = arith.constant 3 : index
    %c0_176 = arith.constant 0 : index
    %c0_177 = arith.constant 0 : index
    %c0_178 = arith.constant 0 : index
    %266 = vector.load %arg5[%c3_175, %c0_176, %c0_177, %c0_178] : memref<4x2x16x16xf32, #tpu.memory_space<vmem>>, vector<1x1x16x16xf32>
    %267 = vector.shape_cast %266 : vector<1x1x16x16xf32> to vector<16x16xf32>
    %c3_179 = arith.constant 3 : index
    %c1_180 = arith.constant 1 : index
    %c0_181 = arith.constant 0 : index
    %c0_182 = arith.constant 0 : index
    %268 = vector.load %arg5[%c3_179, %c1_180, %c0_181, %c0_182] : memref<4x2x16x16xf32, #tpu.memory_space<vmem>>, vector<1x1x16x16xf32>
    %269 = vector.shape_cast %268 : vector<1x1x16x16xf32> to vector<16x16xf32>
    %270 = arith.subf %269, %265 : vector<16x16xf32>
    %271 = math.absf %270 : vector<16x16xf32>
    %272 = arith.subf %267, %260 : vector<16x16xf32>
    %273 = math.absf %272 : vector<16x16xf32>
    %274 = arith.addf %271, %273 : vector<16x16xf32>
    %275 = vector.shape_cast %274 : vector<16x16xf32> to vector<1x16x16xf32>
    %cst_183 = arith.constant dense<0.000000e+00> : vector<1xf32>
    %276 = vector.multi_reduction <add>, %275, %cst_183 [1, 2] : vector<1x16x16xf32> to vector<1xf32>
    %277 = vector.shape_cast %276 : vector<1xf32> to vector<1x1x1xf32>
    %278 = vector.extract %277[0, 0, 0] : f32 from vector<1x1x1xf32>
    %279 = vector.broadcast %278 : f32 to vector<1x1xf32>
    %280 = arith.addf %228, %279 : vector<1x1xf32>
    %c0_184 = arith.constant 0 : index
    %c0_185 = arith.constant 0 : index
    %281 = vector.load %arg14[%c0_184, %c0_185] : memref<1x1xf32, #tpu.memory_space<vmem>>, vector<1x1xf32>
    %282 = arith.addf %281, %280 : vector<1x1xf32>
    %c0_186 = arith.constant 0 : index
    %c0_187 = arith.constant 0 : index
    %283 = vector.load %arg14[%c0_186, %c0_187] : memref<1x1xf32, #tpu.memory_space<vmem>>, vector<1x1xf32>
    tpu.vector_store %arg14[%c0_186, %c0_187], %282 {strides = array<i32>} : memref<1x1xf32, #tpu.memory_space<vmem>>, vector<1x1xf32>,
    %284 = arith.truncf %9 : vector<16x16xf32> to vector<16x16xbf16>
    %cst_188 = arith.constant dense<0.000000e+00> : vector<32x16xf32>
    %285 = tpu.matmul %3, %284, %cst_188 {dimension_numbers = #tpu.dot_dimension_numbers<[1], [0], [0], [1], [0, 0, 1, 1], [], []>} : vector<32x16xbf16>, vector<16x16xbf16>, vector<32x16xf32> -> vector<32x16xf32>
    %286 = vector.extract_strided_slice %285 {offsets = [0, 0], sizes = [16, 16], strides = [1, 1]} : vector<32x16xf32> to vector<16x16xf32>
    %287 = vector.extract_strided_slice %285 {offsets = [16, 0], sizes = [16, 16], strides = [1, 1]} : vector<32x16xf32> to vector<16x16xf32>
    %288 = arith.truncf %11 : vector<16x16xf32> to vector<16x16xbf16>
    %cst_189 = arith.constant dense<0.000000e+00> : vector<32x16xf32>
    %289 = tpu.matmul %3, %288, %cst_189 {dimension_numbers = #tpu.dot_dimension_numbers<[1], [0], [0], [1], [0, 0, 1, 1], [], []>} : vector<32x16xbf16>, vector<16x16xbf16>, vector<32x16xf32> -> vector<32x16xf32>
    %290 = vector.extract_strided_slice %289 {offsets = [0, 0], sizes = [16, 16], strides = [1, 1]} : vector<32x16xf32> to vector<16x16xf32>
    %291 = vector.extract_strided_slice %289 {offsets = [16, 0], sizes = [16, 16], strides = [1, 1]} : vector<32x16xf32> to vector<16x16xf32>
    %292 = arith.truncf %13 : vector<16x16xf32> to vector<16x16xbf16>
    %cst_190 = arith.constant dense<0.000000e+00> : vector<32x16xf32>
    %293 = tpu.matmul %3, %292, %cst_190 {dimension_numbers = #tpu.dot_dimension_numbers<[1], [0], [0], [1], [0, 0, 1, 1], [], []>} : vector<32x16xbf16>, vector<16x16xbf16>, vector<32x16xf32> -> vector<32x16xf32>
    %294 = vector.extract_strided_slice %293 {offsets = [0, 0], sizes = [16, 16], strides = [1, 1]} : vector<32x16xf32> to vector<16x16xf32>
    %295 = vector.extract_strided_slice %293 {offsets = [16, 0], sizes = [16, 16], strides = [1, 1]} : vector<32x16xf32> to vector<16x16xf32>
    %296 = arith.truncf %16 : vector<16x16xf32> to vector<16x16xbf16>
    %cst_191 = arith.constant dense<0.000000e+00> : vector<32x16xf32>
    %297 = tpu.matmul %3, %296, %cst_191 {dimension_numbers = #tpu.dot_dimension_numbers<[1], [0], [0], [1], [0, 0, 1, 1], [], []>} : vector<32x16xbf16>, vector<16x16xbf16>, vector<32x16xf32> -> vector<32x16xf32>
    %298 = vector.extract_strided_slice %297 {offsets = [0, 0], sizes = [16, 16], strides = [1, 1]} : vector<32x16xf32> to vector<16x16xf32>
    %299 = vector.extract_strided_slice %297 {offsets = [16, 0], sizes = [16, 16], strides = [1, 1]} : vector<32x16xf32> to vector<16x16xf32>
    %300 = arith.truncf %18 : vector<16x16xf32> to vector<16x16xbf16>
    %cst_192 = arith.constant dense<0.000000e+00> : vector<32x16xf32>
    %301 = tpu.matmul %3, %300, %cst_192 {dimension_numbers = #tpu.dot_dimension_numbers<[1], [0], [0], [1], [0, 0, 1, 1], [], []>} : vector<32x16xbf16>, vector<16x16xbf16>, vector<32x16xf32> -> vector<32x16xf32>
    %302 = vector.extract_strided_slice %301 {offsets = [0, 0], sizes = [16, 16], strides = [1, 1]} : vector<32x16xf32> to vector<16x16xf32>
    %303 = vector.extract_strided_slice %301 {offsets = [16, 0], sizes = [16, 16], strides = [1, 1]} : vector<32x16xf32> to vector<16x16xf32>
    %304 = arith.truncf %20 : vector<16x16xf32> to vector<16x16xbf16>
    %cst_193 = arith.constant dense<0.000000e+00> : vector<32x16xf32>
    %305 = tpu.matmul %3, %304, %cst_193 {dimension_numbers = #tpu.dot_dimension_numbers<[1], [0], [0], [1], [0, 0, 1, 1], [], []>} : vector<32x16xbf16>, vector<16x16xbf16>, vector<32x16xf32> -> vector<32x16xf32>
    %306 = vector.extract_strided_slice %305 {offsets = [0, 0], sizes = [16, 16], strides = [1, 1]} : vector<32x16xf32> to vector<16x16xf32>
    %307 = vector.extract_strided_slice %305 {offsets = [16, 0], sizes = [16, 16], strides = [1, 1]} : vector<32x16xf32> to vector<16x16xf32>
    %308 = arith.truncf %23 : vector<16x16xf32> to vector<16x16xbf16>
    %cst_194 = arith.constant dense<0.000000e+00> : vector<32x16xf32>
    %309 = tpu.matmul %3, %308, %cst_194 {dimension_numbers = #tpu.dot_dimension_numbers<[1], [0], [0], [1], [0, 0, 1, 1], [], []>} : vector<32x16xbf16>, vector<16x16xbf16>, vector<32x16xf32> -> vector<32x16xf32>
    %310 = vector.extract_strided_slice %309 {offsets = [0, 0], sizes = [16, 16], strides = [1, 1]} : vector<32x16xf32> to vector<16x16xf32>
    %311 = vector.extract_strided_slice %309 {offsets = [16, 0], sizes = [16, 16], strides = [1, 1]} : vector<32x16xf32> to vector<16x16xf32>
    %312 = arith.truncf %25 : vector<16x16xf32> to vector<16x16xbf16>
    %cst_195 = arith.constant dense<0.000000e+00> : vector<32x16xf32>
    %313 = tpu.matmul %3, %312, %cst_195 {dimension_numbers = #tpu.dot_dimension_numbers<[1], [0], [0], [1], [0, 0, 1, 1], [], []>} : vector<32x16xbf16>, vector<16x16xbf16>, vector<32x16xf32> -> vector<32x16xf32>
    %314 = vector.extract_strided_slice %313 {offsets = [0, 0], sizes = [16, 16], strides = [1, 1]} : vector<32x16xf32> to vector<16x16xf32>
    %315 = vector.extract_strided_slice %313 {offsets = [16, 0], sizes = [16, 16], strides = [1, 1]} : vector<32x16xf32> to vector<16x16xf32>
    %316 = arith.truncf %27 : vector<16x16xf32> to vector<16x16xbf16>
    %cst_196 = arith.constant dense<0.000000e+00> : vector<32x16xf32>
    %317 = tpu.matmul %3, %316, %cst_196 {dimension_numbers = #tpu.dot_dimension_numbers<[1], [0], [0], [1], [0, 0, 1, 1], [], []>} : vector<32x16xbf16>, vector<16x16xbf16>, vector<32x16xf32> -> vector<32x16xf32>
    %318 = vector.extract_strided_slice %317 {offsets = [0, 0], sizes = [16, 16], strides = [1, 1]} : vector<32x16xf32> to vector<16x16xf32>
    %319 = vector.extract_strided_slice %317 {offsets = [16, 0], sizes = [16, 16], strides = [1, 1]} : vector<32x16xf32> to vector<16x16xf32>
    %320 = arith.truncf %30 : vector<16x16xf32> to vector<16x16xbf16>
    %cst_197 = arith.constant dense<0.000000e+00> : vector<32x16xf32>
    %321 = tpu.matmul %3, %320, %cst_197 {dimension_numbers = #tpu.dot_dimension_numbers<[1], [0], [0], [1], [0, 0, 1, 1], [], []>} : vector<32x16xbf16>, vector<16x16xbf16>, vector<32x16xf32> -> vector<32x16xf32>
    %322 = vector.extract_strided_slice %321 {offsets = [0, 0], sizes = [16, 16], strides = [1, 1]} : vector<32x16xf32> to vector<16x16xf32>
    %323 = vector.extract_strided_slice %321 {offsets = [16, 0], sizes = [16, 16], strides = [1, 1]} : vector<32x16xf32> to vector<16x16xf32>
    %324 = arith.truncf %32 : vector<16x16xf32> to vector<16x16xbf16>
    %cst_198 = arith.constant dense<0.000000e+00> : vector<32x16xf32>
    %325 = tpu.matmul %3, %324, %cst_198 {dimension_numbers = #tpu.dot_dimension_numbers<[1], [0], [0], [1], [0, 0, 1, 1], [], []>} : vector<32x16xbf16>, vector<16x16xbf16>, vector<32x16xf32> -> vector<32x16xf32>
    %326 = vector.extract_strided_slice %325 {offsets = [0, 0], sizes = [16, 16], strides = [1, 1]} : vector<32x16xf32> to vector<16x16xf32>
    %327 = vector.extract_strided_slice %325 {offsets = [16, 0], sizes = [16, 16], strides = [1, 1]} : vector<32x16xf32> to vector<16x16xf32>
    %328 = arith.truncf %34 : vector<16x16xf32> to vector<16x16xbf16>
    %cst_199 = arith.constant dense<0.000000e+00> : vector<32x16xf32>
    %329 = tpu.matmul %3, %328, %cst_199 {dimension_numbers = #tpu.dot_dimension_numbers<[1], [0], [0], [1], [0, 0, 1, 1], [], []>} : vector<32x16xbf16>, vector<16x16xbf16>, vector<32x16xf32> -> vector<32x16xf32>
    %330 = vector.extract_strided_slice %329 {offsets = [0, 0], sizes = [16, 16], strides = [1, 1]} : vector<32x16xf32> to vector<16x16xf32>
    %331 = vector.extract_strided_slice %329 {offsets = [16, 0], sizes = [16, 16], strides = [1, 1]} : vector<32x16xf32> to vector<16x16xf32>
    %332 = tpu.concatenate %286, %290, %294, %298, %302, %306, %310, %314, %318, %322, %326, %330 in 0 : vector<16x16xf32>, vector<16x16xf32>, vector<16x16xf32>, vector<16x16xf32>, vector<16x16xf32>, vector<16x16xf32>, vector<16x16xf32>, vector<16x16xf32>, vector<16x16xf32>, vector<16x16xf32>, vector<16x16xf32>, vector<16x16xf32> -> vector<192x16xf32>
    %333 = arith.truncf %332 : vector<192x16xf32> to vector<192x16xbf16>
    %cst_200 = arith.constant dense<0.000000e+00> : vector<192x16xf32>
    %334 = tpu.matmul %333, %4, %cst_200 {dimension_numbers = #tpu.dot_dimension_numbers<[1], [0], [0], [1], [0, 0, 1, 1], [], []>} : vector<192x16xbf16>, vector<16x16xbf16>, vector<192x16xf32> -> vector<192x16xf32>
    %335 = tpu.concatenate %287, %291, %295, %299, %303, %307, %311, %315, %319, %323, %327, %331 in 0 : vector<16x16xf32>, vector<16x16xf32>, vector<16x16xf32>, vector<16x16xf32>, vector<16x16xf32>, vector<16x16xf32>, vector<16x16xf32>, vector<16x16xf32>, vector<16x16xf32>, vector<16x16xf32>, vector<16x16xf32>, vector<16x16xf32> -> vector<192x16xf32>
    %336 = arith.truncf %335 : vector<192x16xf32> to vector<192x16xbf16>
    %cst_201 = arith.constant dense<0.000000e+00> : vector<192x16xf32>
    %337 = tpu.matmul %336, %5, %cst_201 {dimension_numbers = #tpu.dot_dimension_numbers<[1], [0], [0], [1], [0, 0, 1, 1], [], []>} : vector<192x16xbf16>, vector<16x16xbf16>, vector<192x16xf32> -> vector<192x16xf32>
    %cst_202 = arith.constant 0.000000e+00 : f32
    %338 = vector.broadcast %cst_202 : f32 to vector<1x1xf32>
    %339 = vector.extract_strided_slice %334 {offsets = [0, 0], sizes = [16, 16], strides = [1, 1]} : vector<192x16xf32> to vector<16x16xf32>
    %340 = math.absf %339 : vector<16x16xf32>
    %341 = vector.extract_strided_slice %337 {offsets = [0, 0], sizes = [16, 16], strides = [1, 1]} : vector<192x16xf32> to vector<16x16xf32>
    %342 = math.absf %341 : vector<16x16xf32>
    %343 = arith.addf %340, %342 : vector<16x16xf32>
    %344 = vector.extract_strided_slice %334 {offsets = [16, 0], sizes = [16, 16], strides = [1, 1]} : vector<192x16xf32> to vector<16x16xf32>
    %345 = math.absf %344 : vector<16x16xf32>
    %346 = vector.extract_strided_slice %337 {offsets = [16, 0], sizes = [16, 16], strides = [1, 1]} : vector<192x16xf32> to vector<16x16xf32>
    %347 = math.absf %346 : vector<16x16xf32>
    %348 = arith.addf %345, %347 : vector<16x16xf32>
    %349 = arith.maximumf %343, %348 : vector<16x16xf32>
    %350 = vector.extract_strided_slice %334 {offsets = [32, 0], sizes = [16, 16], strides = [1, 1]} : vector<192x16xf32> to vector<16x16xf32>
    %351 = math.absf %350 : vector<16x16xf32>
    %352 = vector.extract_strided_slice %337 {offsets = [32, 0], sizes = [16, 16], strides = [1, 1]} : vector<192x16xf32> to vector<16x16xf32>
    %353 = math.absf %352 : vector<16x16xf32>
    %354 = arith.addf %351, %353 : vector<16x16xf32>
    %355 = arith.subf %349, %354 : vector<16x16xf32>
    %356 = math.absf %355 : vector<16x16xf32>
    %357 = vector.shape_cast %356 : vector<16x16xf32> to vector<1x16x16xf32>
    %cst_203 = arith.constant dense<0.000000e+00> : vector<1xf32>
    %358 = vector.multi_reduction <add>, %357, %cst_203 [1, 2] : vector<1x16x16xf32> to vector<1xf32>
    %359 = vector.shape_cast %358 : vector<1xf32> to vector<1x1x1xf32>
    %360 = vector.extract %359[0, 0, 0] : f32 from vector<1x1x1xf32>
    %361 = vector.broadcast %360 : f32 to vector<1x1xf32>
    %362 = arith.addf %338, %361 : vector<1x1xf32>
    %363 = vector.extract_strided_slice %334 {offsets = [48, 0], sizes = [16, 16], strides = [1, 1]} : vector<192x16xf32> to vector<16x16xf32>
    %364 = math.absf %363 : vector<16x16xf32>
    %365 = vector.extract_strided_slice %337 {offsets = [48, 0], sizes = [16, 16], strides = [1, 1]} : vector<192x16xf32> to vector<16x16xf32>
    %366 = math.absf %365 : vector<16x16xf32>
    %367 = arith.addf %364, %366 : vector<16x16xf32>
    %368 = vector.extract_strided_slice %334 {offsets = [64, 0], sizes = [16, 16], strides = [1, 1]} : vector<192x16xf32> to vector<16x16xf32>
    %369 = math.absf %368 : vector<16x16xf32>
    %370 = vector.extract_strided_slice %337 {offsets = [64, 0], sizes = [16, 16], strides = [1, 1]} : vector<192x16xf32> to vector<16x16xf32>
    %371 = math.absf %370 : vector<16x16xf32>
    %372 = arith.addf %369, %371 : vector<16x16xf32>
    %373 = arith.maximumf %367, %372 : vector<16x16xf32>
    %374 = vector.extract_strided_slice %334 {offsets = [80, 0], sizes = [16, 16], strides = [1, 1]} : vector<192x16xf32> to vector<16x16xf32>
    %375 = math.absf %374 : vector<16x16xf32>
    %376 = vector.extract_strided_slice %337 {offsets = [80, 0], sizes = [16, 16], strides = [1, 1]} : vector<192x16xf32> to vector<16x16xf32>
    %377 = math.absf %376 : vector<16x16xf32>
    %378 = arith.addf %375, %377 : vector<16x16xf32>
    %379 = arith.subf %373, %378 : vector<16x16xf32>
    %380 = math.absf %379 : vector<16x16xf32>
    %381 = vector.shape_cast %380 : vector<16x16xf32> to vector<1x16x16xf32>
    %cst_204 = arith.constant dense<0.000000e+00> : vector<1xf32>
    %382 = vector.multi_reduction <add>, %381, %cst_204 [1, 2] : vector<1x16x16xf32> to vector<1xf32>
    %383 = vector.shape_cast %382 : vector<1xf32> to vector<1x1x1xf32>
    %384 = vector.extract %383[0, 0, 0] : f32 from vector<1x1x1xf32>
    %385 = vector.broadcast %384 : f32 to vector<1x1xf32>
    %386 = arith.addf %362, %385 : vector<1x1xf32>
    %387 = vector.extract_strided_slice %334 {offsets = [96, 0], sizes = [16, 16], strides = [1, 1]} : vector<192x16xf32> to vector<16x16xf32>
    %388 = math.absf %387 : vector<16x16xf32>
    %389 = vector.extract_strided_slice %337 {offsets = [96, 0], sizes = [16, 16], strides = [1, 1]} : vector<192x16xf32> to vector<16x16xf32>
    %390 = math.absf %389 : vector<16x16xf32>
    %391 = arith.addf %388, %390 : vector<16x16xf32>
    %392 = vector.extract_strided_slice %334 {offsets = [112, 0], sizes = [16, 16], strides = [1, 1]} : vector<192x16xf32> to vector<16x16xf32>
    %393 = math.absf %392 : vector<16x16xf32>
    %394 = vector.extract_strided_slice %337 {offsets = [112, 0], sizes = [16, 16], strides = [1, 1]} : vector<192x16xf32> to vector<16x16xf32>
    %395 = math.absf %394 : vector<16x16xf32>
    %396 = arith.addf %393, %395 : vector<16x16xf32>
    %397 = arith.maximumf %391, %396 : vector<16x16xf32>
    %398 = vector.extract_strided_slice %334 {offsets = [128, 0], sizes = [16, 16], strides = [1, 1]} : vector<192x16xf32> to vector<16x16xf32>
    %399 = math.absf %398 : vector<16x16xf32>
    %400 = vector.extract_strided_slice %337 {offsets = [128, 0], sizes = [16, 16], strides = [1, 1]} : vector<192x16xf32> to vector<16x16xf32>
    %401 = math.absf %400 : vector<16x16xf32>
    %402 = arith.addf %399, %401 : vector<16x16xf32>
    %403 = arith.subf %397, %402 : vector<16x16xf32>
    %404 = math.absf %403 : vector<16x16xf32>
    %405 = vector.shape_cast %404 : vector<16x16xf32> to vector<1x16x16xf32>
    %cst_205 = arith.constant dense<0.000000e+00> : vector<1xf32>
    %406 = vector.multi_reduction <add>, %405, %cst_205 [1, 2] : vector<1x16x16xf32> to vector<1xf32>
    %407 = vector.shape_cast %406 : vector<1xf32> to vector<1x1x1xf32>
    %408 = vector.extract %407[0, 0, 0] : f32 from vector<1x1x1xf32>
    %409 = vector.broadcast %408 : f32 to vector<1x1xf32>
    %410 = arith.addf %386, %409 : vector<1x1xf32>
    %411 = vector.extract_strided_slice %334 {offsets = [144, 0], sizes = [16, 16], strides = [1, 1]} : vector<192x16xf32> to vector<16x16xf32>
    %412 = math.absf %411 : vector<16x16xf32>
    %413 = vector.extract_strided_slice %337 {offsets = [144, 0], sizes = [16, 16], strides = [1, 1]} : vector<192x16xf32> to vector<16x16xf32>
    %414 = math.absf %413 : vector<16x16xf32>
    %415 = arith.addf %412, %414 : vector<16x16xf32>
    %416 = vector.extract_strided_slice %334 {offsets = [160, 0], sizes = [16, 16], strides = [1, 1]} : vector<192x16xf32> to vector<16x16xf32>
    %417 = math.absf %416 : vector<16x16xf32>
    %418 = vector.extract_strided_slice %337 {offsets = [160, 0], sizes = [16, 16], strides = [1, 1]} : vector<192x16xf32> to vector<16x16xf32>
    %419 = math.absf %418 : vector<16x16xf32>
    %420 = arith.addf %417, %419 : vector<16x16xf32>
    %421 = arith.maximumf %415, %420 : vector<16x16xf32>
    %422 = vector.extract_strided_slice %334 {offsets = [176, 0], sizes = [16, 16], strides = [1, 1]} : vector<192x16xf32> to vector<16x16xf32>
    %423 = math.absf %422 : vector<16x16xf32>
    %424 = vector.extract_strided_slice %337 {offsets = [176, 0], sizes = [16, 16], strides = [1, 1]} : vector<192x16xf32> to vector<16x16xf32>
    %425 = math.absf %424 : vector<16x16xf32>
    %426 = arith.addf %423, %425 : vector<16x16xf32>
    %427 = arith.subf %421, %426 : vector<16x16xf32>
    %428 = math.absf %427 : vector<16x16xf32>
    %429 = vector.shape_cast %428 : vector<16x16xf32> to vector<1x16x16xf32>
    %cst_206 = arith.constant dense<0.000000e+00> : vector<1xf32>
    %430 = vector.multi_reduction <add>, %429, %cst_206 [1, 2] : vector<1x16x16xf32> to vector<1xf32>
    %431 = vector.shape_cast %430 : vector<1xf32> to vector<1x1x1xf32>
    %432 = vector.extract %431[0, 0, 0] : f32 from vector<1x1x1xf32>
    %433 = vector.broadcast %432 : f32 to vector<1x1xf32>
    %434 = arith.addf %410, %433 : vector<1x1xf32>
    %c0_207 = arith.constant 0 : index
    %c0_208 = arith.constant 0 : index
    %435 = vector.load %arg13[%c0_207, %c0_208] : memref<1x1xf32, #tpu.memory_space<vmem>>, vector<1x1xf32>
    %436 = arith.addf %435, %434 : vector<1x1xf32>
    %c0_209 = arith.constant 0 : index
    %c0_210 = arith.constant 0 : index
    %437 = vector.load %arg13[%c0_209, %c0_210] : memref<1x1xf32, #tpu.memory_space<vmem>>, vector<1x1xf32>
    tpu.vector_store %arg13[%c0_209, %c0_210], %436 {strides = array<i32>} : memref<1x1xf32, #tpu.memory_space<vmem>>, vector<1x1xf32>,
    %438 = arith.mulf %14, %14 : vector<16x16xf32>
    %439 = arith.mulf %13, %13 : vector<16x16xf32>
    %440 = arith.mulf %14, %13 : vector<16x16xf32>
    %441 = arith.mulf %21, %21 : vector<16x16xf32>
    %442 = arith.mulf %20, %20 : vector<16x16xf32>
    %443 = arith.mulf %21, %20 : vector<16x16xf32>
    %444 = arith.mulf %28, %28 : vector<16x16xf32>
    %445 = arith.mulf %27, %27 : vector<16x16xf32>
    %446 = arith.mulf %28, %27 : vector<16x16xf32>
    %447 = arith.mulf %35, %35 : vector<16x16xf32>
    %448 = arith.mulf %34, %34 : vector<16x16xf32>
    %449 = arith.mulf %35, %34 : vector<16x16xf32>
    %cst_211 = arith.constant dense<0.000000e+00> : vector<16x16xf32>
    %450 = tpu.matmul %6, %14, %cst_211 {dimension_numbers = #tpu.dot_dimension_numbers<[1], [0], [0], [1], [0, 0, 1, 1], [], []>} : vector<16x16xf32>, vector<16x16xf32>, vector<16x16xf32> -> vector<16x16xf32>
    %cst_212 = arith.constant dense<0.000000e+00> : vector<16x16xf32>
    %451 = tpu.matmul %6, %13, %cst_212 {dimension_numbers = #tpu.dot_dimension_numbers<[1], [0], [0], [1], [0, 0, 1, 1], [], []>} : vector<16x16xf32>, vector<16x16xf32>, vector<16x16xf32> -> vector<16x16xf32>
    %cst_213 = arith.constant dense<0.000000e+00> : vector<16x16xf32>
    %452 = tpu.matmul %6, %438, %cst_213 {dimension_numbers = #tpu.dot_dimension_numbers<[1], [0], [0], [1], [0, 0, 1, 1], [], []>} : vector<16x16xf32>, vector<16x16xf32>, vector<16x16xf32> -> vector<16x16xf32>
    %cst_214 = arith.constant dense<0.000000e+00> : vector<16x16xf32>
    %453 = tpu.matmul %6, %439, %cst_214 {dimension_numbers = #tpu.dot_dimension_numbers<[1], [0], [0], [1], [0, 0, 1, 1], [], []>} : vector<16x16xf32>, vector<16x16xf32>, vector<16x16xf32> -> vector<16x16xf32>
    %cst_215 = arith.constant dense<0.000000e+00> : vector<16x16xf32>
    %454 = tpu.matmul %6, %440, %cst_215 {dimension_numbers = #tpu.dot_dimension_numbers<[1], [0], [0], [1], [0, 0, 1, 1], [], []>} : vector<16x16xf32>, vector<16x16xf32>, vector<16x16xf32> -> vector<16x16xf32>
    %cst_216 = arith.constant dense<0.000000e+00> : vector<16x16xf32>
    %455 = tpu.matmul %6, %21, %cst_216 {dimension_numbers = #tpu.dot_dimension_numbers<[1], [0], [0], [1], [0, 0, 1, 1], [], []>} : vector<16x16xf32>, vector<16x16xf32>, vector<16x16xf32> -> vector<16x16xf32>
    %cst_217 = arith.constant dense<0.000000e+00> : vector<16x16xf32>
    %456 = tpu.matmul %6, %20, %cst_217 {dimension_numbers = #tpu.dot_dimension_numbers<[1], [0], [0], [1], [0, 0, 1, 1], [], []>} : vector<16x16xf32>, vector<16x16xf32>, vector<16x16xf32> -> vector<16x16xf32>
    %cst_218 = arith.constant dense<0.000000e+00> : vector<16x16xf32>
    %457 = tpu.matmul %6, %441, %cst_218 {dimension_numbers = #tpu.dot_dimension_numbers<[1], [0], [0], [1], [0, 0, 1, 1], [], []>} : vector<16x16xf32>, vector<16x16xf32>, vector<16x16xf32> -> vector<16x16xf32>
    %cst_219 = arith.constant dense<0.000000e+00> : vector<16x16xf32>
    %458 = tpu.matmul %6, %442, %cst_219 {dimension_numbers = #tpu.dot_dimension_numbers<[1], [0], [0], [1], [0, 0, 1, 1], [], []>} : vector<16x16xf32>, vector<16x16xf32>, vector<16x16xf32> -> vector<16x16xf32>
    %cst_220 = arith.constant dense<0.000000e+00> : vector<16x16xf32>
    %459 = tpu.matmul %6, %443, %cst_220 {dimension_numbers = #tpu.dot_dimension_numbers<[1], [0], [0], [1], [0, 0, 1, 1], [], []>} : vector<16x16xf32>, vector<16x16xf32>, vector<16x16xf32> -> vector<16x16xf32>
    %cst_221 = arith.constant dense<0.000000e+00> : vector<16x16xf32>
    %460 = tpu.matmul %6, %28, %cst_221 {dimension_numbers = #tpu.dot_dimension_numbers<[1], [0], [0], [1], [0, 0, 1, 1], [], []>} : vector<16x16xf32>, vector<16x16xf32>, vector<16x16xf32> -> vector<16x16xf32>
    %cst_222 = arith.constant dense<0.000000e+00> : vector<16x16xf32>
    %461 = tpu.matmul %6, %27, %cst_222 {dimension_numbers = #tpu.dot_dimension_numbers<[1], [0], [0], [1], [0, 0, 1, 1], [], []>} : vector<16x16xf32>, vector<16x16xf32>, vector<16x16xf32> -> vector<16x16xf32>
    %cst_223 = arith.constant dense<0.000000e+00> : vector<16x16xf32>
    %462 = tpu.matmul %6, %444, %cst_223 {dimension_numbers = #tpu.dot_dimension_numbers<[1], [0], [0], [1], [0, 0, 1, 1], [], []>} : vector<16x16xf32>, vector<16x16xf32>, vector<16x16xf32> -> vector<16x16xf32>
    %cst_224 = arith.constant dense<0.000000e+00> : vector<16x16xf32>
    %463 = tpu.matmul %6, %445, %cst_224 {dimension_numbers = #tpu.dot_dimension_numbers<[1], [0], [0], [1], [0, 0, 1, 1], [], []>} : vector<16x16xf32>, vector<16x16xf32>, vector<16x16xf32> -> vector<16x16xf32>
    %cst_225 = arith.constant dense<0.000000e+00> : vector<16x16xf32>
    %464 = tpu.matmul %6, %446, %cst_225 {dimension_numbers = #tpu.dot_dimension_numbers<[1], [0], [0], [1], [0, 0, 1, 1], [], []>} : vector<16x16xf32>, vector<16x16xf32>, vector<16x16xf32> -> vector<16x16xf32>
    %cst_226 = arith.constant dense<0.000000e+00> : vector<16x16xf32>
    %465 = tpu.matmul %6, %35, %cst_226 {dimension_numbers = #tpu.dot_dimension_numbers<[1], [0], [0], [1], [0, 0, 1, 1], [], []>} : vector<16x16xf32>, vector<16x16xf32>, vector<16x16xf32> -> vector<16x16xf32>
    %cst_227 = arith.constant dense<0.000000e+00> : vector<16x16xf32>
    %466 = tpu.matmul %6, %34, %cst_227 {dimension_numbers = #tpu.dot_dimension_numbers<[1], [0], [0], [1], [0, 0, 1, 1], [], []>} : vector<16x16xf32>, vector<16x16xf32>, vector<16x16xf32> -> vector<16x16xf32>
    %cst_228 = arith.constant dense<0.000000e+00> : vector<16x16xf32>
    %467 = tpu.matmul %6, %447, %cst_228 {dimension_numbers = #tpu.dot_dimension_numbers<[1], [0], [0], [1], [0, 0, 1, 1], [], []>} : vector<16x16xf32>, vector<16x16xf32>, vector<16x16xf32> -> vector<16x16xf32>
    %cst_229 = arith.constant dense<0.000000e+00> : vector<16x16xf32>
    %468 = tpu.matmul %6, %448, %cst_229 {dimension_numbers = #tpu.dot_dimension_numbers<[1], [0], [0], [1], [0, 0, 1, 1], [], []>} : vector<16x16xf32>, vector<16x16xf32>, vector<16x16xf32> -> vector<16x16xf32>
    %cst_230 = arith.constant dense<0.000000e+00> : vector<16x16xf32>
    %469 = tpu.matmul %6, %449, %cst_230 {dimension_numbers = #tpu.dot_dimension_numbers<[1], [0], [0], [1], [0, 0, 1, 1], [], []>} : vector<16x16xf32>, vector<16x16xf32>, vector<16x16xf32> -> vector<16x16xf32>
    %470 = tpu.concatenate %450, %451, %452, %453, %454, %455, %456, %457, %458, %459, %460, %461, %462, %463, %464, %465 in 0 : vector<16x16xf32>, vector<16x16xf32>, vector<16x16xf32>, vector<16x16xf32>, vector<16x16xf32>, vector<16x16xf32>, vector<16x16xf32>, vector<16x16xf32>, vector<16x16xf32>, vector<16x16xf32>, vector<16x16xf32>, vector<16x16xf32>, vector<16x16xf32>, vector<16x16xf32>, vector<16x16xf32>, vector<16x16xf32> -> vector<256x16xf32>
    %471 = tpu.concatenate %466, %467, %468, %469 in 0 : vector<16x16xf32>, vector<16x16xf32>, vector<16x16xf32>, vector<16x16xf32> -> vector<64x16xf32>
    %472 = tpu.concatenate %470, %471 in 0 : vector<256x16xf32>, vector<64x16xf32> -> vector<320x16xf32>
    %cst_231 = arith.constant dense<0.000000e+00> : vector<320x16xf32>
    %473 = tpu.matmul %472, %7, %cst_231 {dimension_numbers = #tpu.dot_dimension_numbers<[1], [0], [0], [1], [0, 0, 1, 1], [], []>} : vector<320x16xf32>, vector<16x16xf32>, vector<320x16xf32> -> vector<320x16xf32>
    %cst_232 = arith.constant 0.000000e+00 : f32
    %474 = vector.broadcast %cst_232 : f32 to vector<1x1xf32>
    %475 = vector.extract_strided_slice %473 {offsets = [0, 0], sizes = [16, 16], strides = [1, 1]} : vector<320x16xf32> to vector<16x16xf32>
    %476 = vector.extract_strided_slice %473 {offsets = [16, 0], sizes = [16, 16], strides = [1, 1]} : vector<320x16xf32> to vector<16x16xf32>
    %477 = vector.extract_strided_slice %473 {offsets = [32, 0], sizes = [16, 16], strides = [1, 1]} : vector<320x16xf32> to vector<16x16xf32>
    %478 = vector.extract_strided_slice %473 {offsets = [48, 0], sizes = [16, 16], strides = [1, 1]} : vector<320x16xf32> to vector<16x16xf32>
    %479 = vector.extract_strided_slice %473 {offsets = [64, 0], sizes = [16, 16], strides = [1, 1]} : vector<320x16xf32> to vector<16x16xf32>
    %480 = arith.mulf %475, %475 : vector<16x16xf32>
    %481 = arith.subf %477, %480 : vector<16x16xf32>
    %482 = arith.mulf %476, %476 : vector<16x16xf32>
    %483 = arith.subf %478, %482 : vector<16x16xf32>
    %484 = arith.mulf %475, %476 : vector<16x16xf32>
    %485 = arith.subf %479, %484 : vector<16x16xf32>
    %cst_233 = arith.constant 2.000000e+00 : f32
    %486 = vector.broadcast %cst_233 : f32 to vector<16x16xf32>
    %487 = arith.mulf %486, %475 : vector<16x16xf32>
    %488 = arith.mulf %487, %476 : vector<16x16xf32>
    %cst_234 = arith.constant 9.99999974E-5 : f32
    %489 = vector.broadcast %cst_234 : f32 to vector<16x16xf32>
    %490 = arith.addf %488, %489 : vector<16x16xf32>
    %cst_235 = arith.constant 2.000000e+00 : f32
    %491 = vector.broadcast %cst_235 : f32 to vector<16x16xf32>
    %492 = arith.mulf %491, %485 : vector<16x16xf32>
    %cst_236 = arith.constant 8.99999984E-4 : f32
    %493 = vector.broadcast %cst_236 : f32 to vector<16x16xf32>
    %494 = arith.addf %492, %493 : vector<16x16xf32>
    %495 = arith.mulf %490, %494 : vector<16x16xf32>
    %496 = arith.mulf %475, %475 : vector<16x16xf32>
    %497 = arith.mulf %476, %476 : vector<16x16xf32>
    %498 = arith.addf %496, %497 : vector<16x16xf32>
    %cst_237 = arith.constant 9.99999974E-5 : f32
    %499 = vector.broadcast %cst_237 : f32 to vector<16x16xf32>
    %500 = arith.addf %498, %499 : vector<16x16xf32>
    %501 = arith.addf %481, %483 : vector<16x16xf32>
    %cst_238 = arith.constant 8.99999984E-4 : f32
    %502 = vector.broadcast %cst_238 : f32 to vector<16x16xf32>
    %503 = arith.addf %501, %502 : vector<16x16xf32>
    %504 = arith.mulf %500, %503 : vector<16x16xf32>
    %505 = arith.divf %495, %504 : vector<16x16xf32>
    %506 = vector.shape_cast %505 : vector<16x16xf32> to vector<1x16x16xf32>
    %cst_239 = arith.constant dense<0.000000e+00> : vector<1xf32>
    %507 = vector.multi_reduction <add>, %506, %cst_239 [1, 2] : vector<1x16x16xf32> to vector<1xf32>
    %508 = vector.shape_cast %507 : vector<1xf32> to vector<1x1x1xf32>
    %509 = vector.extract %508[0, 0, 0] : f32 from vector<1x1x1xf32>
    %510 = vector.broadcast %509 : f32 to vector<1x1xf32>
    %511 = arith.addf %474, %510 : vector<1x1xf32>
    %512 = vector.extract_strided_slice %473 {offsets = [80, 0], sizes = [16, 16], strides = [1, 1]} : vector<320x16xf32> to vector<16x16xf32>
    %513 = vector.extract_strided_slice %473 {offsets = [96, 0], sizes = [16, 16], strides = [1, 1]} : vector<320x16xf32> to vector<16x16xf32>
    %514 = vector.extract_strided_slice %473 {offsets = [112, 0], sizes = [16, 16], strides = [1, 1]} : vector<320x16xf32> to vector<16x16xf32>
    %515 = vector.extract_strided_slice %473 {offsets = [128, 0], sizes = [16, 16], strides = [1, 1]} : vector<320x16xf32> to vector<16x16xf32>
    %516 = vector.extract_strided_slice %473 {offsets = [144, 0], sizes = [16, 16], strides = [1, 1]} : vector<320x16xf32> to vector<16x16xf32>
    %517 = arith.mulf %512, %512 : vector<16x16xf32>
    %518 = arith.subf %514, %517 : vector<16x16xf32>
    %519 = arith.mulf %513, %513 : vector<16x16xf32>
    %520 = arith.subf %515, %519 : vector<16x16xf32>
    %521 = arith.mulf %512, %513 : vector<16x16xf32>
    %522 = arith.subf %516, %521 : vector<16x16xf32>
    %cst_240 = arith.constant 2.000000e+00 : f32
    %523 = vector.broadcast %cst_240 : f32 to vector<16x16xf32>
    %524 = arith.mulf %523, %512 : vector<16x16xf32>
    %525 = arith.mulf %524, %513 : vector<16x16xf32>
    %cst_241 = arith.constant 9.99999974E-5 : f32
    %526 = vector.broadcast %cst_241 : f32 to vector<16x16xf32>
    %527 = arith.addf %525, %526 : vector<16x16xf32>
    %cst_242 = arith.constant 2.000000e+00 : f32
    %528 = vector.broadcast %cst_242 : f32 to vector<16x16xf32>
    %529 = arith.mulf %528, %522 : vector<16x16xf32>
    %cst_243 = arith.constant 8.99999984E-4 : f32
    %530 = vector.broadcast %cst_243 : f32 to vector<16x16xf32>
    %531 = arith.addf %529, %530 : vector<16x16xf32>
    %532 = arith.mulf %527, %531 : vector<16x16xf32>
    %533 = arith.mulf %512, %512 : vector<16x16xf32>
    %534 = arith.mulf %513, %513 : vector<16x16xf32>
    %535 = arith.addf %533, %534 : vector<16x16xf32>
    %cst_244 = arith.constant 9.99999974E-5 : f32
    %536 = vector.broadcast %cst_244 : f32 to vector<16x16xf32>
    %537 = arith.addf %535, %536 : vector<16x16xf32>
    %538 = arith.addf %518, %520 : vector<16x16xf32>
    %cst_245 = arith.constant 8.99999984E-4 : f32
    %539 = vector.broadcast %cst_245 : f32 to vector<16x16xf32>
    %540 = arith.addf %538, %539 : vector<16x16xf32>
    %541 = arith.mulf %537, %540 : vector<16x16xf32>
    %542 = arith.divf %532, %541 : vector<16x16xf32>
    %543 = vector.shape_cast %542 : vector<16x16xf32> to vector<1x16x16xf32>
    %cst_246 = arith.constant dense<0.000000e+00> : vector<1xf32>
    %544 = vector.multi_reduction <add>, %543, %cst_246 [1, 2] : vector<1x16x16xf32> to vector<1xf32>
    %545 = vector.shape_cast %544 : vector<1xf32> to vector<1x1x1xf32>
    %546 = vector.extract %545[0, 0, 0] : f32 from vector<1x1x1xf32>
    %547 = vector.broadcast %546 : f32 to vector<1x1xf32>
    %548 = arith.addf %511, %547 : vector<1x1xf32>
    %549 = vector.extract_strided_slice %473 {offsets = [160, 0], sizes = [16, 16], strides = [1, 1]} : vector<320x16xf32> to vector<16x16xf32>
    %550 = vector.extract_strided_slice %473 {offsets = [176, 0], sizes = [16, 16], strides = [1, 1]} : vector<320x16xf32> to vector<16x16xf32>
    %551 = vector.extract_strided_slice %473 {offsets = [192, 0], sizes = [16, 16], strides = [1, 1]} : vector<320x16xf32> to vector<16x16xf32>
    %552 = vector.extract_strided_slice %473 {offsets = [208, 0], sizes = [16, 16], strides = [1, 1]} : vector<320x16xf32> to vector<16x16xf32>
    %553 = vector.extract_strided_slice %473 {offsets = [224, 0], sizes = [16, 16], strides = [1, 1]} : vector<320x16xf32> to vector<16x16xf32>
    %554 = arith.mulf %549, %549 : vector<16x16xf32>
    %555 = arith.subf %551, %554 : vector<16x16xf32>
    %556 = arith.mulf %550, %550 : vector<16x16xf32>
    %557 = arith.subf %552, %556 : vector<16x16xf32>
    %558 = arith.mulf %549, %550 : vector<16x16xf32>
    %559 = arith.subf %553, %558 : vector<16x16xf32>
    %cst_247 = arith.constant 2.000000e+00 : f32
    %560 = vector.broadcast %cst_247 : f32 to vector<16x16xf32>
    %561 = arith.mulf %560, %549 : vector<16x16xf32>
    %562 = arith.mulf %561, %550 : vector<16x16xf32>
    %cst_248 = arith.constant 9.99999974E-5 : f32
    %563 = vector.broadcast %cst_248 : f32 to vector<16x16xf32>
    %564 = arith.addf %562, %563 : vector<16x16xf32>
    %cst_249 = arith.constant 2.000000e+00 : f32
    %565 = vector.broadcast %cst_249 : f32 to vector<16x16xf32>
    %566 = arith.mulf %565, %559 : vector<16x16xf32>
    %cst_250 = arith.constant 8.99999984E-4 : f32
    %567 = vector.broadcast %cst_250 : f32 to vector<16x16xf32>
    %568 = arith.addf %566, %567 : vector<16x16xf32>
    %569 = arith.mulf %564, %568 : vector<16x16xf32>
    %570 = arith.mulf %549, %549 : vector<16x16xf32>
    %571 = arith.mulf %550, %550 : vector<16x16xf32>
    %572 = arith.addf %570, %571 : vector<16x16xf32>
    %cst_251 = arith.constant 9.99999974E-5 : f32
    %573 = vector.broadcast %cst_251 : f32 to vector<16x16xf32>
    %574 = arith.addf %572, %573 : vector<16x16xf32>
    %575 = arith.addf %555, %557 : vector<16x16xf32>
    %cst_252 = arith.constant 8.99999984E-4 : f32
    %576 = vector.broadcast %cst_252 : f32 to vector<16x16xf32>
    %577 = arith.addf %575, %576 : vector<16x16xf32>
    %578 = arith.mulf %574, %577 : vector<16x16xf32>
    %579 = arith.divf %569, %578 : vector<16x16xf32>
    %580 = vector.shape_cast %579 : vector<16x16xf32> to vector<1x16x16xf32>
    %cst_253 = arith.constant dense<0.000000e+00> : vector<1xf32>
    %581 = vector.multi_reduction <add>, %580, %cst_253 [1, 2] : vector<1x16x16xf32> to vector<1xf32>
    %582 = vector.shape_cast %581 : vector<1xf32> to vector<1x1x1xf32>
    %583 = vector.extract %582[0, 0, 0] : f32 from vector<1x1x1xf32>
    %584 = vector.broadcast %583 : f32 to vector<1x1xf32>
    %585 = arith.addf %548, %584 : vector<1x1xf32>
    %586 = vector.extract_strided_slice %473 {offsets = [240, 0], sizes = [16, 16], strides = [1, 1]} : vector<320x16xf32> to vector<16x16xf32>
    %587 = vector.extract_strided_slice %473 {offsets = [256, 0], sizes = [16, 16], strides = [1, 1]} : vector<320x16xf32> to vector<16x16xf32>
    %588 = vector.extract_strided_slice %473 {offsets = [272, 0], sizes = [16, 16], strides = [1, 1]} : vector<320x16xf32> to vector<16x16xf32>
    %589 = vector.extract_strided_slice %473 {offsets = [288, 0], sizes = [16, 16], strides = [1, 1]} : vector<320x16xf32> to vector<16x16xf32>
    %590 = vector.extract_strided_slice %473 {offsets = [304, 0], sizes = [16, 16], strides = [1, 1]} : vector<320x16xf32> to vector<16x16xf32>
    %591 = arith.mulf %586, %586 : vector<16x16xf32>
    %592 = arith.subf %588, %591 : vector<16x16xf32>
    %593 = arith.mulf %587, %587 : vector<16x16xf32>
    %594 = arith.subf %589, %593 : vector<16x16xf32>
    %595 = arith.mulf %586, %587 : vector<16x16xf32>
    %596 = arith.subf %590, %595 : vector<16x16xf32>
    %cst_254 = arith.constant 2.000000e+00 : f32
    %597 = vector.broadcast %cst_254 : f32 to vector<16x16xf32>
    %598 = arith.mulf %597, %586 : vector<16x16xf32>
    %599 = arith.mulf %598, %587 : vector<16x16xf32>
    %cst_255 = arith.constant 9.99999974E-5 : f32
    %600 = vector.broadcast %cst_255 : f32 to vector<16x16xf32>
    %601 = arith.addf %599, %600 : vector<16x16xf32>
    %cst_256 = arith.constant 2.000000e+00 : f32
    %602 = vector.broadcast %cst_256 : f32 to vector<16x16xf32>
    %603 = arith.mulf %602, %596 : vector<16x16xf32>
    %cst_257 = arith.constant 8.99999984E-4 : f32
    %604 = vector.broadcast %cst_257 : f32 to vector<16x16xf32>
    %605 = arith.addf %603, %604 : vector<16x16xf32>
    %606 = arith.mulf %601, %605 : vector<16x16xf32>
    %607 = arith.mulf %586, %586 : vector<16x16xf32>
    %608 = arith.mulf %587, %587 : vector<16x16xf32>
    %609 = arith.addf %607, %608 : vector<16x16xf32>
    %cst_258 = arith.constant 9.99999974E-5 : f32
    %610 = vector.broadcast %cst_258 : f32 to vector<16x16xf32>
    %611 = arith.addf %609, %610 : vector<16x16xf32>
    %612 = arith.addf %592, %594 : vector<16x16xf32>
    %cst_259 = arith.constant 8.99999984E-4 : f32
    %613 = vector.broadcast %cst_259 : f32 to vector<16x16xf32>
    %614 = arith.addf %612, %613 : vector<16x16xf32>
    %615 = arith.mulf %611, %614 : vector<16x16xf32>
    %616 = arith.divf %606, %615 : vector<16x16xf32>
    %617 = vector.shape_cast %616 : vector<16x16xf32> to vector<1x16x16xf32>
    %cst_260 = arith.constant dense<0.000000e+00> : vector<1xf32>
    %618 = vector.multi_reduction <add>, %617, %cst_260 [1, 2] : vector<1x16x16xf32> to vector<1xf32>
    %619 = vector.shape_cast %618 : vector<1xf32> to vector<1x1x1xf32>
    %620 = vector.extract %619[0, 0, 0] : f32 from vector<1x1x1xf32>
    %621 = vector.broadcast %620 : f32 to vector<1x1xf32>
    %622 = arith.addf %585, %621 : vector<1x1xf32>
    %c0_261 = arith.constant 0 : index
    %c0_262 = arith.constant 0 : index
    %623 = vector.load %arg15[%c0_261, %c0_262] : memref<1x1xf32, #tpu.memory_space<vmem>>, vector<1x1xf32>
    %624 = arith.addf %623, %622 : vector<1x1xf32>
    %c0_263 = arith.constant 0 : index
    %c0_264 = arith.constant 0 : index
    %625 = vector.load %arg15[%c0_263, %c0_264] : memref<1x1xf32, #tpu.memory_space<vmem>>, vector<1x1xf32>
    tpu.vector_store %arg15[%c0_263, %c0_264], %624 {strides = array<i32>} : memref<1x1xf32, #tpu.memory_space<vmem>>, vector<1x1xf32>,
    %c1_i32 = arith.constant 1 : i32
    %626 = arith.cmpi eq, %arg1, %c1_i32 : i32
    %627 = arith.extui %626 : i1 to i32
    %c0_i32_265 = arith.constant 0 : i32
    %628 = arith.cmpi ne, %627, %c0_i32_265 : i32
    scf.if %628 {
      %629 = tpu.iota {dimensions = array<i32: 0>} : vector<8x128xi32>
      %630 = tpu.iota {dimensions = array<i32: 1>} : vector<8x128xi32>
      %c0_i32_266 = arith.constant 0 : i32
      %631 = vector.broadcast %c0_i32_266 : i32 to vector<8x128xi32>
      %632 = arith.cmpi eq, %629, %631 : vector<8x128xi32>
      %c0_i32_267 = arith.constant 0 : i32
      %633 = vector.broadcast %c0_i32_267 : i32 to vector<8x128xi32>
      %634 = arith.cmpi eq, %630, %633 : vector<8x128xi32>
      %635 = arith.andi %632, %634 : vector<8x128xi1>
      %c0_268 = arith.constant 0 : index
      %c0_269 = arith.constant 0 : index
      %636 = vector.load %arg12[%c0_268, %c0_269] : memref<1x1xf32, #tpu.memory_space<vmem>>, vector<1x1xf32>
      %cst_270 = arith.constant 0.000000e+00 : f32
      %637 = vector.shape_cast %636 : vector<1x1xf32> to vector<1x1xf32>
      %638 = vector.broadcast %637 : vector<1x1xf32> to vector<8x128xf32>
      %639 = vector.broadcast %cst_270 : f32 to vector<8x128xf32>
      %640 = arith.select %635, %638, %639 : vector<8x128xi1>, vector<8x128xf32>
      %c1_i32_271 = arith.constant 1 : i32
      %641 = vector.broadcast %c1_i32_271 : i32 to vector<8x128xi32>
      %642 = arith.cmpi eq, %630, %641 : vector<8x128xi32>
      %643 = arith.andi %632, %642 : vector<8x128xi1>
      %c0_272 = arith.constant 0 : index
      %c0_273 = arith.constant 0 : index
      %644 = vector.load %arg13[%c0_272, %c0_273] : memref<1x1xf32, #tpu.memory_space<vmem>>, vector<1x1xf32>
      %cst_274 = arith.constant 0.000000e+00 : f32
      %645 = vector.shape_cast %644 : vector<1x1xf32> to vector<1x1xf32>
      %646 = vector.broadcast %645 : vector<1x1xf32> to vector<8x128xf32>
      %647 = vector.broadcast %cst_274 : f32 to vector<8x128xf32>
      %648 = arith.select %643, %646, %647 : vector<8x128xi1>, vector<8x128xf32>
      %649 = arith.addf %640, %648 : vector<8x128xf32>
      %c2_i32 = arith.constant 2 : i32
      %650 = vector.broadcast %c2_i32 : i32 to vector<8x128xi32>
      %651 = arith.cmpi eq, %630, %650 : vector<8x128xi32>
      %652 = arith.andi %632, %651 : vector<8x128xi1>
      %c0_275 = arith.constant 0 : index
      %c0_276 = arith.constant 0 : index
      %653 = vector.load %arg14[%c0_275, %c0_276] : memref<1x1xf32, #tpu.memory_space<vmem>>, vector<1x1xf32>
      %cst_277 = arith.constant 0.000000e+00 : f32
      %654 = vector.shape_cast %653 : vector<1x1xf32> to vector<1x1xf32>
      %655 = vector.broadcast %654 : vector<1x1xf32> to vector<8x128xf32>
      %656 = vector.broadcast %cst_277 : f32 to vector<8x128xf32>
      %657 = arith.select %652, %655, %656 : vector<8x128xi1>, vector<8x128xf32>
      %658 = arith.addf %649, %657 : vector<8x128xf32>
      %c3_i32 = arith.constant 3 : i32
      %659 = vector.broadcast %c3_i32 : i32 to vector<8x128xi32>
      %660 = arith.cmpi eq, %630, %659 : vector<8x128xi32>
      %661 = arith.andi %632, %660 : vector<8x128xi1>
      %c0_278 = arith.constant 0 : index
      %c0_279 = arith.constant 0 : index
      %662 = vector.load %arg15[%c0_278, %c0_279] : memref<1x1xf32, #tpu.memory_space<vmem>>, vector<1x1xf32>
      %cst_280 = arith.constant 0.000000e+00 : f32
      %663 = vector.shape_cast %662 : vector<1x1xf32> to vector<1x1xf32>
      %664 = vector.broadcast %663 : vector<1x1xf32> to vector<8x128xf32>
      %665 = vector.broadcast %cst_280 : f32 to vector<8x128xf32>
      %666 = arith.select %661, %664, %665 : vector<8x128xi1>, vector<8x128xf32>
      %667 = arith.addf %658, %666 : vector<8x128xf32>
      %c0_281 = arith.constant 0 : index
      %c0_282 = arith.constant 0 : index
      %c0_283 = arith.constant 0 : index
      %668 = vector.load %arg6[%c0_281, %c0_282, %c0_283] : memref<1x8x128xf32, #tpu.memory_space<vmem>>, vector<1x8x128xf32>
      %669 = vector.shape_cast %668 : vector<1x8x128xf32> to vector<8x128xf32>
      %670 = vector.shape_cast %667 : vector<8x128xf32> to vector<1x8x128xf32>
      tpu.vector_store %arg6[%c0_281, %c0_282, %c0_283], %670 {strides = array<i32>} : memref<1x8x128xf32, #tpu.memory_space<vmem>>, vector<1x8x128xf32>,
    } else {
    }
    return
  }
  func.func @transform_0(%arg0: i32, %arg1: i32) -> (i32, i32, i32, i32) {
    %c2_i32 = arith.constant 2 : i32
    %0 = arith.muli %arg0, %c2_i32 : i32
    %1 = arith.addi %0, %arg1 : i32
    %c0_i32 = arith.constant 0 : i32
    %c0_i32_0 = arith.constant 0 : i32
    %c0_i32_1 = arith.constant 0 : i32
    %c0_i32_2 = arith.constant 0 : i32
    return %1, %c0_i32, %c0_i32_0, %c0_i32_1 : i32, i32, i32, i32
  }
  func.func @transform_1(%arg0: i32, %arg1: i32) -> (i32, i32, i32, i32) {
    %c2_i32 = arith.constant 2 : i32
    %0 = arith.muli %arg0, %c2_i32 : i32
    %1 = arith.addi %0, %arg1 : i32
    %c0_i32 = arith.constant 0 : i32
    %c0_i32_0 = arith.constant 0 : i32
    %c0_i32_1 = arith.constant 0 : i32
    %c0_i32_2 = arith.constant 0 : i32
    return %1, %c0_i32, %c0_i32_0, %c0_i32_1 : i32, i32, i32, i32
  }
  func.func @transform_2(%arg0: i32, %arg1: i32) -> (i32, i32, i32, i32) {
    %c2_i32 = arith.constant 2 : i32
    %0 = arith.muli %arg0, %c2_i32 : i32
    %1 = arith.addi %0, %arg1 : i32
    %c0_i32 = arith.constant 0 : i32
    %c0_i32_0 = arith.constant 0 : i32
    %c0_i32_1 = arith.constant 0 : i32
    %c0_i32_2 = arith.constant 0 : i32
    return %1, %c0_i32, %c0_i32_0, %c0_i32_1 : i32, i32, i32, i32
  }
  func.func @transform_3(%arg0: i32, %arg1: i32) -> (i32, i32, i32, i32) {
    %c2_i32 = arith.constant 2 : i32
    %0 = arith.muli %arg0, %c2_i32 : i32
    %1 = arith.addi %0, %arg1 : i32
    %c0_i32 = arith.constant 0 : i32
    %c0_i32_0 = arith.constant 0 : i32
    %c0_i32_1 = arith.constant 0 : i32
    %c0_i32_2 = arith.constant 0 : i32
    return %1, %c0_i32, %c0_i32_0, %c0_i32_1 : i32, i32, i32, i32
  }
  func.func @transform_4(%arg0: i32, %arg1: i32) -> (i32, i32, i32) {
    %c0_i32 = arith.constant 0 : i32
    %c0_i32_0 = arith.constant 0 : i32
    %c0_i32_1 = arith.constant 0 : i32
    return %arg0, %c0_i32, %c0_i32_0 : i32, i32, i32
  }
}

</mosaic_0001>

<llo_original>
// kernel: tpu_custom_call.1
$region0: #{tpu_custom_call.1}
  #allocation0 [shape = 'u32[]', space=smem, size = 0x4, offset = 0x4, fixed_abs, tag = 'smem constant byte address 0x4 - core index']
  #allocation1 [shape = 'u32[144,128]{1,0:T(1,128)}', space=vmem, size = 0x12000, scoped, tag = 'internal scratch']
  #allocation2 [shape = 'bf16[32,16]{1,0:T(16,128)(2,1)}', space=vmem, size = 0x2000, scoped, tag = 'scratch operand']
  #allocation3 [shape = 'bf16[16,16]{1,0:T(16,128)(2,1)}', space=vmem, size = 0x1000, scoped, tag = 'scratch operand']
  #allocation4 [shape = 'bf16[16,16]{1,0:T(16,128)(2,1)}', space=vmem, size = 0x1000, scoped, tag = 'scratch operand']
  #allocation5 [shape = 'f32[16,16]{1,0:T(8,128)}', space=vmem, size = 0x2000, scoped, tag = 'scratch operand']
  #allocation6 [shape = 'f32[16,16]{1,0:T(8,128)}', space=vmem, size = 0x2000, scoped, tag = 'scratch operand']
  #allocation7 [shape = 'f32[1,1]{1,0:T(1,128)}', space=vmem, size = 0x200, scoped, tag = 'scratch operand']
  #allocation8 [shape = 'f32[1,1]{1,0:T(1,128)}', space=vmem, size = 0x200, scoped, tag = 'scratch operand']
  #allocation9 [shape = 'f32[1,1]{1,0:T(1,128)}', space=vmem, size = 0x200, scoped, tag = 'scratch operand']
  #allocation10 [shape = 'f32[1,1]{1,0:T(1,128)}', space=vmem, size = 0x200, scoped, tag = 'scratch operand']
  %s0 = inlined_call_operand.hbm [shape: f32[16,3,16,16], index: 0, kind: input, shape index: {}]
  %s1 = inlined_call_operand.hbm [shape: f32[16,1,16,16], index: 1, kind: input, shape index: {}]
  %s2 = inlined_call_operand.hbm [shape: f32[16,1,16,16], index: 2, kind: input, shape index: {}]
  %s3 = inlined_call_operand.hbm [shape: f32[16,2,16,16], index: 3, kind: input, shape index: {}]
  %s4 = inlined_call_operand.hbm [shape: f32[2,8,128], index: 4, kind: output, shape index: {}]
  %s5 = sld [smem:[#allocation0]]
  $region73: #{tpu_custom_call.1} parent=0
    _
  %s7 = ssub.s32 1, %s5
  %s8 = scalar_select 0, %s7, %s5
  $region1: #{tpu_custom_call.1} parent=0
    #allocation11 [shape = 'u8[196608]{0}', space=vmem, size = 0x30000, scoped, tag = 'input window, operand 0']
    #allocation12 [shape = 's32[2]{0}', space=sflag, size = 0x8, scoped, tag = 'scoped memory for tpu_custom_call.1']
    #allocation13 [shape = 's32[2]{0}', space=sflag, size = 0x8, scoped, tag = 'scoped memory for tpu_custom_call.1']
    #allocation14 [shape = 'u8[65536]{0}', space=vmem, size = 0x10000, scoped, tag = 'input window, operand 1']
    #allocation15 [shape = 's32[2]{0}', space=sflag, size = 0x8, scoped, tag = 'scoped memory for tpu_custom_call.1']
    #allocation16 [shape = 'u8[65536]{0}', space=vmem, size = 0x10000, scoped, tag = 'input window, operand 2']
    #allocation17 [shape = 'u8[131072]{0}', space=vmem, size = 0x20000, scoped, tag = 'input window, operand 3']
    #allocation18 [shape = 's32[2]{0}', space=sflag, size = 0x8, scoped, tag = 'scoped memory for tpu_custom_call.1']
    #allocation19 [shape = 'u8[8192]{0}', space=vmem, size = 0x2000, scoped, tag = 'output window, operand 0']
    %9 = vsyncpa [#allocation12], 0
    %s10 = scalar_lea.sflag [#allocation12], 1
    %11 = vsyncpa %s10, 0
    %12 = vsyncpa [#allocation15], 0
    %s13 = scalar_lea.sflag [#allocation15], 1
    %14 = vsyncpa %s13, 0
    %15 = vsyncpa [#allocation18], 0
    %s16 = scalar_lea.sflag [#allocation18], 1
    %17 = vsyncpa %s16, 0
    %18 = vsyncpa [#allocation13], 0
    %s19 = scalar_lea.sflag [#allocation13], 1
    %20 = vsyncpa %s19, 0
    loop: start=0, step=1, limit=6
    $region2: #{tpu_custom_call.1} parent=1 // loop_pre_header
      _
    $region3: #{tpu_custom_call.1} parent=1 // loop_header
      %s22 = sphi 0, %s26
      %p23 = scmp.ge.s32.totalorder %s22, 6
      %s29 = sphi 0, %s41
      %s30 = sphi 0, %s37
      %s31 = sphi 0, %s29
      %s32 = sphi 0, %s30
      %s33 = sphi 0, %s31
      %s34 = sphi 0, %s32
      %s48 = sphi 0, %s50
      %s51 = sphi 0, %s48
      %s52 = sphi 0, %s51
      %s68 = sphi 0, %s52
      %s78 = sphi 0, %s80
      %s81 = sphi 0, %s78
      %s82 = sphi 0, %s81
      %s98 = sphi 0, %s82
      %s108 = sphi 0, %s110
      %s111 = sphi 0, %s108
      %s112 = sphi 0, %s111
      %s128 = sphi 0, %s112
      %s138 = sphi 0, %s140
      %s141 = sphi 0, %s138
      %s142 = sphi 0, %s141
      %s158 = sphi 0, %s142
      %s164 = sphi 0, %s166
      %s167 = sphi 0, %s164
      %s168 = sphi 0, %s167
      %s184 = sphi 0, %s168
    $region4: #{tpu_custom_call.1} parent=1 // loop_header_branch
      %25 = sbr.rel (%p23) target = $region8
    $region5: #{tpu_custom_call.1} parent=1 // loop_body
      %s27 = ssub.s32 %s22, 1
      %s28 = ssub.s32 %s22, 2
      %s35 = sadd.s32 1, %s30
      %p36 = scmp.ge.s32.totalorder %s35, 2
      %s37 = scalar_select %p36, 0, %s35
      %s38 = sadd.s32 1, %s29
      %s39 = scalar_select %p36, %s38, %s29
      %p40 = scmp.ge.s32.totalorder %s39, 2
      %s41 = scalar_select %p40, 0, %s39
      %s42 = smul.u32 %s29, 2
      %s43 = sadd.s32 %s42, %s30
      %s44 = smul.u32 %s41, 2
      %s45 = sadd.s32 %s44, %s37
      %s46 = ssub.s32 %s43, %s45
      %p47 = scmp.eq.s32.totalorder %s46, 0
      %s49 = sadd.s32 %s48, 1
      %s50 = scalar_select %p47, %s48, %s49
      %p53 = pneg %p47
      %p54 = scmp.eq.s32.totalorder %s22, 3
      %p55 = por %p53, %p54
      %p56 = scmp.ne.s32.totalorder %s48, %s51
      %p57 = scmp.eq.s32.totalorder %s22, 0
      %p58 = por %p56, %p57
      %p59 = scmp.ne.s32.totalorder %s48, %s51
      %p60 = scmp.eq.s32.totalorder %s27, 3
      %p61 = por %p59, %p60
      %p62 = scmp.ne.s32.totalorder %s51, %s52
      %p63 = scmp.eq.s32.totalorder %s27, 0
      %p64 = por %p62, %p63
      %p65 = scmp.ne.s32.totalorder %s51, %s52
      %p66 = scmp.eq.s32.totalorder %s28, 3
      %p67 = por %p65, %p66
      %p69 = scmp.ne.s32.totalorder %s52, %s68
      %p70 = scmp.eq.s32.totalorder %s28, 0
      %p71 = por %p69, %p70
      %s72 = smul.u32 %s29, 2
      %s73 = sadd.s32 %s72, %s30
      %s74 = smul.u32 %s41, 2
      %s75 = sadd.s32 %s74, %s37
      %s76 = ssub.s32 %s73, %s75
      %p77 = scmp.eq.s32.totalorder %s76, 0
      %s79 = sadd.s32 %s78, 1
      %s80 = scalar_select %p77, %s78, %s79
      %p83 = pneg %p77
      %p84 = scmp.eq.s32.totalorder %s22, 3
      %p85 = por %p83, %p84
      %p86 = scmp.ne.s32.totalorder %s78, %s81
      %p87 = scmp.eq.s32.totalorder %s22, 0
      %p88 = por %p86, %p87
      %p89 = scmp.ne.s32.totalorder %s78, %s81
      %p90 = scmp.eq.s32.totalorder %s27, 3
      %p91 = por %p89, %p90
      %p92 = scmp.ne.s32.totalorder %s81, %s82
      %p93 = scmp.eq.s32.totalorder %s27, 0
      %p94 = por %p92, %p93
      %p95 = scmp.ne.s32.totalorder %s81, %s82
      %p96 = scmp.eq.s32.totalorder %s28, 3
      %p97 = por %p95, %p96
      %p99 = scmp.ne.s32.totalorder %s82, %s98
      %p100 = scmp.eq.s32.totalorder %s28, 0
      %p101 = por %p99, %p100
      %s102 = smul.u32 %s29, 2
      %s103 = sadd.s32 %s102, %s30
      %s104 = smul.u32 %s41, 2
      %s105 = sadd.s32 %s104, %s37
      %s106 = ssub.s32 %s103, %s105
      %p107 = scmp.eq.s32.totalorder %s106, 0
      %s109 = sadd.s32 %s108, 1
      %s110 = scalar_select %p107, %s108, %s109
      %p113 = pneg %p107
      %p114 = scmp.eq.s32.totalorder %s22, 3
      %p115 = por %p113, %p114
      %p116 = scmp.ne.s32.totalorder %s108, %s111
      %p117 = scmp.eq.s32.totalorder %s22, 0
      %p118 = por %p116, %p117
      %p119 = scmp.ne.s32.totalorder %s108, %s111
      %p120 = scmp.eq.s32.totalorder %s27, 3
      %p121 = por %p119, %p120
      %p122 = scmp.ne.s32.totalorder %s111, %s112
      %p123 = scmp.eq.s32.totalorder %s27, 0
      %p124 = por %p122, %p123
      %p125 = scmp.ne.s32.totalorder %s111, %s112
      %p126 = scmp.eq.s32.totalorder %s28, 3
      %p127 = por %p125, %p126
      %p129 = scmp.ne.s32.totalorder %s112, %s128
      %p130 = scmp.eq.s32.totalorder %s28, 0
      %p131 = por %p129, %p130
      %s132 = smul.u32 %s29, 2
      %s133 = sadd.s32 %s132, %s30
      %s134 = smul.u32 %s41, 2
      %s135 = sadd.s32 %s134, %s37
      %s136 = ssub.s32 %s133, %s135
      %p137 = scmp.eq.s32.totalorder %s136, 0
      %s139 = sadd.s32 %s138, 1
      %s140 = scalar_select %p137, %s138, %s139
      %p143 = pneg %p137
      %p144 = scmp.eq.s32.totalorder %s22, 3
      %p145 = por %p143, %p144
      %p146 = scmp.ne.s32.totalorder %s138, %s141
      %p147 = scmp.eq.s32.totalorder %s22, 0
      %p148 = por %p146, %p147
      %p149 = scmp.ne.s32.totalorder %s138, %s141
      %p150 = scmp.eq.s32.totalorder %s27, 3
      %p151 = por %p149, %p150
      %p152 = scmp.ne.s32.totalorder %s141, %s142
      %p153 = scmp.eq.s32.totalorder %s27, 0
      %p154 = por %p152, %p153
      %p155 = scmp.ne.s32.totalorder %s141, %s142
      %p156 = scmp.eq.s32.totalorder %s28, 3
      %p157 = por %p155, %p156
      %p159 = scmp.ne.s32.totalorder %s142, %s158
      %p160 = scmp.eq.s32.totalorder %s28, 0
      %p161 = por %p159, %p160
      %s162 = ssub.s32 %s29, %s41
      %p163 = scmp.eq.s32.totalorder %s162, 0
      %s165 = sadd.s32 %s164, 1
      %s166 = scalar_select %p163, %s164, %s165
      %p169 = pneg %p163
      %p170 = scmp.eq.s32.totalorder %s22, 3
      %p171 = por %p169, %p170
      %p172 = scmp.ne.s32.totalorder %s164, %s167
      %p173 = scmp.eq.s32.totalorder %s22, 0
      %p174 = por %p172, %p173
      %p175 = scmp.ne.s32.totalorder %s164, %s167
      %p176 = scmp.eq.s32.totalorder %s27, 3
      %p177 = por %p175, %p176
      %p178 = scmp.ne.s32.totalorder %s167, %s168
      %p179 = scmp.eq.s32.totalorder %s27, 0
      %p180 = por %p178, %p179
      %p181 = scmp.ne.s32.totalorder %s167, %s168
      %p182 = scmp.eq.s32.totalorder %s28, 3
      %p183 = por %p181, %p182
      %p185 = scmp.ne.s32.totalorder %s168, %s184
      %p186 = scmp.eq.s32.totalorder %s28, 0
      %p187 = por %p185, %p186
      %p188 = scmp.le.s32.totalorder 1, %s22
      %p189 = scmp.lt.s32.totalorder %s22, 5
      %p190 = pnand %p188, %p189
      %p191 = pneg %p190
      // Predicated region
      $region9: #{tpu_custom_call.1} parent=5 // pred_check
        _
      $region10: #{tpu_custom_call.1} parent=5 // pred_check_branch
        %193 = sbr.rel (%p190) target = $region12
      $region11: #{tpu_custom_call.1} parent=5 // pred_region
        %s194 = ssub.s32 %s22, 1
      $region12: #{tpu_custom_call.1} parent=5 // pred_fallthru
        _
      %p195 = scmp.lt.s32.totalorder %s22, 4
      // Predicated region
      $region13: #{tpu_custom_call.1} parent=5 // pred_check
        %p196 = pneg %p195
      $region14: #{tpu_custom_call.1} parent=5 // pred_check_branch
        %198 = sbr.rel (%p196) target = $region16
      $region15: #{tpu_custom_call.1} parent=5 // pred_region
        // Predicated region
        $region17: #{tpu_custom_call.1} parent=15 // pred_check
          %p199 = pneg %p58
        $region18: #{tpu_custom_call.1} parent=15 // pred_check_branch
          %201 = sbr.rel (%p199) target = $region20
        $region19: #{tpu_custom_call.1} parent=15 // pred_region
          %s202 = sand.u32 %s48, 1
          %s203 = scalar_lea.sflag [#allocation12], %s202
          %s204 = sand.u32 %s48, 1
          %s205 = smul.addr %s204, 192
          %s206 = scalar_lea.vmem [#allocation11], %s205
          %s207 = smul.u32 %s29, 2
          %s208 = sadd.s32 %s207, %s30
          %s209 = smul.u32 4, %s208
          %s211 = ssub.s32 3072, 3072
          %212 = vsyncadd %s203, %s211
          %s213 = smul.addr %s209, 6
          %s214 = smul.addr %s213, 128
          %s215 = scalar_lea.hbm %s0, %s214
          %s216 = sshll.u32 %s206, 4
          %s217 = int_to_ptr.vmem [resolvable:$true] %s216
          %222 = dma.hbm_to_vmem [thread:$0]  %s215, 3072, %s217, %s203, 128, 128, 8
        $region20: #{tpu_custom_call.1} parent=15 // pred_fallthru
          _
        // Predicated region
        $region21: #{tpu_custom_call.1} parent=15 // pred_check
          %p223 = pneg %p88
        $region22: #{tpu_custom_call.1} parent=15 // pred_check_branch
          %225 = sbr.rel (%p223) target = $region24
        $region23: #{tpu_custom_call.1} parent=15 // pred_region
          %s226 = sand.u32 %s22, 1
          %s227 = scalar_lea.sflag [#allocation15], %s226
          %s228 = sand.u32 %s78, 1
          %s229 = smul.addr %s228, 64
          %s230 = scalar_lea.vmem [#allocation14], %s229
          %s231 = smul.u32 %s29, 2
          %s232 = sadd.s32 %s231, %s30
          %s233 = smul.u32 4, %s232
          %s235 = ssub.s32 1024, 1024
          %236 = vsyncadd %s227, %s235
          %s237 = smul.addr %s233, 2
          %s238 = smul.addr %s237, 128
          %s239 = scalar_lea.hbm %s1, %s238
          %s240 = sshll.u32 %s230, 4
          %s241 = int_to_ptr.vmem [resolvable:$true] %s240
          %246 = dma.hbm_to_vmem [thread:$0]  %s239, 1024, %s241, %s227, 128, 128, 8
        $region24: #{tpu_custom_call.1} parent=15 // pred_fallthru
          _
        // Predicated region
        $region25: #{tpu_custom_call.1} parent=15 // pred_check
          %p247 = pneg %p118
        $region26: #{tpu_custom_call.1} parent=15 // pred_check_branch
          %249 = sbr.rel (%p247) target = $region28
        $region27: #{tpu_custom_call.1} parent=15 // pred_region
          %s250 = sand.u32 %s22, 1
          %s251 = scalar_lea.sflag [#allocation15], %s250
          %s252 = sand.u32 %s108, 1
          %s253 = smul.addr %s252, 64
          %s254 = scalar_lea.vmem [#allocation16], %s253
          %s255 = smul.u32 %s29, 2
          %s256 = sadd.s32 %s255, %s30
          %s257 = smul.u32 4, %s256
          %s259 = ssub.s32 1024, 1024
          %260 = vsyncadd %s251, %s259
          %s261 = smul.addr %s257, 2
          %s262 = smul.addr %s261, 128
          %s263 = scalar_lea.hbm %s2, %s262
          %s264 = sshll.u32 %s254, 4
          %s265 = int_to_ptr.vmem [resolvable:$true] %s264
          %270 = dma.hbm_to_vmem [thread:$0]  %s263, 1024, %s265, %s251, 128, 128, 8
        $region28: #{tpu_custom_call.1} parent=15 // pred_fallthru
          _
        // Predicated region
        $region29: #{tpu_custom_call.1} parent=15 // pred_check
          %p271 = pneg %p148
        $region30: #{tpu_custom_call.1} parent=15 // pred_check_branch
          %273 = sbr.rel (%p271) target = $region32
        $region31: #{tpu_custom_call.1} parent=15 // pred_region
          %s274 = sand.u32 %s138, 1
          %s275 = scalar_lea.sflag [#allocation18], %s274
          %s276 = sand.u32 %s138, 1
          %s277 = smul.addr %s276, 128
          %s278 = scalar_lea.vmem [#allocation17], %s277
          %s279 = smul.u32 %s29, 2
          %s280 = sadd.s32 %s279, %s30
          %s281 = smul.u32 4, %s280
          %s283 = ssub.s32 2048, 2048
          %284 = vsyncadd %s275, %s283
          %s285 = smul.addr %s281, 4
          %s286 = smul.addr %s285, 128
          %s287 = scalar_lea.hbm %s3, %s286
          %s288 = sshll.u32 %s278, 4
          %s289 = int_to_ptr.vmem [resolvable:$true] %s288
          %294 = dma.hbm_to_vmem [thread:$0]  %s287, 2048, %s289, %s275, 128, 128, 8
        $region32: #{tpu_custom_call.1} parent=15 // pred_fallthru
          _
      $region16: #{tpu_custom_call.1} parent=5 // pred_fallthru
        _
      %p295 = scmp.le.s32.totalorder 1, %s22
      %p296 = scmp.lt.s32.totalorder %s22, 5
      %p297 = pnand %p295, %p296
      %p298 = pneg %p297
      // Predicated region
      $region33: #{tpu_custom_call.1} parent=5 // pred_check
        _
      $region34: #{tpu_custom_call.1} parent=5 // pred_check_branch
        %300 = sbr.rel (%p297) target = $region36
      $region35: #{tpu_custom_call.1} parent=5 // pred_region
        %s301 = ssub.s32 %s22, 1
        %s302 = sand.u32 %s51, 1
        %s303 = scalar_lea.sflag [#allocation12], %s302
        %s304 = sand.u32 %s51, 1
        %s305 = smul.addr %s304, 192
        %s306 = scalar_lea.vmem [#allocation11], %s305
        // Predicated region
        $region37: #{tpu_custom_call.1} parent=35 // pred_check
          %p307 = pneg %p64
        $region38: #{tpu_custom_call.1} parent=35 // pred_check_branch
          %309 = sbr.rel (%p307) target = $region40
        $region39: #{tpu_custom_call.1} parent=35 // pred_region
          %310 = dma.done %s303, 3072
        $region40: #{tpu_custom_call.1} parent=35 // pred_fallthru
          _
        %s311 = sand.u32 %s27, 1
        %s312 = scalar_lea.sflag [#allocation15], %s311
        %s313 = sand.u32 %s81, 1
        %s314 = smul.addr %s313, 64
        %s315 = scalar_lea.vmem [#allocation14], %s314
        // Predicated region
        $region41: #{tpu_custom_call.1} parent=35 // pred_check
          %p316 = pneg %p94
        $region42: #{tpu_custom_call.1} parent=35 // pred_check_branch
          %318 = sbr.rel (%p316) target = $region44
        $region43: #{tpu_custom_call.1} parent=35 // pred_region
          %319 = dma.done %s312, 1024
        $region44: #{tpu_custom_call.1} parent=35 // pred_fallthru
          _
        %s320 = sand.u32 %s27, 1
        %s321 = scalar_lea.sflag [#allocation15], %s320
        %s322 = sand.u32 %s111, 1
        %s323 = smul.addr %s322, 64
        %s324 = scalar_lea.vmem [#allocation16], %s323
        // Predicated region
        $region45: #{tpu_custom_call.1} parent=35 // pred_check
          %p325 = pneg %p124
        $region46: #{tpu_custom_call.1} parent=35 // pred_check_branch
          %327 = sbr.rel (%p325) target = $region48
        $region47: #{tpu_custom_call.1} parent=35 // pred_region
          %328 = dma.done %s321, 1024
        $region48: #{tpu_custom_call.1} parent=35 // pred_fallthru
          _
        %s329 = sand.u32 %s141, 1
        %s330 = scalar_lea.sflag [#allocation18], %s329
        %s331 = sand.u32 %s141, 1
        %s332 = smul.addr %s331, 128
        %s333 = scalar_lea.vmem [#allocation17], %s332
        // Predicated region
        $region49: #{tpu_custom_call.1} parent=35 // pred_check
          %p334 = pneg %p154
        $region50: #{tpu_custom_call.1} parent=35 // pred_check_branch
          %336 = sbr.rel (%p334) target = $region52
        $region51: #{tpu_custom_call.1} parent=35 // pred_region
          %337 = dma.done %s330, 2048
        $region52: #{tpu_custom_call.1} parent=35 // pred_fallthru
          _
        %s338 = sand.u32 %s51, 1
        %s339 = scalar_lea.sflag [#allocation12], %s338
        %s340 = sand.u32 %s51, 1
        %s341 = smul.addr %s340, 192
        %s342 = scalar_lea.vmem [#allocation11], %s341
        %p343 = pneg %p64
        %p344 = pneg %p61
        %s345 = sand.u32 %s27, 1
        %s346 = scalar_lea.sflag [#allocation15], %s345
        %s347 = sand.u32 %s81, 1
        %s348 = smul.addr %s347, 64
        %s349 = scalar_lea.vmem [#allocation14], %s348
        %p350 = pneg %p94
        %p351 = pneg %p91
        %s352 = sand.u32 %s27, 1
        %s353 = scalar_lea.sflag [#allocation15], %s352
        %s354 = sand.u32 %s111, 1
        %s355 = smul.addr %s354, 64
        %s356 = scalar_lea.vmem [#allocation16], %s355
        %p357 = pneg %p124
        %p358 = pneg %p121
        %s359 = sand.u32 %s141, 1
        %s360 = scalar_lea.sflag [#allocation18], %s359
        %s361 = sand.u32 %s141, 1
        %s362 = smul.addr %s361, 128
        %s363 = scalar_lea.vmem [#allocation17], %s362
        %p364 = pneg %p154
        %p365 = pneg %p151
        %p366 = pneg %p180
        %p367 = pneg %p177
        %s368 = sand.u32 %s167, 1
        %s369 = scalar_lea.sflag [#allocation13], %s368
        %s370 = sand.u32 %s167, 1
        %s371 = smul.addr %s370, 8
        %s372 = scalar_lea.vmem [#allocation19], %s371
        %s373 = smul.u32 %s31, 2
        %s374 = sadd.s32 %s373, %s32
        %s375 = smul.u32 4, %s374
        %s376 = smul.u32 %s31, 2
        %s377 = sadd.s32 %s376, %s32
        %s378 = smul.u32 4, %s377
        %s379 = smul.u32 %s31, 2
        %s380 = sadd.s32 %s379, %s32
        %s381 = smul.u32 4, %s380
        %s382 = smul.u32 %s31, 2
        %s383 = sadd.s32 %s382, %s32
        %s384 = smul.u32 4, %s383
        %p386 = scmp.eq.s32.totalorder %s32, 0
        // Predicated region
        $region53: #{tpu_custom_call.1} parent=35 // pred_check
          %p387 = pneg %p386
        $region54: #{tpu_custom_call.1} parent=35 // pred_check_branch
          %389 = sbr.rel (%p387) target = $region56
        $region55: #{tpu_custom_call.1} parent=35 // pred_region
          %v390 = vlaneseq
          %v391 = vshrl.u32 %v390, 7
          %v392 = vadd.s32 %v391, 8
          %v393 = vlaneseq
          %v394 = vand.u32 %v393, 127
          %v395 = vsub.s32 %v394, %v391
          %v396 = vsub.s32 %v394, %v392
          %vm397 = vcmp.eq.s32.totalorder %v395, 0
          %vm398 = vcmp.eq.s32.totalorder %v396, 0
          %vm399 = vcmp.lt.s32.totalorder %v395, 0
          %v400 = vsub.s32 0, %v395
          %v401 = vsel %vm399, %v400, %v395
          %vm402 = vcmp.lt.s32.totalorder %v396, 0
          %v403 = vsub.s32 0, %v396
          %v404 = vsel %vm402, %v403, %v396
          %vm405 = vcmp.eq.s32.totalorder %v401, 1
          %vm406 = vcmp.eq.s32.totalorder %v404, 1
          %v407 = vsel %vm405, 1.0, 0.0
          %v408 = vsel %vm406, 1.0, 0.0
          %v409 = vsel %vm397, 2.0, %v407
          %v410 = vsel %vm398, 2.0, %v408
          %vm411 = vcmp.eq.s32.totalorder %v395, 4294967295
          %vm412 = vcmp.eq.s32.totalorder %v396, 4294967295
          %vm413 = vcmp.eq.s32.totalorder %v395, 1
          %vm414 = vcmp.eq.s32.totalorder %v396, 1
          %v415 = vsel %vm413, -1.0, 0.0
          %v416 = vsel %vm414, -1.0, 0.0
          %v417 = vsel %vm411, 1.0, %v415
          %v418 = vsel %vm412, 1.0, %v416
          %v419 = vpack.c.bf16 %v410, %v409
          %v420 = vpack.c.bf16 %v418, %v417
          %vm421 = vcmask 130048
          %422 = vst.msk [vmem:[#allocation2] sm:$0xff] %vm421, %v419
          %423 = vst.msk [vmem:[#allocation2 + $0x8] sm:$0xff] %vm421, %v420
          %v424 = vsel %vm397, 0.0010283801, 0.0
          %v425 = vsel %vm398, 0.0010283801, 0.0
          %v426 = vadd.f32 %v424, 0.0
          %v427 = vadd.f32 %v425, 0.0
          %v428 = vsel %vm413, 0.007598758, 0.0
          %v429 = vsel %vm414, 0.007598758, 0.0
          %v430 = vadd.f32 %v426, %v428
          %v431 = vadd.f32 %v427, %v429
          %vm432 = vcmp.eq.s32.totalorder %v395, 2
          %vm433 = vcmp.eq.s32.totalorder %v396, 2
          %v434 = vsel %vm432, 0.036000773, 0.0
          %v435 = vsel %vm433, 0.036000773, 0.0
          %v436 = vadd.f32 %v430, %v434
          %v437 = vadd.f32 %v431, %v435
          %vm438 = vcmp.eq.s32.totalorder %v395, 3
          %vm439 = vcmp.eq.s32.totalorder %v396, 3
          %v440 = vsel %vm438, 0.10936069, 0.0
          %v441 = vsel %vm439, 0.10936069, 0.0
          %v442 = vadd.f32 %v436, %v440
          %v443 = vadd.f32 %v437, %v441
          %vm444 = vcmp.eq.s32.totalorder %v395, 4
          %vm445 = vcmp.eq.s32.totalorder %v396, 4
          %v446 = vsel %vm444, 0.21300554, 0.0
          %v447 = vsel %vm445, 0.21300554, 0.0
          %v448 = vadd.f32 %v442, %v446
          %v449 = vadd.f32 %v443, %v447
          %vm450 = vcmp.eq.s32.totalorder %v395, 5
          %vm451 = vcmp.eq.s32.totalorder %v396, 5
          %v452 = vsel %vm450, 0.26601171, 0.0
          %v453 = vsel %vm451, 0.26601171, 0.0
          %v454 = vadd.f32 %v448, %v452
          %v455 = vadd.f32 %v449, %v453
          %vm456 = vcmp.eq.s32.totalorder %v395, 6
          %vm457 = vcmp.eq.s32.totalorder %v396, 6
          %v458 = vsel %vm456, 0.21300554, 0.0
          %v459 = vsel %vm457, 0.21300554, 0.0
          %v460 = vadd.f32 %v454, %v458
          %v461 = vadd.f32 %v455, %v459
          %vm462 = vcmp.eq.s32.totalorder %v395, 7
          %vm463 = vcmp.eq.s32.totalorder %v396, 7
          %v464 = vsel %vm462, 0.10936069, 0.0
          %v465 = vsel %vm463, 0.10936069, 0.0
          %v466 = vadd.f32 %v460, %v464
          %v467 = vadd.f32 %v461, %v465
          %vm468 = vcmp.eq.s32.totalorder %v395, 8
          %vm469 = vcmp.eq.s32.totalorder %v396, 8
          %v470 = vsel %vm468, 0.036000773, 0.0
          %v471 = vsel %vm469, 0.036000773, 0.0
          %v472 = vadd.f32 %v466, %v470
          %v473 = vadd.f32 %v467, %v471
          %vm474 = vcmp.eq.s32.totalorder %v395, 9
          %vm475 = vcmp.eq.s32.totalorder %v396, 9
          %v476 = vsel %vm474, 0.007598758, 0.0
          %v477 = vsel %vm475, 0.007598758, 0.0
          %v478 = vadd.f32 %v472, %v476
          %v479 = vadd.f32 %v473, %v477
          %vm480 = vcmp.eq.s32.totalorder %v395, 10
          %vm481 = vcmp.eq.s32.totalorder %v396, 10
          %v482 = vsel %vm480, 0.0010283801, 0.0
          %v483 = vsel %vm481, 0.0010283801, 0.0
          %v484 = vadd.f32 %v478, %v482
          %v485 = vadd.f32 %v479, %v483
          %vm486 = vcmp.lt.s32.totalorder %v391, 6
          %vm487 = vcmp.lt.s32.totalorder %v392, 6
          %v488 = vsel %vm486, %v484, 0.0
          %v489 = vsel %vm487, %v485, 0.0
          %490 = vst.msk [vmem:[#allocation5] sm:$0xff] %vm421, %v488
          %491 = vst.msk [vmem:[#allocation5 + $0x8] sm:$0xff] %vm421, %v489
          %v492 = vsel %vm411, 1.0, 0.0
          %v493 = vsel %vm412, 1.0, 0.0
          %v494 = vsel %vm413, -1.0, %v492
          %v495 = vsel %vm414, -1.0, %v493
          %v496 = vpack.c.bf16 %v495, %v494
          %497 = vst.msk [vmem:[#allocation3] sm:$0xff] %vm421, %v496
          %498 = vst.msk [vmem:[#allocation4] sm:$0xff] %vm421, %v419
          %v499 = vsub.s32 %v391, %v394
          %v500 = vsub.s32 %v392, %v394
          %vm501 = vcmp.eq.s32.totalorder %v499, 0
          %vm502 = vcmp.eq.s32.totalorder %v500, 0
          %v503 = vsel %vm501, 0.0010283801, 0.0
          %v504 = vsel %vm502, 0.0010283801, 0.0
          %v505 = vadd.f32 %v503, 0.0
          %v506 = vadd.f32 %v504, 0.0
          %vm507 = vcmp.eq.s32.totalorder %v499, 1
          %vm508 = vcmp.eq.s32.totalorder %v500, 1
          %v509 = vsel %vm507, 0.007598758, 0.0
          %v510 = vsel %vm508, 0.007598758, 0.0
          %v511 = vadd.f32 %v505, %v509
          %v512 = vadd.f32 %v506, %v510
          %vm513 = vcmp.eq.s32.totalorder %v499, 2
          %vm514 = vcmp.eq.s32.totalorder %v500, 2
          %v515 = vsel %vm513, 0.036000773, 0.0
          %v516 = vsel %vm514, 0.036000773, 0.0
          %v517 = vadd.f32 %v511, %v515
          %v518 = vadd.f32 %v512, %v516
          %vm519 = vcmp.eq.s32.totalorder %v499, 3
          %vm520 = vcmp.eq.s32.totalorder %v500, 3
          %v521 = vsel %vm519, 0.10936069, 0.0
          %v522 = vsel %vm520, 0.10936069, 0.0
          %v523 = vadd.f32 %v517, %v521
          %v524 = vadd.f32 %v518, %v522
          %vm525 = vcmp.eq.s32.totalorder %v499, 4
          %vm526 = vcmp.eq.s32.totalorder %v500, 4
          %v527 = vsel %vm525, 0.21300554, 0.0
          %v528 = vsel %vm526, 0.21300554, 0.0
          %v529 = vadd.f32 %v523, %v527
          %v530 = vadd.f32 %v524, %v528
          %vm531 = vcmp.eq.s32.totalorder %v499, 5
          %vm532 = vcmp.eq.s32.totalorder %v500, 5
          %v533 = vsel %vm531, 0.26601171, 0.0
          %v534 = vsel %vm532, 0.26601171, 0.0
          %v535 = vadd.f32 %v529, %v533
          %v536 = vadd.f32 %v530, %v534
          %vm537 = vcmp.eq.s32.totalorder %v499, 6
          %vm538 = vcmp.eq.s32.totalorder %v500, 6
          %v539 = vsel %vm537, 0.21300554, 0.0
          %v540 = vsel %vm538, 0.21300554, 0.0
          %v541 = vadd.f32 %v535, %v539
          %v542 = vadd.f32 %v536, %v540
          %vm543 = vcmp.eq.s32.totalorder %v499, 7
          %vm544 = vcmp.eq.s32.totalorder %v500, 7
          %v545 = vsel %vm543, 0.10936069, 0.0
          %v546 = vsel %vm544, 0.10936069, 0.0
          %v547 = vadd.f32 %v541, %v545
          %v548 = vadd.f32 %v542, %v546
          %vm549 = vcmp.eq.s32.totalorder %v499, 8
          %vm550 = vcmp.eq.s32.totalorder %v500, 8
          %v551 = vsel %vm549, 0.036000773, 0.0
          %v552 = vsel %vm550, 0.036000773, 0.0
          %v553 = vadd.f32 %v547, %v551
          %v554 = vadd.f32 %v548, %v552
          %vm555 = vcmp.eq.s32.totalorder %v499, 9
          %vm556 = vcmp.eq.s32.totalorder %v500, 9
          %v557 = vsel %vm555, 0.007598758, 0.0
          %v558 = vsel %vm556, 0.007598758, 0.0
          %v559 = vadd.f32 %v553, %v557
          %v560 = vadd.f32 %v554, %v558
          %vm561 = vcmp.eq.s32.totalorder %v499, 10
          %vm562 = vcmp.eq.s32.totalorder %v500, 10
          %v563 = vsel %vm561, 0.0010283801, 0.0
          %v564 = vsel %vm562, 0.0010283801, 0.0
          %v565 = vadd.f32 %v559, %v563
          %v566 = vadd.f32 %v560, %v564
          %vm567 = vcmp.lt.s32.totalorder %v394, 6
          %v568 = vsel %vm567, %v565, 0.0
          %v569 = vsel %vm567, %v566, 0.0
          %570 = vst.msk [vmem:[#allocation6] sm:$0xff] %vm421, %v568
          %571 = vst.msk [vmem:[#allocation6 + $0x8] sm:$0xff] %vm421, %v569
          %vm572 = vcmask 0
          %573 = vst.msk [vmem:[#allocation7] sm:$0x1] %vm572, 0.0
          %574 = vst.msk [vmem:[#allocation8] sm:$0x1] %vm572, 0.0
          %575 = vst.msk [vmem:[#allocation9] sm:$0x1] %vm572, 0.0
          %576 = vst.msk [vmem:[#allocation10] sm:$0x1] %vm572, 0.0
        $region56: #{tpu_custom_call.1} parent=35 // pred_fallthru
          _
        %v577 = vld [vmem:[#allocation2] sm:$0xff]
        %v578 = vld [vmem:[#allocation2 + $0x8] sm:$0xff]
        %v579 = vld [vmem:[#allocation3] sm:$0xff]
        %v580 = vld [vmem:[#allocation4] sm:$0xff]
        %v581 = vld [vmem:[#allocation5] sm:$0xff]
        %v582 = vld [vmem:[#allocation5 + $0x8] sm:$0xff]
        %v583 = vld [vmem:[#allocation6] sm:$0xff]
        %v584 = vld [vmem:[#allocation6 + $0x8] sm:$0xff]
        %v585 = vld [vmem:[%s306] sm:$0xff]
        %v586 = vld [vmem:[%s306 + $0x8] sm:$0xff]
        %v587 = vld [vmem:[%s315] sm:$0xff]
        %v588 = vld [vmem:[%s315 + $0x8] sm:$0xff]
        %v589 = vld [vmem:[%s324] sm:$0xff]
        %v590 = vld [vmem:[%s324 + $0x8] sm:$0xff]
        %v591 = vmax.f32 %v585, %v587
        %v592 = vmax.f32 %v586, %v588
        %s593 = scalar_lea.vmem %s306, 48 [#allocation11]
        %v594 = vld [vmem:[%s593] sm:$0xff]
        %v595 = vld [vmem:[%s593 + $0x8] sm:$0xff]
        %s596 = scalar_lea.vmem %s315, 16 [#allocation14]
        %v597 = vld [vmem:[%s596] sm:$0xff]
        %v598 = vld [vmem:[%s596 + $0x8] sm:$0xff]
        %s599 = scalar_lea.vmem %s324, 16 [#allocation16]
        %v600 = vld [vmem:[%s599] sm:$0xff]
        %v601 = vld [vmem:[%s599 + $0x8] sm:$0xff]
        %v602 = vmax.f32 %v594, %v597
        %v603 = vmax.f32 %v595, %v598
        %s604 = scalar_lea.vmem %s306, 96 [#allocation11]
        %v605 = vld [vmem:[%s604] sm:$0xff]
        %v606 = vld [vmem:[%s604 + $0x8] sm:$0xff]
        %s607 = scalar_lea.vmem %s315, 32 [#allocation14]
        %v608 = vld [vmem:[%s607] sm:$0xff]
        %v609 = vld [vmem:[%s607 + $0x8] sm:$0xff]
        %s610 = scalar_lea.vmem %s324, 32 [#allocation16]
        %v611 = vld [vmem:[%s610] sm:$0xff]
        %v612 = vld [vmem:[%s610 + $0x8] sm:$0xff]
        %v613 = vmax.f32 %v605, %v608
        %v614 = vmax.f32 %v606, %v609
        %s615 = scalar_lea.vmem %s306, 144 [#allocation11]
        %v616 = vld [vmem:[%s615] sm:$0xff]
        %v617 = vld [vmem:[%s615 + $0x8] sm:$0xff]
        %s618 = scalar_lea.vmem %s315, 48 [#allocation14]
        %v619 = vld [vmem:[%s618] sm:$0xff]
        %v620 = vld [vmem:[%s618 + $0x8] sm:$0xff]
        %s621 = scalar_lea.vmem %s324, 48 [#allocation16]
        %v622 = vld [vmem:[%s621] sm:$0xff]
        %v623 = vld [vmem:[%s621 + $0x8] sm:$0xff]
        %v624 = vmax.f32 %v616, %v619
        %v625 = vmax.f32 %v617, %v620
        %v626 = vsub.f32 %v591, %v589
        %v627 = vsub.f32 %v592, %v590
        %v628 = vand.u32 2147483647, %v626
        %v629 = vand.u32 2147483647, %v627
        %vm630 = vcmask 130048
        %v631 = vsel %vm630, %v628, 0.0
        %v632 = vsel %vm630, %v629, 0.0
        %v633 = vadd.f32 %v631, %v632
        %634 = vadd.xlane.f32.xlu0 %v633
        %v635 = vpop.xlane.xlu0 %634
        %v636 = vrot.slane %v635, 4
        %v637 = vadd.f32 %v635, %v636
        %v638 = vrot.slane %v637, 2
        %v639 = vadd.f32 %v637, %v638
        %v640 = vrot.slane %v639, 1
        %v641 = vadd.f32 %v639, %v640
        %s642 = vtos %v641
        %v643 = vstv %s642
        %v644 = vadd.f32 %v643, 0.0
        %v645 = vsub.f32 %v602, %v600
        %v646 = vsub.f32 %v603, %v601
        %v647 = vand.u32 2147483647, %v645
        %v648 = vand.u32 2147483647, %v646
        %v649 = vsel %vm630, %v647, 0.0
        %v650 = vsel %vm630, %v648, 0.0
        %v651 = vadd.f32 %v649, %v650
        %652 = vadd.xlane.f32.xlu0 %v651
        %v653 = vpop.xlane.xlu0 %652
        %v654 = vrot.slane %v653, 4
        %v655 = vadd.f32 %v653, %v654
        %v656 = vrot.slane %v655, 2
        %v657 = vadd.f32 %v655, %v656
        %v658 = vrot.slane %v657, 1
        %v659 = vadd.f32 %v657, %v658
        %s660 = vtos %v659
        %v661 = vstv %s660
        %v662 = vadd.f32 %v644, %v661
        %v663 = vsub.f32 %v613, %v611
        %v664 = vsub.f32 %v614, %v612
        %v665 = vand.u32 2147483647, %v663
        %v666 = vand.u32 2147483647, %v664
        %v667 = vsel %vm630, %v665, 0.0
        %v668 = vsel %vm630, %v666, 0.0
        %v669 = vadd.f32 %v667, %v668
        %670 = vadd.xlane.f32.xlu0 %v669
        %v671 = vpop.xlane.xlu0 %670
        %v672 = vrot.slane %v671, 4
        %v673 = vadd.f32 %v671, %v672
        %v674 = vrot.slane %v673, 2
        %v675 = vadd.f32 %v673, %v674
        %v676 = vrot.slane %v675, 1
        %v677 = vadd.f32 %v675, %v676
        %s678 = vtos %v677
        %v679 = vstv %s678
        %v680 = vadd.f32 %v662, %v679
        %v681 = vsub.f32 %v624, %v622
        %v682 = vsub.f32 %v625, %v623
        %v683 = vand.u32 2147483647, %v681
        %v684 = vand.u32 2147483647, %v682
        %v685 = vsel %vm630, %v683, 0.0
        %v686 = vsel %vm630, %v684, 0.0
        %v687 = vadd.f32 %v685, %v686
        %688 = vadd.xlane.f32.xlu0 %v687
        %v689 = vpop.xlane.xlu0 %688
        %v690 = vrot.slane %v689, 4
        %v691 = vadd.f32 %v689, %v690
        %v692 = vrot.slane %v691, 2
        %v693 = vadd.f32 %v691, %v692
        %v694 = vrot.slane %v693, 1
        %v695 = vadd.f32 %v693, %v694
        %s696 = vtos %v695
        %v697 = vstv %s696
        %v698 = vadd.f32 %v680, %v697
        %v699 = vld [vmem:[#allocation7] sm:$0x1]
        %v700 = vadd.f32 %v699, %v698
        %vm701 = vcmask 0
        %702 = vst.msk [vmem:[#allocation7] sm:$0x1] %vm701, %v700
        %v703 = vrsqrt.pop %v585
        %v704 = vmul.f32 %v585, %v703
        %vm705 = vcmp.eq.f32.partialorder %v585, inf
        %v706 = vsel %vm705, %v585, %v704
        %vm707 = vcmp.eq.f32.partialorder %v585, 0.0
        %v708 = vand.u32 %v585, 2147483648
        %v709 = vsel %vm707, %v708, %v706
        %v710 = vrsqrt.pop %v586
        %v711 = vmul.f32 %v586, %v710
        %vm712 = vcmp.eq.f32.partialorder %v586, inf
        %v713 = vsel %vm712, %v586, %v711
        %vm714 = vcmp.eq.f32.partialorder %v586, 0.0
        %v715 = vand.u32 %v586, 2147483648
        %v716 = vsel %vm714, %v715, %v713
        %v717 = vmax.f32 %v709, 0.0
        %v718 = vmax.f32 %v716, 0.0
        %v719 = vmin.f32 %v717, 1.0
        %v720 = vmin.f32 %v718, 1.0
        %s721 = scalar_lea.vmem %s306, 16 [#allocation11]
        %v722 = vld [vmem:[%s721] sm:$0xff]
        %v723 = vld [vmem:[%s721 + $0x8] sm:$0xff]
        %v724 = vrsqrt.pop %v722
        %v725 = vmul.f32 %v722, %v724
        %vm726 = vcmp.eq.f32.partialorder %v722, inf
        %v727 = vsel %vm726, %v722, %v725
        %vm728 = vcmp.eq.f32.partialorder %v722, 0.0
        %v729 = vand.u32 %v722, 2147483648
        %v730 = vsel %vm728, %v729, %v727
        %v731 = vrsqrt.pop %v723
        %v732 = vmul.f32 %v723, %v731
        %vm733 = vcmp.eq.f32.partialorder %v723, inf
        %v734 = vsel %vm733, %v723, %v732
        %vm735 = vcmp.eq.f32.partialorder %v723, 0.0
        %v736 = vand.u32 %v723, 2147483648
        %v737 = vsel %vm735, %v736, %v734
        %v738 = vmax.f32 %v730, 0.0
        %v739 = vmax.f32 %v737, 0.0
        %v740 = vmin.f32 %v738, 1.0
        %v741 = vmin.f32 %v739, 1.0
        %s742 = scalar_lea.vmem %s306, 32 [#allocation11]
        %v743 = vld [vmem:[%s742] sm:$0xff]
        %v744 = vld [vmem:[%s742 + $0x8] sm:$0xff]
        %v745 = vrsqrt.pop %v743
        %v746 = vmul.f32 %v743, %v745
        %vm747 = vcmp.eq.f32.partialorder %v743, inf
        %v748 = vsel %vm747, %v743, %v746
        %vm749 = vcmp.eq.f32.partialorder %v743, 0.0
        %v750 = vand.u32 %v743, 2147483648
        %v751 = vsel %vm749, %v750, %v748
        %v752 = vrsqrt.pop %v744
        %v753 = vmul.f32 %v744, %v752
        %vm754 = vcmp.eq.f32.partialorder %v744, inf
        %v755 = vsel %vm754, %v744, %v753
        %vm756 = vcmp.eq.f32.partialorder %v744, 0.0
        %v757 = vand.u32 %v744, 2147483648
        %v758 = vsel %vm756, %v757, %v755
        %v759 = vmax.f32 %v751, 0.0
        %v760 = vmax.f32 %v758, 0.0
        %v761 = vmin.f32 %v759, 1.0
        %v762 = vmin.f32 %v760, 1.0
        %v763 = vmul.f32 %v719, 0.299
        %v764 = vmul.f32 %v720, 0.299
        %v765 = vmul.f32 %v740, 0.587
        %v766 = vmul.f32 %v741, 0.587
        %v767 = vadd.f32 %v763, %v765
        %v768 = vadd.f32 %v764, %v766
        %v769 = vmul.f32 %v761, 0.114
        %v770 = vmul.f32 %v762, 0.114
        %v771 = vadd.f32 %v767, %v769
        %v772 = vadd.f32 %v768, %v770
        %v773 = vsub.f32 %v719, %v771
        %v774 = vsub.f32 %v720, %v772
        %v775 = vmul.f32 %v773, 0.713
        %v776 = vmul.f32 %v774, 0.713
        %v777 = vadd.f32 %v775, 0.5
        %v778 = vadd.f32 %v776, 0.5
        %v779 = vsub.f32 %v761, %v771
        %v780 = vsub.f32 %v762, %v772
        %v781 = vmul.f32 %v779, 0.564
        %v782 = vmul.f32 %v780, 0.564
        %v783 = vadd.f32 %v781, 0.5
        %v784 = vadd.f32 %v782, 0.5
        %v785 = vld [vmem:[%s333] sm:$0xff]
        %v786 = vld [vmem:[%s333 + $0x8] sm:$0xff]
        %s787 = scalar_lea.vmem %s333, 16 [#allocation17]
        %v788 = vld [vmem:[%s787] sm:$0xff]
        %v789 = vld [vmem:[%s787 + $0x8] sm:$0xff]
        %v790 = vsub.f32 %v788, %v783
        %v791 = vsub.f32 %v789, %v784
        %v792 = vand.u32 2147483647, %v790
        %v793 = vand.u32 2147483647, %v791
        %v794 = vsub.f32 %v785, %v777
        %v795 = vsub.f32 %v786, %v778
        %v796 = vand.u32 2147483647, %v794
        %v797 = vand.u32 2147483647, %v795
        %v798 = vadd.f32 %v792, %v796
        %v799 = vadd.f32 %v793, %v797
        %v800 = vsel %vm630, %v798, 0.0
        %v801 = vsel %vm630, %v799, 0.0
        %v802 = vadd.f32 %v800, %v801
        %803 = vadd.xlane.f32.xlu0 %v802
        %v804 = vpop.xlane.xlu0 %803
        %v805 = vrot.slane %v804, 4
        %v806 = vadd.f32 %v804, %v805
        %v807 = vrot.slane %v806, 2
        %v808 = vadd.f32 %v806, %v807
        %v809 = vrot.slane %v808, 1
        %v810 = vadd.f32 %v808, %v809
        %s811 = vtos %v810
        %v812 = vstv %s811
        %v813 = vadd.f32 %v812, 0.0
        %v814 = vrsqrt.pop %v594
        %v815 = vmul.f32 %v594, %v814
        %vm816 = vcmp.eq.f32.partialorder %v594, inf
        %v817 = vsel %vm816, %v594, %v815
        %vm818 = vcmp.eq.f32.partialorder %v594, 0.0
        %v819 = vand.u32 %v594, 2147483648
        %v820 = vsel %vm818, %v819, %v817
        %v821 = vrsqrt.pop %v595
        %v822 = vmul.f32 %v595, %v821
        %vm823 = vcmp.eq.f32.partialorder %v595, inf
        %v824 = vsel %vm823, %v595, %v822
        %vm825 = vcmp.eq.f32.partialorder %v595, 0.0
        %v826 = vand.u32 %v595, 2147483648
        %v827 = vsel %vm825, %v826, %v824
        %v828 = vmax.f32 %v820, 0.0
        %v829 = vmax.f32 %v827, 0.0
        %v830 = vmin.f32 %v828, 1.0
        %v831 = vmin.f32 %v829, 1.0
        %s832 = scalar_lea.vmem %s306, 64 [#allocation11]
        %v833 = vld [vmem:[%s832] sm:$0xff]
        %v834 = vld [vmem:[%s832 + $0x8] sm:$0xff]
        %v835 = vrsqrt.pop %v833
        %v836 = vmul.f32 %v833, %v835
        %vm837 = vcmp.eq.f32.partialorder %v833, inf
        %v838 = vsel %vm837, %v833, %v836
        %vm839 = vcmp.eq.f32.partialorder %v833, 0.0
        %v840 = vand.u32 %v833, 2147483648
        %v841 = vsel %vm839, %v840, %v838
        %v842 = vrsqrt.pop %v834
        %v843 = vmul.f32 %v834, %v842
        %vm844 = vcmp.eq.f32.partialorder %v834, inf
        %v845 = vsel %vm844, %v834, %v843
        %vm846 = vcmp.eq.f32.partialorder %v834, 0.0
        %v847 = vand.u32 %v834, 2147483648
        %v848 = vsel %vm846, %v847, %v845
        %v849 = vmax.f32 %v841, 0.0
        %v850 = vmax.f32 %v848, 0.0
        %v851 = vmin.f32 %v849, 1.0
        %v852 = vmin.f32 %v850, 1.0
        %s853 = scalar_lea.vmem %s306, 80 [#allocation11]
        %v854 = vld [vmem:[%s853] sm:$0xff]
        %v855 = vld [vmem:[%s853 + $0x8] sm:$0xff]
        %v856 = vrsqrt.pop %v854
        %v857 = vmul.f32 %v854, %v856
        %vm858 = vcmp.eq.f32.partialorder %v854, inf
        %v859 = vsel %vm858, %v854, %v857
        %vm860 = vcmp.eq.f32.partialorder %v854, 0.0
        %v861 = vand.u32 %v854, 2147483648
        %v862 = vsel %vm860, %v861, %v859
        %v863 = vrsqrt.pop %v855
        %v864 = vmul.f32 %v855, %v863
        %vm865 = vcmp.eq.f32.partialorder %v855, inf
        %v866 = vsel %vm865, %v855, %v864
        %vm867 = vcmp.eq.f32.partialorder %v855, 0.0
        %v868 = vand.u32 %v855, 2147483648
        %v869 = vsel %vm867, %v868, %v866
        %v870 = vmax.f32 %v862, 0.0
        %v871 = vmax.f32 %v869, 0.0
        %v872 = vmin.f32 %v870, 1.0
        %v873 = vmin.f32 %v871, 1.0
        %v874 = vmul.f32 %v830, 0.299
        %v875 = vmul.f32 %v831, 0.299
        %v876 = vmul.f32 %v851, 0.587
        %v877 = vmul.f32 %v852, 0.587
        %v878 = vadd.f32 %v874, %v876
        %v879 = vadd.f32 %v875, %v877
        %v880 = vmul.f32 %v872, 0.114
        %v881 = vmul.f32 %v873, 0.114
        %v882 = vadd.f32 %v878, %v880
        %v883 = vadd.f32 %v879, %v881
        %v884 = vsub.f32 %v830, %v882
        %v885 = vsub.f32 %v831, %v883
        %v886 = vmul.f32 %v884, 0.713
        %v887 = vmul.f32 %v885, 0.713
        %v888 = vadd.f32 %v886, 0.5
        %v889 = vadd.f32 %v887, 0.5
        %v890 = vsub.f32 %v872, %v882
        %v891 = vsub.f32 %v873, %v883
        %v892 = vmul.f32 %v890, 0.564
        %v893 = vmul.f32 %v891, 0.564
        %v894 = vadd.f32 %v892, 0.5
        %v895 = vadd.f32 %v893, 0.5
        %s896 = scalar_lea.vmem %s333, 32 [#allocation17]
        %v897 = vld [vmem:[%s896] sm:$0xff]
        %v898 = vld [vmem:[%s896 + $0x8] sm:$0xff]
        %s899 = scalar_lea.vmem %s333, 48 [#allocation17]
        %v900 = vld [vmem:[%s899] sm:$0xff]
        %v901 = vld [vmem:[%s899 + $0x8] sm:$0xff]
        %v902 = vsub.f32 %v900, %v894
        %v903 = vsub.f32 %v901, %v895
        %v904 = vand.u32 2147483647, %v902
        %v905 = vand.u32 2147483647, %v903
        %v906 = vsub.f32 %v897, %v888
        %v907 = vsub.f32 %v898, %v889
        %v908 = vand.u32 2147483647, %v906
        %v909 = vand.u32 2147483647, %v907
        %v910 = vadd.f32 %v904, %v908
        %v911 = vadd.f32 %v905, %v909
        %v912 = vsel %vm630, %v910, 0.0
        %v913 = vsel %vm630, %v911, 0.0
        %v914 = vadd.f32 %v912, %v913
        %915 = vadd.xlane.f32.xlu0 %v914
        %v916 = vpop.xlane.xlu0 %915
        %v917 = vrot.slane %v916, 4
        %v918 = vadd.f32 %v916, %v917
        %v919 = vrot.slane %v918, 2
        %v920 = vadd.f32 %v918, %v919
        %v921 = vrot.slane %v920, 1
        %v922 = vadd.f32 %v920, %v921
        %s923 = vtos %v922
        %v924 = vstv %s923
        %v925 = vadd.f32 %v813, %v924
        %v926 = vrsqrt.pop %v605
        %v927 = vmul.f32 %v605, %v926
        %vm928 = vcmp.eq.f32.partialorder %v605, inf
        %v929 = vsel %vm928, %v605, %v927
        %vm930 = vcmp.eq.f32.partialorder %v605, 0.0
        %v931 = vand.u32 %v605, 2147483648
        %v932 = vsel %vm930, %v931, %v929
        %v933 = vrsqrt.pop %v606
        %v934 = vmul.f32 %v606, %v933
        %vm935 = vcmp.eq.f32.partialorder %v606, inf
        %v936 = vsel %vm935, %v606, %v934
        %vm937 = vcmp.eq.f32.partialorder %v606, 0.0
        %v938 = vand.u32 %v606, 2147483648
        %v939 = vsel %vm937, %v938, %v936
        %v940 = vmax.f32 %v932, 0.0
        %v941 = vmax.f32 %v939, 0.0
        %v942 = vmin.f32 %v940, 1.0
        %v943 = vmin.f32 %v941, 1.0
        %s944 = scalar_lea.vmem %s306, 112 [#allocation11]
        %v945 = vld [vmem:[%s944] sm:$0xff]
        %v946 = vld [vmem:[%s944 + $0x8] sm:$0xff]
        %v947 = vrsqrt.pop %v945
        %v948 = vmul.f32 %v945, %v947
        %vm949 = vcmp.eq.f32.partialorder %v945, inf
        %v950 = vsel %vm949, %v945, %v948
        %vm951 = vcmp.eq.f32.partialorder %v945, 0.0
        %v952 = vand.u32 %v945, 2147483648
        %v953 = vsel %vm951, %v952, %v950
        %v954 = vrsqrt.pop %v946
        %v955 = vmul.f32 %v946, %v954
        %vm956 = vcmp.eq.f32.partialorder %v946, inf
        %v957 = vsel %vm956, %v946, %v955
        %vm958 = vcmp.eq.f32.partialorder %v946, 0.0
        %v959 = vand.u32 %v946, 2147483648
        %v960 = vsel %vm958, %v959, %v957
        %v961 = vmax.f32 %v953, 0.0
        %v962 = vmax.f32 %v960, 0.0
        %v963 = vmin.f32 %v961, 1.0
        %v964 = vmin.f32 %v962, 1.0
        %s965 = scalar_lea.vmem %s306, 128 [#allocation11]
        %v966 = vld [vmem:[%s965] sm:$0xff]
        %v967 = vld [vmem:[%s965 + $0x8] sm:$0xff]
        %v968 = vrsqrt.pop %v966
        %v969 = vmul.f32 %v966, %v968
        %vm970 = vcmp.eq.f32.partialorder %v966, inf
        %v971 = vsel %vm970, %v966, %v969
        %vm972 = vcmp.eq.f32.partialorder %v966, 0.0
        %v973 = vand.u32 %v966, 2147483648
        %v974 = vsel %vm972, %v973, %v971
        %v975 = vrsqrt.pop %v967
        %v976 = vmul.f32 %v967, %v975
        %vm977 = vcmp.eq.f32.partialorder %v967, inf
        %v978 = vsel %vm977, %v967, %v976
        %vm979 = vcmp.eq.f32.partialorder %v967, 0.0
        %v980 = vand.u32 %v967, 2147483648
        %v981 = vsel %vm979, %v980, %v978
        %v982 = vmax.f32 %v974, 0.0
        %v983 = vmax.f32 %v981, 0.0
        %v984 = vmin.f32 %v982, 1.0
        %v985 = vmin.f32 %v983, 1.0
        %v986 = vmul.f32 %v942, 0.299
        %v987 = vmul.f32 %v943, 0.299
        %v988 = vmul.f32 %v963, 0.587
        %v989 = vmul.f32 %v964, 0.587
        %v990 = vadd.f32 %v986, %v988
        %v991 = vadd.f32 %v987, %v989
        %v992 = vmul.f32 %v984, 0.114
        %v993 = vmul.f32 %v985, 0.114
        %v994 = vadd.f32 %v990, %v992
        %v995 = vadd.f32 %v991, %v993
        %v996 = vsub.f32 %v942, %v994
        %v997 = vsub.f32 %v943, %v995
        %v998 = vmul.f32 %v996, 0.713
        %v999 = vmul.f32 %v997, 0.713
        %v1000 = vadd.f32 %v998, 0.5
        %v1001 = vadd.f32 %v999, 0.5
        %v1002 = vsub.f32 %v984, %v994
        %v1003 = vsub.f32 %v985, %v995
        %v1004 = vmul.f32 %v1002, 0.564
        %v1005 = vmul.f32 %v1003, 0.564
        %v1006 = vadd.f32 %v1004, 0.5
        %v1007 = vadd.f32 %v1005, 0.5
        %s1008 = scalar_lea.vmem %s333, 64 [#allocation17]
        %v1009 = vld [vmem:[%s1008] sm:$0xff]
        %v1010 = vld [vmem:[%s1008 + $0x8] sm:$0xff]
        %s1011 = scalar_lea.vmem %s333, 80 [#allocation17]
        %v1012 = vld [vmem:[%s1011] sm:$0xff]
        %v1013 = vld [vmem:[%s1011 + $0x8] sm:$0xff]
        %v1014 = vsub.f32 %v1012, %v1006
        %v1015 = vsub.f32 %v1013, %v1007
        %v1016 = vand.u32 2147483647, %v1014
        %v1017 = vand.u32 2147483647, %v1015
        %v1018 = vsub.f32 %v1009, %v1000
        %v1019 = vsub.f32 %v1010, %v1001
        %v1020 = vand.u32 2147483647, %v1018
        %v1021 = vand.u32 2147483647, %v1019
        %v1022 = vadd.f32 %v1016, %v1020
        %v1023 = vadd.f32 %v1017, %v1021
        %v1024 = vsel %vm630, %v1022, 0.0
        %v1025 = vsel %vm630, %v1023, 0.0
        %v1026 = vadd.f32 %v1024, %v1025
        %1027 = vadd.xlane.f32.xlu0 %v1026
        %v1028 = vpop.xlane.xlu0 %1027
        %v1029 = vrot.slane %v1028, 4
        %v1030 = vadd.f32 %v1028, %v1029
        %v1031 = vrot.slane %v1030, 2
        %v1032 = vadd.f32 %v1030, %v1031
        %v1033 = vrot.slane %v1032, 1
        %v1034 = vadd.f32 %v1032, %v1033
        %s1035 = vtos %v1034
        %v1036 = vstv %s1035
        %v1037 = vadd.f32 %v925, %v1036
        %v1038 = vrsqrt.pop %v616
        %v1039 = vmul.f32 %v616, %v1038
        %vm1040 = vcmp.eq.f32.partialorder %v616, inf
        %v1041 = vsel %vm1040, %v616, %v1039
        %vm1042 = vcmp.eq.f32.partialorder %v616, 0.0
        %v1043 = vand.u32 %v616, 2147483648
        %v1044 = vsel %vm1042, %v1043, %v1041
        %v1045 = vrsqrt.pop %v617
        %v1046 = vmul.f32 %v617, %v1045
        %vm1047 = vcmp.eq.f32.partialorder %v617, inf
        %v1048 = vsel %vm1047, %v617, %v1046
        %vm1049 = vcmp.eq.f32.partialorder %v617, 0.0
        %v1050 = vand.u32 %v617, 2147483648
        %v1051 = vsel %vm1049, %v1050, %v1048
        %v1052 = vmax.f32 %v1044, 0.0
        %v1053 = vmax.f32 %v1051, 0.0
        %v1054 = vmin.f32 %v1052, 1.0
        %v1055 = vmin.f32 %v1053, 1.0
        %s1056 = scalar_lea.vmem %s306, 160 [#allocation11]
        %v1057 = vld [vmem:[%s1056] sm:$0xff]
        %v1058 = vld [vmem:[%s1056 + $0x8] sm:$0xff]
        %v1059 = vrsqrt.pop %v1057
        %v1060 = vmul.f32 %v1057, %v1059
        %vm1061 = vcmp.eq.f32.partialorder %v1057, inf
        %v1062 = vsel %vm1061, %v1057, %v1060
        %vm1063 = vcmp.eq.f32.partialorder %v1057, 0.0
        %v1064 = vand.u32 %v1057, 2147483648
        %v1065 = vsel %vm1063, %v1064, %v1062
        %v1066 = vrsqrt.pop %v1058
        %v1067 = vmul.f32 %v1058, %v1066
        %vm1068 = vcmp.eq.f32.partialorder %v1058, inf
        %v1069 = vsel %vm1068, %v1058, %v1067
        %vm1070 = vcmp.eq.f32.partialorder %v1058, 0.0
        %v1071 = vand.u32 %v1058, 2147483648
        %v1072 = vsel %vm1070, %v1071, %v1069
        %v1073 = vmax.f32 %v1065, 0.0
        %v1074 = vmax.f32 %v1072, 0.0
        %v1075 = vmin.f32 %v1073, 1.0
        %v1076 = vmin.f32 %v1074, 1.0
        %s1077 = scalar_lea.vmem %s306, 176 [#allocation11]
        %v1078 = vld [vmem:[%s1077] sm:$0xff]
        %v1079 = vld [vmem:[%s1077 + $0x8] sm:$0xff]
        %v1080 = vrsqrt.pop %v1078
        %v1081 = vmul.f32 %v1078, %v1080
        %vm1082 = vcmp.eq.f32.partialorder %v1078, inf
        %v1083 = vsel %vm1082, %v1078, %v1081
        %vm1084 = vcmp.eq.f32.partialorder %v1078, 0.0
        %v1085 = vand.u32 %v1078, 2147483648
        %v1086 = vsel %vm1084, %v1085, %v1083
        %v1087 = vrsqrt.pop %v1079
        %v1088 = vmul.f32 %v1079, %v1087
        %vm1089 = vcmp.eq.f32.partialorder %v1079, inf
        %v1090 = vsel %vm1089, %v1079, %v1088
        %vm1091 = vcmp.eq.f32.partialorder %v1079, 0.0
        %v1092 = vand.u32 %v1079, 2147483648
        %v1093 = vsel %vm1091, %v1092, %v1090
        %v1094 = vmax.f32 %v1086, 0.0
        %v1095 = vmax.f32 %v1093, 0.0
        %v1096 = vmin.f32 %v1094, 1.0
        %v1097 = vmin.f32 %v1095, 1.0
        %v1098 = vmul.f32 %v1054, 0.299
        %v1099 = vmul.f32 %v1055, 0.299
        %v1100 = vmul.f32 %v1075, 0.587
        %v1101 = vmul.f32 %v1076, 0.587
        %v1102 = vadd.f32 %v1098, %v1100
        %v1103 = vadd.f32 %v1099, %v1101
        %v1104 = vmul.f32 %v1096, 0.114
        %v1105 = vmul.f32 %v1097, 0.114
        %v1106 = vadd.f32 %v1102, %v1104
        %v1107 = vadd.f32 %v1103, %v1105
        %v1108 = vsub.f32 %v1054, %v1106
        %v1109 = vsub.f32 %v1055, %v1107
        %v1110 = vmul.f32 %v1108, 0.713
        %v1111 = vmul.f32 %v1109, 0.713
        %v1112 = vadd.f32 %v1110, 0.5
        %v1113 = vadd.f32 %v1111, 0.5
        %v1114 = vsub.f32 %v1096, %v1106
        %v1115 = vsub.f32 %v1097, %v1107
        %v1116 = vmul.f32 %v1114, 0.564
        %v1117 = vmul.f32 %v1115, 0.564
        %v1118 = vadd.f32 %v1116, 0.5
        %v1119 = vadd.f32 %v1117, 0.5
        %s1120 = scalar_lea.vmem %s333, 96 [#allocation17]
        %v1121 = vld [vmem:[%s1120] sm:$0xff]
        %v1122 = vld [vmem:[%s1120 + $0x8] sm:$0xff]
        %s1123 = scalar_lea.vmem %s333, 112 [#allocation17]
        %v1124 = vld [vmem:[%s1123] sm:$0xff]
        %v1125 = vld [vmem:[%s1123 + $0x8] sm:$0xff]
        %v1126 = vsub.f32 %v1124, %v1118
        %v1127 = vsub.f32 %v1125, %v1119
        %v1128 = vand.u32 2147483647, %v1126
        %v1129 = vand.u32 2147483647, %v1127
        %v1130 = vsub.f32 %v1121, %v1112
        %v1131 = vsub.f32 %v1122, %v1113
        %v1132 = vand.u32 2147483647, %v1130
        %v1133 = vand.u32 2147483647, %v1131
        %v1134 = vadd.f32 %v1128, %v1132
        %v1135 = vadd.f32 %v1129, %v1133
        %v1136 = vsel %vm630, %v1134, 0.0
        %v1137 = vsel %vm630, %v1135, 0.0
        %v1138 = vadd.f32 %v1136, %v1137
        %1139 = vadd.xlane.f32.xlu0 %v1138
        %v1140 = vpop.xlane.xlu0 %1139
        %v1141 = vrot.slane %v1140, 4
        %v1142 = vadd.f32 %v1140, %v1141
        %v1143 = vrot.slane %v1142, 2
        %v1144 = vadd.f32 %v1142, %v1143
        %v1145 = vrot.slane %v1144, 1
        %v1146 = vadd.f32 %v1144, %v1145
        %s1147 = vtos %v1146
        %v1148 = vstv %s1147
        %v1149 = vadd.f32 %v1037, %v1148
        %v1150 = vld [vmem:[#allocation9] sm:$0x1]
        %v1151 = vadd.f32 %v1150, %v1149
        %1152 = vst.msk [vmem:[#allocation9] sm:$0x1] %vm701, %v1151
        %v1153 = vpack.c.bf16 %v586, %v585
        %v1155 = vsel %vm630, %v577, 0
        %v1158 = vsel %vm630, %v578, 0
        %1160 = vmatprep.subr.bf16.mxu0 0
        %1161 = vmatpush1.bf16.msra.mxu0 %v1153
        %1162 = vmatprep.subr.bf16.mxu0 0
        %1163 = vmatpush1.bf16.msra.mxu0 0
        %1164 = vmatprep.subr.bf16.mxu0 0
        %1165 = vmatpush1.bf16.msra.mxu0 0
        %1166 = vmatprep.subr.bf16.mxu0 0
        %1167 = vmatpush1.bf16.msra.mxu0 0
        %1168 = vmatprep.subr.bf16.mxu0 0
        %1169 = vmatpush1.bf16.msra.mxu0 0
        %1170 = vmatprep.subr.bf16.mxu0 0
        %1171 = vmatpush1.bf16.msra.mxu0 0
        %1172 = vmatprep.subr.bf16.mxu0 0
        %1173 = vmatpush1.bf16.msra.mxu0 0
        %1174 = vmatprep.subr.bf16.mxu0 0
        %1175 = vmatpush1.bf16.msra.mxu0 0
        %1176 = vmatprep.subr.bf16.mxu0 0
        %1177 = vmatpush1.bf16.msra.mxu0 0
        %1178 = vmatprep.subr.bf16.mxu0 0
        %1179 = vmatpush1.bf16.msra.mxu0 0
        %1180 = vmatprep.subr.bf16.mxu0 0
        %1181 = vmatpush1.bf16.msra.mxu0 0
        %1182 = vmatprep.subr.bf16.mxu0 0
        %1183 = vmatpush1.bf16.msra.mxu0 0
        %1184 = vmatprep.subr.bf16.mxu0 0
        %1185 = vmatpush1.bf16.msra.mxu0 0
        %1186 = vmatprep.subr.bf16.mxu0 0
        %1187 = vmatpush1.bf16.msra.mxu0 0
        %1188 = vmatprep.subr.bf16.mxu0 0
        %1189 = vmatpush1.bf16.msra.mxu0 0
        %1190 = vmatprep.subr.bf16.mxu0 0
        %1191 = vmatpush1.bf16.msra.mxu0 0
        %1192 = vmatprep.mubr.bf16.mxu0 0
        %1193 = vmatmul.mubr.bf16.gmra.mrb[0].mxu0 %v1155
        %v1194 = vpop.f32.mrb[0].mxu0
        %v1195 = vadd.f32 0.0, %v1194
        %v1196 = vpop.f32.mrb[0].mxu0
        %v1197 = vpop.f32.mrb[0].mxu0
        %v1198 = vadd.f32 0.0, %v1197
        %v1199 = vpop.f32.mrb[0].mxu0
        %1200 = vmatprep.mubr.bf16.mxu0 0
        %1201 = vmatmul.mubr.bf16.gmra.mrb[0].mxu0 %v1158
        %v1202 = vpop.f32.mrb[0].mxu0
        %v1203 = vadd.f32 0.0, %v1202
        %v1204 = vpop.f32.mrb[0].mxu0
        %v1205 = vpop.f32.mrb[0].mxu0
        %v1206 = vadd.f32 0.0, %v1205
        %v1207 = vpop.f32.mrb[0].mxu0
        %1208 = vdwg.mxu0
        %v1209 = vpack.c.bf16 %v588, %v587
        %1210 = vmatprep.subr.bf16.mxu0 0
        %1211 = vmatpush1.bf16.msra.mxu0 %v1209
        %1212 = vmatprep.subr.bf16.mxu0 0
        %1213 = vmatpush1.bf16.msra.mxu0 0
        %1214 = vmatprep.subr.bf16.mxu0 0
        %1215 = vmatpush1.bf16.msra.mxu0 0
        %1216 = vmatprep.subr.bf16.mxu0 0
        %1217 = vmatpush1.bf16.msra.mxu0 0
        %1218 = vmatprep.subr.bf16.mxu0 0
        %1219 = vmatpush1.bf16.msra.mxu0 0
        %1220 = vmatprep.subr.bf16.mxu0 0
        %1221 = vmatpush1.bf16.msra.mxu0 0
        %1222 = vmatprep.subr.bf16.mxu0 0
        %1223 = vmatpush1.bf16.msra.mxu0 0
        %1224 = vmatprep.subr.bf16.mxu0 0
        %1225 = vmatpush1.bf16.msra.mxu0 0
        %1226 = vmatprep.subr.bf16.mxu0 0
        %1227 = vmatpush1.bf16.msra.mxu0 0
        %1228 = vmatprep.subr.bf16.mxu0 0
        %1229 = vmatpush1.bf16.msra.mxu0 0
        %1230 = vmatprep.subr.bf16.mxu0 0
        %1231 = vmatpush1.bf16.msra.mxu0 0
        %1232 = vmatprep.subr.bf16.mxu0 0
        %1233 = vmatpush1.bf16.msra.mxu0 0
        %1234 = vmatprep.subr.bf16.mxu0 0
        %1235 = vmatpush1.bf16.msra.mxu0 0
        %1236 = vmatprep.subr.bf16.mxu0 0
        %1237 = vmatpush1.bf16.msra.mxu0 0
        %1238 = vmatprep.subr.bf16.mxu0 0
        %1239 = vmatpush1.bf16.msra.mxu0 0
        %1240 = vmatprep.subr.bf16.mxu0 0
        %1241 = vmatpush1.bf16.msra.mxu0 0
        %1242 = vmatprep.mubr.bf16.mxu0 0
        %1243 = vmatmul.mubr.bf16.gmra.mrb[0].mxu0 %v1155
        %v1244 = vpop.f32.mrb[0].mxu0
        %v1245 = vadd.f32 0.0, %v1244
        %v1246 = vpop.f32.mrb[0].mxu0
        %v1247 = vpop.f32.mrb[0].mxu0
        %v1248 = vadd.f32 0.0, %v1247
        %v1249 = vpop.f32.mrb[0].mxu0
        %1250 = vmatprep.mubr.bf16.mxu0 0
        %1251 = vmatmul.mubr.bf16.gmra.mrb[0].mxu0 %v1158
        %v1252 = vpop.f32.mrb[0].mxu0
        %v1253 = vadd.f32 0.0, %v1252
        %v1254 = vpop.f32.mrb[0].mxu0
        %v1255 = vpop.f32.mrb[0].mxu0
        %v1256 = vadd.f32 0.0, %v1255
        %v1257 = vpop.f32.mrb[0].mxu0
        %1258 = vdwg.mxu0
        %v1259 = vpack.c.bf16 %v590, %v589
        %1260 = vmatprep.subr.bf16.mxu0 0
        %1261 = vmatpush1.bf16.msra.mxu0 %v1259
        %1262 = vmatprep.subr.bf16.mxu0 0
        %1263 = vmatpush1.bf16.msra.mxu0 0
        %1264 = vmatprep.subr.bf16.mxu0 0
        %1265 = vmatpush1.bf16.msra.mxu0 0
        %1266 = vmatprep.subr.bf16.mxu0 0
        %1267 = vmatpush1.bf16.msra.mxu0 0
        %1268 = vmatprep.subr.bf16.mxu0 0
        %1269 = vmatpush1.bf16.msra.mxu0 0
        %1270 = vmatprep.subr.bf16.mxu0 0
        %1271 = vmatpush1.bf16.msra.mxu0 0
        %1272 = vmatprep.subr.bf16.mxu0 0
        %1273 = vmatpush1.bf16.msra.mxu0 0
        %1274 = vmatprep.subr.bf16.mxu0 0
        %1275 = vmatpush1.bf16.msra.mxu0 0
        %1276 = vmatprep.subr.bf16.mxu0 0
        %1277 = vmatpush1.bf16.msra.mxu0 0
        %1278 = vmatprep.subr.bf16.mxu0 0
        %1279 = vmatpush1.bf16.msra.mxu0 0
        %1280 = vmatprep.subr.bf16.mxu0 0
        %1281 = vmatpush1.bf16.msra.mxu0 0
        %1282 = vmatprep.subr.bf16.mxu0 0
        %1283 = vmatpush1.bf16.msra.mxu0 0
        %1284 = vmatprep.subr.bf16.mxu0 0
        %1285 = vmatpush1.bf16.msra.mxu0 0
        %1286 = vmatprep.subr.bf16.mxu0 0
        %1287 = vmatpush1.bf16.msra.mxu0 0
        %1288 = vmatprep.subr.bf16.mxu0 0
        %1289 = vmatpush1.bf16.msra.mxu0 0
        %1290 = vmatprep.subr.bf16.mxu0 0
        %1291 = vmatpush1.bf16.msra.mxu0 0
        %1292 = vmatprep.mubr.bf16.mxu0 0
        %1293 = vmatmul.mubr.bf16.gmra.mrb[0].mxu0 %v1155
        %v1294 = vpop.f32.mrb[0].mxu0
        %v1295 = vadd.f32 0.0, %v1294
        %v1296 = vpop.f32.mrb[0].mxu0
        %v1297 = vpop.f32.mrb[0].mxu0
        %v1298 = vadd.f32 0.0, %v1297
        %v1299 = vpop.f32.mrb[0].mxu0
        %1300 = vmatprep.mubr.bf16.mxu0 0
        %1301 = vmatmul.mubr.bf16.gmra.mrb[0].mxu0 %v1158
        %v1302 = vpop.f32.mrb[0].mxu0
        %v1303 = vadd.f32 0.0, %v1302
        %v1304 = vpop.f32.mrb[0].mxu0
        %v1305 = vpop.f32.mrb[0].mxu0
        %v1306 = vadd.f32 0.0, %v1305
        %v1307 = vpop.f32.mrb[0].mxu0
        %1308 = vdwg.mxu0
        %v1309 = vpack.c.bf16 %v595, %v594
        %1310 = vmatprep.subr.bf16.mxu0 0
        %1311 = vmatpush1.bf16.msra.mxu0 %v1309
        %1312 = vmatprep.subr.bf16.mxu0 0
        %1313 = vmatpush1.bf16.msra.mxu0 0
        %1314 = vmatprep.subr.bf16.mxu0 0
        %1315 = vmatpush1.bf16.msra.mxu0 0
        %1316 = vmatprep.subr.bf16.mxu0 0
        %1317 = vmatpush1.bf16.msra.mxu0 0
        %1318 = vmatprep.subr.bf16.mxu0 0
        %1319 = vmatpush1.bf16.msra.mxu0 0
        %1320 = vmatprep.subr.bf16.mxu0 0
        %1321 = vmatpush1.bf16.msra.mxu0 0
        %1322 = vmatprep.subr.bf16.mxu0 0
        %1323 = vmatpush1.bf16.msra.mxu0 0
        %1324 = vmatprep.subr.bf16.mxu0 0
        %1325 = vmatpush1.bf16.msra.mxu0 0
        %1326 = vmatprep.subr.bf16.mxu0 0
        %1327 = vmatpush1.bf16.msra.mxu0 0
        %1328 = vmatprep.subr.bf16.mxu0 0
        %1329 = vmatpush1.bf16.msra.mxu0 0
        %1330 = vmatprep.subr.bf16.mxu0 0
        %1331 = vmatpush1.bf16.msra.mxu0 0
        %1332 = vmatprep.subr.bf16.mxu0 0
        %1333 = vmatpush1.bf16.msra.mxu0 0
        %1334 = vmatprep.subr.bf16.mxu0 0
        %1335 = vmatpush1.bf16.msra.mxu0 0
        %1336 = vmatprep.subr.bf16.mxu0 0
        %1337 = vmatpush1.bf16.msra.mxu0 0
        %1338 = vmatprep.subr.bf16.mxu0 0
        %1339 = vmatpush1.bf16.msra.mxu0 0
        %1340 = vmatprep.subr.bf16.mxu0 0
        %1341 = vmatpush1.bf16.msra.mxu0 0
        %1342 = vmatprep.mubr.bf16.mxu0 0
        %1343 = vmatmul.mubr.bf16.gmra.mrb[0].mxu0 %v1155
        %v1344 = vpop.f32.mrb[0].mxu0
        %v1345 = vadd.f32 0.0, %v1344
        %v1346 = vpop.f32.mrb[0].mxu0
        %v1347 = vpop.f32.mrb[0].mxu0
        %v1348 = vadd.f32 0.0, %v1347
        %v1349 = vpop.f32.mrb[0].mxu0
        %1350 = vmatprep.mubr.bf16.mxu0 0
        %1351 = vmatmul.mubr.bf16.gmra.mrb[0].mxu0 %v1158
        %v1352 = vpop.f32.mrb[0].mxu0
        %v1353 = vadd.f32 0.0, %v1352
        %v1354 = vpop.f32.mrb[0].mxu0
        %v1355 = vpop.f32.mrb[0].mxu0
        %v1356 = vadd.f32 0.0, %v1355
        %v1357 = vpop.f32.mrb[0].mxu0
        %1358 = vdwg.mxu0
        %v1359 = vpack.c.bf16 %v598, %v597
        %1360 = vmatprep.subr.bf16.mxu0 0
        %1361 = vmatpush1.bf16.msra.mxu0 %v1359
        %1362 = vmatprep.subr.bf16.mxu0 0
        %1363 = vmatpush1.bf16.msra.mxu0 0
        %1364 = vmatprep.subr.bf16.mxu0 0
        %1365 = vmatpush1.bf16.msra.mxu0 0
        %1366 = vmatprep.subr.bf16.mxu0 0
        %1367 = vmatpush1.bf16.msra.mxu0 0
        %1368 = vmatprep.subr.bf16.mxu0 0
        %1369 = vmatpush1.bf16.msra.mxu0 0
        %1370 = vmatprep.subr.bf16.mxu0 0
        %1371 = vmatpush1.bf16.msra.mxu0 0
        %1372 = vmatprep.subr.bf16.mxu0 0
        %1373 = vmatpush1.bf16.msra.mxu0 0
        %1374 = vmatprep.subr.bf16.mxu0 0
        %1375 = vmatpush1.bf16.msra.mxu0 0
        %1376 = vmatprep.subr.bf16.mxu0 0
        %1377 = vmatpush1.bf16.msra.mxu0 0
        %1378 = vmatprep.subr.bf16.mxu0 0
        %1379 = vmatpush1.bf16.msra.mxu0 0
        %1380 = vmatprep.subr.bf16.mxu0 0
        %1381 = vmatpush1.bf16.msra.mxu0 0
        %1382 = vmatprep.subr.bf16.mxu0 0
        %1383 = vmatpush1.bf16.msra.mxu0 0
        %1384 = vmatprep.subr.bf16.mxu0 0
        %1385 = vmatpush1.bf16.msra.mxu0 0
        %1386 = vmatprep.subr.bf16.mxu0 0
        %1387 = vmatpush1.bf16.msra.mxu0 0
        %1388 = vmatprep.subr.bf16.mxu0 0
        %1389 = vmatpush1.bf16.msra.mxu0 0
        %1390 = vmatprep.subr.bf16.mxu0 0
        %1391 = vmatpush1.bf16.msra.mxu0 0
        %1392 = vmatprep.mubr.bf16.mxu0 0
        %1393 = vmatmul.mubr.bf16.gmra.mrb[0].mxu0 %v1155
        %v1394 = vpop.f32.mrb[0].mxu0
        %v1395 = vadd.f32 0.0, %v1394
        %v1396 = vpop.f32.mrb[0].mxu0
        %v1397 = vpop.f32.mrb[0].mxu0
        %v1398 = vadd.f32 0.0, %v1397
        %v1399 = vpop.f32.mrb[0].mxu0
        %1400 = vmatprep.mubr.bf16.mxu0 0
        %1401 = vmatmul.mubr.bf16.gmra.mrb[0].mxu0 %v1158
        %v1402 = vpop.f32.mrb[0].mxu0
        %v1403 = vadd.f32 0.0, %v1402
        %v1404 = vpop.f32.mrb[0].mxu0
        %v1405 = vpop.f32.mrb[0].mxu0
        %v1406 = vadd.f32 0.0, %v1405
        %v1407 = vpop.f32.mrb[0].mxu0
        %1408 = vdwg.mxu0
        %v1409 = vpack.c.bf16 %v601, %v600
        %1410 = vmatprep.subr.bf16.mxu0 0
        %1411 = vmatpush1.bf16.msra.mxu0 %v1409
        %1412 = vmatprep.subr.bf16.mxu0 0
        %1413 = vmatpush1.bf16.msra.mxu0 0
        %1414 = vmatprep.subr.bf16.mxu0 0
        %1415 = vmatpush1.bf16.msra.mxu0 0
        %1416 = vmatprep.subr.bf16.mxu0 0
        %1417 = vmatpush1.bf16.msra.mxu0 0
        %1418 = vmatprep.subr.bf16.mxu0 0
        %1419 = vmatpush1.bf16.msra.mxu0 0
        %1420 = vmatprep.subr.bf16.mxu0 0
        %1421 = vmatpush1.bf16.msra.mxu0 0
        %1422 = vmatprep.subr.bf16.mxu0 0
        %1423 = vmatpush1.bf16.msra.mxu0 0
        %1424 = vmatprep.subr.bf16.mxu0 0
        %1425 = vmatpush1.bf16.msra.mxu0 0
        %1426 = vmatprep.subr.bf16.mxu0 0
        %1427 = vmatpush1.bf16.msra.mxu0 0
        %1428 = vmatprep.subr.bf16.mxu0 0
        %1429 = vmatpush1.bf16.msra.mxu0 0
        %1430 = vmatprep.subr.bf16.mxu0 0
        %1431 = vmatpush1.bf16.msra.mxu0 0
        %1432 = vmatprep.subr.bf16.mxu0 0
        %1433 = vmatpush1.bf16.msra.mxu0 0
        %1434 = vmatprep.subr.bf16.mxu0 0
        %1435 = vmatpush1.bf16.msra.mxu0 0
        %1436 = vmatprep.subr.bf16.mxu0 0
        %1437 = vmatpush1.bf16.msra.mxu0 0
        %1438 = vmatprep.subr.bf16.mxu0 0
        %1439 = vmatpush1.bf16.msra.mxu0 0
        %1440 = vmatprep.subr.bf16.mxu0 0
        %1441 = vmatpush1.bf16.msra.mxu0 0
        %1442 = vmatprep.mubr.bf16.mxu0 0
        %1443 = vmatmul.mubr.bf16.gmra.mrb[0].mxu0 %v1155
        %v1444 = vpop.f32.mrb[0].mxu0
        %v1445 = vadd.f32 0.0, %v1444
        %v1446 = vpop.f32.mrb[0].mxu0
        %v1447 = vpop.f32.mrb[0].mxu0
        %v1448 = vadd.f32 0.0, %v1447
        %v1449 = vpop.f32.mrb[0].mxu0
        %1450 = vmatprep.mubr.bf16.mxu0 0
        %1451 = vmatmul.mubr.bf16.gmra.mrb[0].mxu0 %v1158
        %v1452 = vpop.f32.mrb[0].mxu0
        %v1453 = vadd.f32 0.0, %v1452
        %v1454 = vpop.f32.mrb[0].mxu0
        %v1455 = vpop.f32.mrb[0].mxu0
        %v1456 = vadd.f32 0.0, %v1455
        %v1457 = vpop.f32.mrb[0].mxu0
        %1458 = vdwg.mxu0
        %v1459 = vpack.c.bf16 %v606, %v605
        %1460 = vmatprep.subr.bf16.mxu0 0
        %1461 = vmatpush1.bf16.msra.mxu0 %v1459
        %1462 = vmatprep.subr.bf16.mxu0 0
        %1463 = vmatpush1.bf16.msra.mxu0 0
        %1464 = vmatprep.subr.bf16.mxu0 0
        %1465 = vmatpush1.bf16.msra.mxu0 0
        %1466 = vmatprep.subr.bf16.mxu0 0
        %1467 = vmatpush1.bf16.msra.mxu0 0
        %1468 = vmatprep.subr.bf16.mxu0 0
        %1469 = vmatpush1.bf16.msra.mxu0 0
        %1470 = vmatprep.subr.bf16.mxu0 0
        %1471 = vmatpush1.bf16.msra.mxu0 0
        %1472 = vmatprep.subr.bf16.mxu0 0
        %1473 = vmatpush1.bf16.msra.mxu0 0
        %1474 = vmatprep.subr.bf16.mxu0 0
        %1475 = vmatpush1.bf16.msra.mxu0 0
        %1476 = vmatprep.subr.bf16.mxu0 0
        %1477 = vmatpush1.bf16.msra.mxu0 0
        %1478 = vmatprep.subr.bf16.mxu0 0
        %1479 = vmatpush1.bf16.msra.mxu0 0
        %1480 = vmatprep.subr.bf16.mxu0 0
        %1481 = vmatpush1.bf16.msra.mxu0 0
        %1482 = vmatprep.subr.bf16.mxu0 0
        %1483 = vmatpush1.bf16.msra.mxu0 0
        %1484 = vmatprep.subr.bf16.mxu0 0
        %1485 = vmatpush1.bf16.msra.mxu0 0
        %1486 = vmatprep.subr.bf16.mxu0 0
        %1487 = vmatpush1.bf16.msra.mxu0 0
        %1488 = vmatprep.subr.bf16.mxu0 0
        %1489 = vmatpush1.bf16.msra.mxu0 0
        %1490 = vmatprep.subr.bf16.mxu0 0
        %1491 = vmatpush1.bf16.msra.mxu0 0
        %1492 = vmatprep.mubr.bf16.mxu0 0
        %1493 = vmatmul.mubr.bf16.gmra.mrb[0].mxu0 %v1155
        %v1494 = vpop.f32.mrb[0].mxu0
        %v1495 = vadd.f32 0.0, %v1494
        %v1496 = vpop.f32.mrb[0].mxu0
        %v1497 = vpop.f32.mrb[0].mxu0
        %v1498 = vadd.f32 0.0, %v1497
        %v1499 = vpop.f32.mrb[0].mxu0
        %1500 = vmatprep.mubr.bf16.mxu0 0
        %1501 = vmatmul.mubr.bf16.gmra.mrb[0].mxu0 %v1158
        %v1502 = vpop.f32.mrb[0].mxu0
        %v1503 = vadd.f32 0.0, %v1502
        %v1504 = vpop.f32.mrb[0].mxu0
        %v1505 = vpop.f32.mrb[0].mxu0
        %v1506 = vadd.f32 0.0, %v1505
        %v1507 = vpop.f32.mrb[0].mxu0
        %1508 = vdwg.mxu0
        %v1509 = vpack.c.bf16 %v609, %v608
        %1510 = vmatprep.subr.bf16.mxu0 0
        %1511 = vmatpush1.bf16.msra.mxu0 %v1509
        %1512 = vmatprep.subr.bf16.mxu0 0
        %1513 = vmatpush1.bf16.msra.mxu0 0
        %1514 = vmatprep.subr.bf16.mxu0 0
        %1515 = vmatpush1.bf16.msra.mxu0 0
        %1516 = vmatprep.subr.bf16.mxu0 0
        %1517 = vmatpush1.bf16.msra.mxu0 0
        %1518 = vmatprep.subr.bf16.mxu0 0
        %1519 = vmatpush1.bf16.msra.mxu0 0
        %1520 = vmatprep.subr.bf16.mxu0 0
        %1521 = vmatpush1.bf16.msra.mxu0 0
        %1522 = vmatprep.subr.bf16.mxu0 0
        %1523 = vmatpush1.bf16.msra.mxu0 0
        %1524 = vmatprep.subr.bf16.mxu0 0
        %1525 = vmatpush1.bf16.msra.mxu0 0
        %1526 = vmatprep.subr.bf16.mxu0 0
        %1527 = vmatpush1.bf16.msra.mxu0 0
        %1528 = vmatprep.subr.bf16.mxu0 0
        %1529 = vmatpush1.bf16.msra.mxu0 0
        %1530 = vmatprep.subr.bf16.mxu0 0
        %1531 = vmatpush1.bf16.msra.mxu0 0
        %1532 = vmatprep.subr.bf16.mxu0 0
        %1533 = vmatpush1.bf16.msra.mxu0 0
        %1534 = vmatprep.subr.bf16.mxu0 0
        %1535 = vmatpush1.bf16.msra.mxu0 0
        %1536 = vmatprep.subr.bf16.mxu0 0
        %1537 = vmatpush1.bf16.msra.mxu0 0
        %1538 = vmatprep.subr.bf16.mxu0 0
        %1539 = vmatpush1.bf16.msra.mxu0 0
        %1540 = vmatprep.subr.bf16.mxu0 0
        %1541 = vmatpush1.bf16.msra.mxu0 0
        %1542 = vmatprep.mubr.bf16.mxu0 0
        %1543 = vmatmul.mubr.bf16.gmra.mrb[0].mxu0 %v1155
        %v1544 = vpop.f32.mrb[0].mxu0
        %v1545 = vadd.f32 0.0, %v1544
        %v1546 = vpop.f32.mrb[0].mxu0
        %v1547 = vpop.f32.mrb[0].mxu0
        %v1548 = vadd.f32 0.0, %v1547
        %v1549 = vpop.f32.mrb[0].mxu0
        %1550 = vmatprep.mubr.bf16.mxu0 0
        %1551 = vmatmul.mubr.bf16.gmra.mrb[0].mxu0 %v1158
        %v1552 = vpop.f32.mrb[0].mxu0
        %v1553 = vadd.f32 0.0, %v1552
        %v1554 = vpop.f32.mrb[0].mxu0
        %v1555 = vpop.f32.mrb[0].mxu0
        %v1556 = vadd.f32 0.0, %v1555
        %v1557 = vpop.f32.mrb[0].mxu0
        %1558 = vdwg.mxu0
        %v1559 = vpack.c.bf16 %v612, %v611
        %1560 = vmatprep.subr.bf16.mxu0 0
        %1561 = vmatpush1.bf16.msra.mxu0 %v1559
        %1562 = vmatprep.subr.bf16.mxu0 0
        %1563 = vmatpush1.bf16.msra.mxu0 0
        %1564 = vmatprep.subr.bf16.mxu0 0
        %1565 = vmatpush1.bf16.msra.mxu0 0
        %1566 = vmatprep.subr.bf16.mxu0 0
        %1567 = vmatpush1.bf16.msra.mxu0 0
        %1568 = vmatprep.subr.bf16.mxu0 0
        %1569 = vmatpush1.bf16.msra.mxu0 0
        %1570 = vmatprep.subr.bf16.mxu0 0
        %1571 = vmatpush1.bf16.msra.mxu0 0
        %1572 = vmatprep.subr.bf16.mxu0 0
        %1573 = vmatpush1.bf16.msra.mxu0 0
        %1574 = vmatprep.subr.bf16.mxu0 0
        %1575 = vmatpush1.bf16.msra.mxu0 0
        %1576 = vmatprep.subr.bf16.mxu0 0
        %1577 = vmatpush1.bf16.msra.mxu0 0
        %1578 = vmatprep.subr.bf16.mxu0 0
        %1579 = vmatpush1.bf16.msra.mxu0 0
        %1580 = vmatprep.subr.bf16.mxu0 0
        %1581 = vmatpush1.bf16.msra.mxu0 0
        %1582 = vmatprep.subr.bf16.mxu0 0
        %1583 = vmatpush1.bf16.msra.mxu0 0
        %1584 = vmatprep.subr.bf16.mxu0 0
        %1585 = vmatpush1.bf16.msra.mxu0 0
        %1586 = vmatprep.subr.bf16.mxu0 0
        %1587 = vmatpush1.bf16.msra.mxu0 0
        %1588 = vmatprep.subr.bf16.mxu0 0
        %1589 = vmatpush1.bf16.msra.mxu0 0
        %1590 = vmatprep.subr.bf16.mxu0 0
        %1591 = vmatpush1.bf16.msra.mxu0 0
        %1592 = vmatprep.mubr.bf16.mxu0 0
        %1593 = vmatmul.mubr.bf16.gmra.mrb[0].mxu0 %v1155
        %v1594 = vpop.f32.mrb[0].mxu0
        %v1595 = vadd.f32 0.0, %v1594
        %v1596 = vpop.f32.mrb[0].mxu0
        %v1597 = vpop.f32.mrb[0].mxu0
        %v1598 = vadd.f32 0.0, %v1597
        %v1599 = vpop.f32.mrb[0].mxu0
        %1600 = vmatprep.mubr.bf16.mxu0 0
        %1601 = vmatmul.mubr.bf16.gmra.mrb[0].mxu0 %v1158
        %v1602 = vpop.f32.mrb[0].mxu0
        %v1603 = vadd.f32 0.0, %v1602
        %v1604 = vpop.f32.mrb[0].mxu0
        %v1605 = vpop.f32.mrb[0].mxu0
        %v1606 = vadd.f32 0.0, %v1605
        %v1607 = vpop.f32.mrb[0].mxu0
        %1608 = vdwg.mxu0
        %v1609 = vpack.c.bf16 %v617, %v616
        %1610 = vmatprep.subr.bf16.mxu0 0
        %1611 = vmatpush1.bf16.msra.mxu0 %v1609
        %1612 = vmatprep.subr.bf16.mxu0 0
        %1613 = vmatpush1.bf16.msra.mxu0 0
        %1614 = vmatprep.subr.bf16.mxu0 0
        %1615 = vmatpush1.bf16.msra.mxu0 0
        %1616 = vmatprep.subr.bf16.mxu0 0
        %1617 = vmatpush1.bf16.msra.mxu0 0
        %1618 = vmatprep.subr.bf16.mxu0 0
        %1619 = vmatpush1.bf16.msra.mxu0 0
        %1620 = vmatprep.subr.bf16.mxu0 0
        %1621 = vmatpush1.bf16.msra.mxu0 0
        %1622 = vmatprep.subr.bf16.mxu0 0
        %1623 = vmatpush1.bf16.msra.mxu0 0
        %1624 = vmatprep.subr.bf16.mxu0 0
        %1625 = vmatpush1.bf16.msra.mxu0 0
        %1626 = vmatprep.subr.bf16.mxu0 0
        %1627 = vmatpush1.bf16.msra.mxu0 0
        %1628 = vmatprep.subr.bf16.mxu0 0
        %1629 = vmatpush1.bf16.msra.mxu0 0
        %1630 = vmatprep.subr.bf16.mxu0 0
        %1631 = vmatpush1.bf16.msra.mxu0 0
        %1632 = vmatprep.subr.bf16.mxu0 0
        %1633 = vmatpush1.bf16.msra.mxu0 0
        %1634 = vmatprep.subr.bf16.mxu0 0
        %1635 = vmatpush1.bf16.msra.mxu0 0
        %1636 = vmatprep.subr.bf16.mxu0 0
        %1637 = vmatpush1.bf16.msra.mxu0 0
        %1638 = vmatprep.subr.bf16.mxu0 0
        %1639 = vmatpush1.bf16.msra.mxu0 0
        %1640 = vmatprep.subr.bf16.mxu0 0
        %1641 = vmatpush1.bf16.msra.mxu0 0
        %1642 = vmatprep.mubr.bf16.mxu0 0
        %1643 = vmatmul.mubr.bf16.gmra.mrb[0].mxu0 %v1155
        %v1644 = vpop.f32.mrb[0].mxu0
        %v1645 = vadd.f32 0.0, %v1644
        %v1646 = vpop.f32.mrb[0].mxu0
        %v1647 = vpop.f32.mrb[0].mxu0
        %v1648 = vadd.f32 0.0, %v1647
        %v1649 = vpop.f32.mrb[0].mxu0
        %1650 = vmatprep.mubr.bf16.mxu0 0
        %1651 = vmatmul.mubr.bf16.gmra.mrb[0].mxu0 %v1158
        %v1652 = vpop.f32.mrb[0].mxu0
        %v1653 = vadd.f32 0.0, %v1652
        %v1654 = vpop.f32.mrb[0].mxu0
        %v1655 = vpop.f32.mrb[0].mxu0
        %v1656 = vadd.f32 0.0, %v1655
        %v1657 = vpop.f32.mrb[0].mxu0
        %1658 = vdwg.mxu0
        %v1659 = vpack.c.bf16 %v620, %v619
        %1660 = vmatprep.subr.bf16.mxu0 0
        %1661 = vmatpush1.bf16.msra.mxu0 %v1659
        %1662 = vmatprep.subr.bf16.mxu0 0
        %1663 = vmatpush1.bf16.msra.mxu0 0
        %1664 = vmatprep.subr.bf16.mxu0 0
        %1665 = vmatpush1.bf16.msra.mxu0 0
        %1666 = vmatprep.subr.bf16.mxu0 0
        %1667 = vmatpush1.bf16.msra.mxu0 0
        %1668 = vmatprep.subr.bf16.mxu0 0
        %1669 = vmatpush1.bf16.msra.mxu0 0
        %1670 = vmatprep.subr.bf16.mxu0 0
        %1671 = vmatpush1.bf16.msra.mxu0 0
        %1672 = vmatprep.subr.bf16.mxu0 0
        %1673 = vmatpush1.bf16.msra.mxu0 0
        %1674 = vmatprep.subr.bf16.mxu0 0
        %1675 = vmatpush1.bf16.msra.mxu0 0
        %1676 = vmatprep.subr.bf16.mxu0 0
        %1677 = vmatpush1.bf16.msra.mxu0 0
        %1678 = vmatprep.subr.bf16.mxu0 0
        %1679 = vmatpush1.bf16.msra.mxu0 0
        %1680 = vmatprep.subr.bf16.mxu0 0
        %1681 = vmatpush1.bf16.msra.mxu0 0
        %1682 = vmatprep.subr.bf16.mxu0 0
        %1683 = vmatpush1.bf16.msra.mxu0 0
        %1684 = vmatprep.subr.bf16.mxu0 0
        %1685 = vmatpush1.bf16.msra.mxu0 0
        %1686 = vmatprep.subr.bf16.mxu0 0
        %1687 = vmatpush1.bf16.msra.mxu0 0
        %1688 = vmatprep.subr.bf16.mxu0 0
        %1689 = vmatpush1.bf16.msra.mxu0 0
        %1690 = vmatprep.subr.bf16.mxu0 0
        %1691 = vmatpush1.bf16.msra.mxu0 0
        %1692 = vmatprep.mubr.bf16.mxu0 0
        %1693 = vmatmul.mubr.bf16.gmra.mrb[0].mxu0 %v1155
        %v1694 = vpop.f32.mrb[0].mxu0
        %v1695 = vadd.f32 0.0, %v1694
        %v1696 = vpop.f32.mrb[0].mxu0
        %v1697 = vpop.f32.mrb[0].mxu0
        %v1698 = vadd.f32 0.0, %v1697
        %v1699 = vpop.f32.mrb[0].mxu0
        %1700 = vmatprep.mubr.bf16.mxu0 0
        %1701 = vmatmul.mubr.bf16.gmra.mrb[0].mxu0 %v1158
        %v1702 = vpop.f32.mrb[0].mxu0
        %v1703 = vadd.f32 0.0, %v1702
        %v1704 = vpop.f32.mrb[0].mxu0
        %v1705 = vpop.f32.mrb[0].mxu0
        %v1706 = vadd.f32 0.0, %v1705
        %v1707 = vpop.f32.mrb[0].mxu0
        %1708 = vdwg.mxu0
        %v1709 = vpack.c.bf16 %v623, %v622
        %1710 = vmatprep.subr.bf16.mxu0 0
        %1711 = vmatpush1.bf16.msra.mxu0 %v1709
        %1712 = vmatprep.subr.bf16.mxu0 0
        %1713 = vmatpush1.bf16.msra.mxu0 0
        %1714 = vmatprep.subr.bf16.mxu0 0
        %1715 = vmatpush1.bf16.msra.mxu0 0
        %1716 = vmatprep.subr.bf16.mxu0 0
        %1717 = vmatpush1.bf16.msra.mxu0 0
        %1718 = vmatprep.subr.bf16.mxu0 0
        %1719 = vmatpush1.bf16.msra.mxu0 0
        %1720 = vmatprep.subr.bf16.mxu0 0
        %1721 = vmatpush1.bf16.msra.mxu0 0
        %1722 = vmatprep.subr.bf16.mxu0 0
        %1723 = vmatpush1.bf16.msra.mxu0 0
        %1724 = vmatprep.subr.bf16.mxu0 0
        %1725 = vmatpush1.bf16.msra.mxu0 0
        %1726 = vmatprep.subr.bf16.mxu0 0
        %1727 = vmatpush1.bf16.msra.mxu0 0
        %1728 = vmatprep.subr.bf16.mxu0 0
        %1729 = vmatpush1.bf16.msra.mxu0 0
        %1730 = vmatprep.subr.bf16.mxu0 0
        %1731 = vmatpush1.bf16.msra.mxu0 0
        %1732 = vmatprep.subr.bf16.mxu0 0
        %1733 = vmatpush1.bf16.msra.mxu0 0
        %1734 = vmatprep.subr.bf16.mxu0 0
        %1735 = vmatpush1.bf16.msra.mxu0 0
        %1736 = vmatprep.subr.bf16.mxu0 0
        %1737 = vmatpush1.bf16.msra.mxu0 0
        %1738 = vmatprep.subr.bf16.mxu0 0
        %1739 = vmatpush1.bf16.msra.mxu0 0
        %1740 = vmatprep.subr.bf16.mxu0 0
        %1741 = vmatpush1.bf16.msra.mxu0 0
        %1742 = vmatprep.mubr.bf16.mxu0 0
        %1743 = vmatmul.mubr.bf16.gmra.mrb[0].mxu0 %v1155
        %v1744 = vpop.f32.mrb[0].mxu0
        %v1745 = vadd.f32 0.0, %v1744
        %v1746 = vpop.f32.mrb[0].mxu0
        %v1747 = vpop.f32.mrb[0].mxu0
        %v1748 = vadd.f32 0.0, %v1747
        %v1749 = vpop.f32.mrb[0].mxu0
        %1750 = vmatprep.mubr.bf16.mxu0 0
        %1751 = vmatmul.mubr.bf16.gmra.mrb[0].mxu0 %v1158
        %v1752 = vpop.f32.mrb[0].mxu0
        %v1753 = vadd.f32 0.0, %v1752
        %v1754 = vpop.f32.mrb[0].mxu0
        %v1755 = vpop.f32.mrb[0].mxu0
        %v1756 = vadd.f32 0.0, %v1755
        %v1757 = vpop.f32.mrb[0].mxu0
        %1758 = vdwg.mxu0
        %v1759 = vpack.c.bf16 %v1198, %v1195
        %v1760 = vpack.c.bf16 %v1248, %v1245
        %v1761 = vpack.c.bf16 %v1298, %v1295
        %v1762 = vpack.c.bf16 %v1348, %v1345
        %v1763 = vpack.c.bf16 %v1398, %v1395
        %v1764 = vpack.c.bf16 %v1448, %v1445
        %v1765 = vpack.c.bf16 %v1498, %v1495
        %v1766 = vpack.c.bf16 %v1548, %v1545
        %v1767 = vpack.c.bf16 %v1598, %v1595
        %v1768 = vpack.c.bf16 %v1648, %v1645
        %v1769 = vpack.c.bf16 %v1698, %v1695
        %v1770 = vpack.c.bf16 %v1748, %v1745
        %v1772 = vsel %vm630, %v1759, 0
        %v1775 = vsel %vm630, %v1760, 0
        %v1778 = vsel %vm630, %v1761, 0
        %v1781 = vsel %vm630, %v1762, 0
        %v1784 = vsel %vm630, %v1763, 0
        %v1787 = vsel %vm630, %v1764, 0
        %v1790 = vsel %vm630, %v1765, 0
        %v1793 = vsel %vm630, %v1766, 0
        %v1796 = vsel %vm630, %v1767, 0
        %v1799 = vsel %vm630, %v1768, 0
        %v1802 = vsel %vm630, %v1769, 0
        %v1805 = vsel %vm630, %v1770, 0
        %1807 = vmatprep.subr.bf16.mxu0 0
        %1808 = vmatpush1.bf16.msra.mxu0 %v579
        %1809 = vmatprep.subr.bf16.mxu0 0
        %1810 = vmatpush1.bf16.msra.mxu0 0
        %1811 = vmatprep.subr.bf16.mxu0 0
        %1812 = vmatpush1.bf16.msra.mxu0 0
        %1813 = vmatprep.subr.bf16.mxu0 0
        %1814 = vmatpush1.bf16.msra.mxu0 0
        %1815 = vmatprep.subr.bf16.mxu0 0
        %1816 = vmatpush1.bf16.msra.mxu0 0
        %1817 = vmatprep.subr.bf16.mxu0 0
        %1818 = vmatpush1.bf16.msra.mxu0 0
        %1819 = vmatprep.subr.bf16.mxu0 0
        %1820 = vmatpush1.bf16.msra.mxu0 0
        %1821 = vmatprep.subr.bf16.mxu0 0
        %1822 = vmatpush1.bf16.msra.mxu0 0
        %1823 = vmatprep.subr.bf16.mxu0 0
        %1824 = vmatpush1.bf16.msra.mxu0 0
        %1825 = vmatprep.subr.bf16.mxu0 0
        %1826 = vmatpush1.bf16.msra.mxu0 0
        %1827 = vmatprep.subr.bf16.mxu0 0
        %1828 = vmatpush1.bf16.msra.mxu0 0
        %1829 = vmatprep.subr.bf16.mxu0 0
        %1830 = vmatpush1.bf16.msra.mxu0 0
        %1831 = vmatprep.subr.bf16.mxu0 0
        %1832 = vmatpush1.bf16.msra.mxu0 0
        %1833 = vmatprep.subr.bf16.mxu0 0
        %1834 = vmatpush1.bf16.msra.mxu0 0
        %1835 = vmatprep.subr.bf16.mxu0 0
        %1836 = vmatpush1.bf16.msra.mxu0 0
        %1837 = vmatprep.subr.bf16.mxu0 0
        %1838 = vmatpush1.bf16.msra.mxu0 0
        %1839 = vmatprep.mubr.bf16.mxu0 0
        %1840 = vmatmul.mubr.bf16.gmra.mrb[0].mxu0 %v1772
        %v1841 = vpop.f32.mrb[0].mxu0
        %v1842 = vadd.f32 0.0, %v1841
        %v1843 = vpop.f32.mrb[0].mxu0
        %v1844 = vpop.f32.mrb[0].mxu0
        %v1845 = vadd.f32 0.0, %v1844
        %v1846 = vpop.f32.mrb[0].mxu0
        %1847 = vmatprep.mubr.bf16.mxu0 0
        %1848 = vmatmul.mubr.bf16.gmra.mrb[0].mxu0 %v1775
        %v1849 = vpop.f32.mrb[0].mxu0
        %v1850 = vadd.f32 0.0, %v1849
        %v1851 = vpop.f32.mrb[0].mxu0
        %v1852 = vpop.f32.mrb[0].mxu0
        %v1853 = vadd.f32 0.0, %v1852
        %v1854 = vpop.f32.mrb[0].mxu0
        %1855 = vmatprep.mubr.bf16.mxu0 0
        %1856 = vmatmul.mubr.bf16.gmra.mrb[0].mxu0 %v1778
        %v1857 = vpop.f32.mrb[0].mxu0
        %v1858 = vadd.f32 0.0, %v1857
        %v1859 = vpop.f32.mrb[0].mxu0
        %v1860 = vpop.f32.mrb[0].mxu0
        %v1861 = vadd.f32 0.0, %v1860
        %v1862 = vpop.f32.mrb[0].mxu0
        %1863 = vmatprep.mubr.bf16.mxu0 0
        %1864 = vmatmul.mubr.bf16.gmra.mrb[0].mxu0 %v1781
        %v1865 = vpop.f32.mrb[0].mxu0
        %v1866 = vadd.f32 0.0, %v1865
        %v1867 = vpop.f32.mrb[0].mxu0
        %v1868 = vpop.f32.mrb[0].mxu0
        %v1869 = vadd.f32 0.0, %v1868
        %v1870 = vpop.f32.mrb[0].mxu0
        %1871 = vmatprep.mubr.bf16.mxu0 0
        %1872 = vmatmul.mubr.bf16.gmra.mrb[0].mxu0 %v1784
        %v1873 = vpop.f32.mrb[0].mxu0
        %v1874 = vadd.f32 0.0, %v1873
        %v1875 = vpop.f32.mrb[0].mxu0
        %v1876 = vpop.f32.mrb[0].mxu0
        %v1877 = vadd.f32 0.0, %v1876
        %v1878 = vpop.f32.mrb[0].mxu0
        %1879 = vmatprep.mubr.bf16.mxu0 0
        %1880 = vmatmul.mubr.bf16.gmra.mrb[0].mxu0 %v1787
        %v1881 = vpop.f32.mrb[0].mxu0
        %v1882 = vadd.f32 0.0, %v1881
        %v1883 = vpop.f32.mrb[0].mxu0
        %v1884 = vpop.f32.mrb[0].mxu0
        %v1885 = vadd.f32 0.0, %v1884
        %v1886 = vpop.f32.mrb[0].mxu0
        %1887 = vmatprep.mubr.bf16.mxu0 0
        %1888 = vmatmul.mubr.bf16.gmra.mrb[0].mxu0 %v1790
        %v1889 = vpop.f32.mrb[0].mxu0
        %v1890 = vadd.f32 0.0, %v1889
        %v1891 = vpop.f32.mrb[0].mxu0
        %v1892 = vpop.f32.mrb[0].mxu0
        %v1893 = vadd.f32 0.0, %v1892
        %v1894 = vpop.f32.mrb[0].mxu0
        %1895 = vmatprep.mubr.bf16.mxu0 0
        %1896 = vmatmul.mubr.bf16.gmra.mrb[0].mxu0 %v1793
        %v1897 = vpop.f32.mrb[0].mxu0
        %v1898 = vadd.f32 0.0, %v1897
        %v1899 = vpop.f32.mrb[0].mxu0
        %v1900 = vpop.f32.mrb[0].mxu0
        %v1901 = vadd.f32 0.0, %v1900
        %v1902 = vpop.f32.mrb[0].mxu0
        %1903 = vmatprep.mubr.bf16.mxu0 0
        %1904 = vmatmul.mubr.bf16.gmra.mrb[0].mxu0 %v1796
        %v1905 = vpop.f32.mrb[0].mxu0
        %v1906 = vadd.f32 0.0, %v1905
        %v1907 = vpop.f32.mrb[0].mxu0
        %v1908 = vpop.f32.mrb[0].mxu0
        %v1909 = vadd.f32 0.0, %v1908
        %v1910 = vpop.f32.mrb[0].mxu0
        %1911 = vmatprep.mubr.bf16.mxu0 0
        %1912 = vmatmul.mubr.bf16.gmra.mrb[0].mxu0 %v1799
        %v1913 = vpop.f32.mrb[0].mxu0
        %v1914 = vadd.f32 0.0, %v1913
        %v1915 = vpop.f32.mrb[0].mxu0
        %v1916 = vpop.f32.mrb[0].mxu0
        %v1917 = vadd.f32 0.0, %v1916
        %v1918 = vpop.f32.mrb[0].mxu0
        %1919 = vmatprep.mubr.bf16.mxu0 0
        %1920 = vmatmul.mubr.bf16.gmra.mrb[0].mxu0 %v1802
        %v1921 = vpop.f32.mrb[0].mxu0
        %v1922 = vadd.f32 0.0, %v1921
        %v1923 = vpop.f32.mrb[0].mxu0
        %v1924 = vpop.f32.mrb[0].mxu0
        %v1925 = vadd.f32 0.0, %v1924
        %v1926 = vpop.f32.mrb[0].mxu0
        %1927 = vmatprep.mubr.bf16.mxu0 0
        %1928 = vmatmul.mubr.bf16.gmra.mrb[0].mxu0 %v1805
        %v1929 = vpop.f32.mrb[0].mxu0
        %v1930 = vadd.f32 0.0, %v1929
        %v1931 = vpop.f32.mrb[0].mxu0
        %v1932 = vpop.f32.mrb[0].mxu0
        %v1933 = vadd.f32 0.0, %v1932
        %v1934 = vpop.f32.mrb[0].mxu0
        %1935 = vdwg.mxu0
        %v1936 = vpack.c.bf16 %v1206, %v1203
        %v1937 = vpack.c.bf16 %v1256, %v1253
        %v1938 = vpack.c.bf16 %v1306, %v1303
        %v1939 = vpack.c.bf16 %v1356, %v1353
        %v1940 = vpack.c.bf16 %v1406, %v1403
        %v1941 = vpack.c.bf16 %v1456, %v1453
        %v1942 = vpack.c.bf16 %v1506, %v1503
        %v1943 = vpack.c.bf16 %v1556, %v1553
        %v1944 = vpack.c.bf16 %v1606, %v1603
        %v1945 = vpack.c.bf16 %v1656, %v1653
        %v1946 = vpack.c.bf16 %v1706, %v1703
        %v1947 = vpack.c.bf16 %v1756, %v1753
        %v1949 = vsel %vm630, %v1936, 0
        %v1952 = vsel %vm630, %v1937, 0
        %v1955 = vsel %vm630, %v1938, 0
        %v1958 = vsel %vm630, %v1939, 0
        %v1961 = vsel %vm630, %v1940, 0
        %v1964 = vsel %vm630, %v1941, 0
        %v1967 = vsel %vm630, %v1942, 0
        %v1970 = vsel %vm630, %v1943, 0
        %v1973 = vsel %vm630, %v1944, 0
        %v1976 = vsel %vm630, %v1945, 0
        %v1979 = vsel %vm630, %v1946, 0
        %v1982 = vsel %vm630, %v1947, 0
        %1984 = vmatprep.subr.bf16.mxu0 0
        %1985 = vmatpush1.bf16.msra.mxu0 %v580
        %1986 = vmatprep.subr.bf16.mxu0 0
        %1987 = vmatpush1.bf16.msra.mxu0 0
        %1988 = vmatprep.subr.bf16.mxu0 0
        %1989 = vmatpush1.bf16.msra.mxu0 0
        %1990 = vmatprep.subr.bf16.mxu0 0
        %1991 = vmatpush1.bf16.msra.mxu0 0
        %1992 = vmatprep.subr.bf16.mxu0 0
        %1993 = vmatpush1.bf16.msra.mxu0 0
        %1994 = vmatprep.subr.bf16.mxu0 0
        %1995 = vmatpush1.bf16.msra.mxu0 0
        %1996 = vmatprep.subr.bf16.mxu0 0
        %1997 = vmatpush1.bf16.msra.mxu0 0
        %1998 = vmatprep.subr.bf16.mxu0 0
        %1999 = vmatpush1.bf16.msra.mxu0 0
        %2000 = vmatprep.subr.bf16.mxu0 0
        %2001 = vmatpush1.bf16.msra.mxu0 0
        %2002 = vmatprep.subr.bf16.mxu0 0
        %2003 = vmatpush1.bf16.msra.mxu0 0
        %2004 = vmatprep.subr.bf16.mxu0 0
        %2005 = vmatpush1.bf16.msra.mxu0 0
        %2006 = vmatprep.subr.bf16.mxu0 0
        %2007 = vmatpush1.bf16.msra.mxu0 0
        %2008 = vmatprep.subr.bf16.mxu0 0
        %2009 = vmatpush1.bf16.msra.mxu0 0
        %2010 = vmatprep.subr.bf16.mxu0 0
        %2011 = vmatpush1.bf16.msra.mxu0 0
        %2012 = vmatprep.subr.bf16.mxu0 0
        %2013 = vmatpush1.bf16.msra.mxu0 0
        %2014 = vmatprep.subr.bf16.mxu0 0
        %2015 = vmatpush1.bf16.msra.mxu0 0
        %2016 = vmatprep.mubr.bf16.mxu0 0
        %2017 = vmatmul.mubr.bf16.gmra.mrb[0].mxu0 %v1949
        %v2018 = vpop.f32.mrb[0].mxu0
        %v2019 = vadd.f32 0.0, %v2018
        %v2020 = vpop.f32.mrb[0].mxu0
        %v2021 = vpop.f32.mrb[0].mxu0
        %v2022 = vadd.f32 0.0, %v2021
        %v2023 = vpop.f32.mrb[0].mxu0
        %2024 = vmatprep.mubr.bf16.mxu0 0
        %2025 = vmatmul.mubr.bf16.gmra.mrb[0].mxu0 %v1952
        %v2026 = vpop.f32.mrb[0].mxu0
        %v2027 = vadd.f32 0.0, %v2026
        %v2028 = vpop.f32.mrb[0].mxu0
        %v2029 = vpop.f32.mrb[0].mxu0
        %v2030 = vadd.f32 0.0, %v2029
        %v2031 = vpop.f32.mrb[0].mxu0
        %2032 = vmatprep.mubr.bf16.mxu0 0
        %2033 = vmatmul.mubr.bf16.gmra.mrb[0].mxu0 %v1955
        %v2034 = vpop.f32.mrb[0].mxu0
        %v2035 = vadd.f32 0.0, %v2034
        %v2036 = vpop.f32.mrb[0].mxu0
        %v2037 = vpop.f32.mrb[0].mxu0
        %v2038 = vadd.f32 0.0, %v2037
        %v2039 = vpop.f32.mrb[0].mxu0
        %2040 = vmatprep.mubr.bf16.mxu0 0
        %2041 = vmatmul.mubr.bf16.gmra.mrb[0].mxu0 %v1958
        %v2042 = vpop.f32.mrb[0].mxu0
        %v2043 = vadd.f32 0.0, %v2042
        %v2044 = vpop.f32.mrb[0].mxu0
        %v2045 = vpop.f32.mrb[0].mxu0
        %v2046 = vadd.f32 0.0, %v2045
        %v2047 = vpop.f32.mrb[0].mxu0
        %2048 = vmatprep.mubr.bf16.mxu0 0
        %2049 = vmatmul.mubr.bf16.gmra.mrb[0].mxu0 %v1961
        %v2050 = vpop.f32.mrb[0].mxu0
        %v2051 = vadd.f32 0.0, %v2050
        %v2052 = vpop.f32.mrb[0].mxu0
        %v2053 = vpop.f32.mrb[0].mxu0
        %v2054 = vadd.f32 0.0, %v2053
        %v2055 = vpop.f32.mrb[0].mxu0
        %2056 = vmatprep.mubr.bf16.mxu0 0
        %2057 = vmatmul.mubr.bf16.gmra.mrb[0].mxu0 %v1964
        %v2058 = vpop.f32.mrb[0].mxu0
        %v2059 = vadd.f32 0.0, %v2058
        %v2060 = vpop.f32.mrb[0].mxu0
        %v2061 = vpop.f32.mrb[0].mxu0
        %v2062 = vadd.f32 0.0, %v2061
        %v2063 = vpop.f32.mrb[0].mxu0
        %2064 = vmatprep.mubr.bf16.mxu0 0
        %2065 = vmatmul.mubr.bf16.gmra.mrb[0].mxu0 %v1967
        %v2066 = vpop.f32.mrb[0].mxu0
        %v2067 = vadd.f32 0.0, %v2066
        %v2068 = vpop.f32.mrb[0].mxu0
        %v2069 = vpop.f32.mrb[0].mxu0
        %v2070 = vadd.f32 0.0, %v2069
        %v2071 = vpop.f32.mrb[0].mxu0
        %2072 = vmatprep.mubr.bf16.mxu0 0
        %2073 = vmatmul.mubr.bf16.gmra.mrb[0].mxu0 %v1970
        %v2074 = vpop.f32.mrb[0].mxu0
        %v2075 = vadd.f32 0.0, %v2074
        %v2076 = vpop.f32.mrb[0].mxu0
        %v2077 = vpop.f32.mrb[0].mxu0
        %v2078 = vadd.f32 0.0, %v2077
        %v2079 = vpop.f32.mrb[0].mxu0
        %2080 = vmatprep.mubr.bf16.mxu0 0
        %2081 = vmatmul.mubr.bf16.gmra.mrb[0].mxu0 %v1973
        %v2082 = vpop.f32.mrb[0].mxu0
        %v2083 = vadd.f32 0.0, %v2082
        %v2084 = vpop.f32.mrb[0].mxu0
        %v2085 = vpop.f32.mrb[0].mxu0
        %v2086 = vadd.f32 0.0, %v2085
        %v2087 = vpop.f32.mrb[0].mxu0
        %2088 = vmatprep.mubr.bf16.mxu0 0
        %2089 = vmatmul.mubr.bf16.gmra.mrb[0].mxu0 %v1976
        %v2090 = vpop.f32.mrb[0].mxu0
        %v2091 = vadd.f32 0.0, %v2090
        %v2092 = vpop.f32.mrb[0].mxu0
        %v2093 = vpop.f32.mrb[0].mxu0
        %v2094 = vadd.f32 0.0, %v2093
        %v2095 = vpop.f32.mrb[0].mxu0
        %2096 = vmatprep.mubr.bf16.mxu0 0
        %2097 = vmatmul.mubr.bf16.gmra.mrb[0].mxu0 %v1979
        %v2098 = vpop.f32.mrb[0].mxu0
        %v2099 = vadd.f32 0.0, %v2098
        %v2100 = vpop.f32.mrb[0].mxu0
        %v2101 = vpop.f32.mrb[0].mxu0
        %v2102 = vadd.f32 0.0, %v2101
        %v2103 = vpop.f32.mrb[0].mxu0
        %2104 = vmatprep.mubr.bf16.mxu0 0
        %2105 = vmatmul.mubr.bf16.gmra.mrb[0].mxu0 %v1982
        %v2106 = vpop.f32.mrb[0].mxu0
        %v2107 = vadd.f32 0.0, %v2106
        %v2108 = vpop.f32.mrb[0].mxu0
        %v2109 = vpop.f32.mrb[0].mxu0
        %v2110 = vadd.f32 0.0, %v2109
        %v2111 = vpop.f32.mrb[0].mxu0
        %2112 = vdwg.mxu0
        %v2113 = vand.u32 2147483647, %v1842
        %v2114 = vand.u32 2147483647, %v1845
        %v2115 = vand.u32 2147483647, %v2019
        %v2116 = vand.u32 2147483647, %v2022
        %v2117 = vadd.f32 %v2113, %v2115
        %v2118 = vadd.f32 %v2114, %v2116
        %v2119 = vand.u32 2147483647, %v1850
        %v2120 = vand.u32 2147483647, %v1853
        %v2121 = vand.u32 2147483647, %v2027
        %v2122 = vand.u32 2147483647, %v2030
        %v2123 = vadd.f32 %v2119, %v2121
        %v2124 = vadd.f32 %v2120, %v2122
        %v2125 = vmax.f32 %v2117, %v2123
        %v2126 = vmax.f32 %v2118, %v2124
        %v2127 = vand.u32 2147483647, %v1858
        %v2128 = vand.u32 2147483647, %v1861
        %v2129 = vand.u32 2147483647, %v2035
        %v2130 = vand.u32 2147483647, %v2038
        %v2131 = vadd.f32 %v2127, %v2129
        %v2132 = vadd.f32 %v2128, %v2130
        %v2133 = vsub.f32 %v2125, %v2131
        %v2134 = vsub.f32 %v2126, %v2132
        %v2135 = vand.u32 2147483647, %v2133
        %v2136 = vand.u32 2147483647, %v2134
        %v2137 = vsel %vm630, %v2135, 0.0
        %v2138 = vsel %vm630, %v2136, 0.0
        %v2139 = vadd.f32 %v2137, %v2138
        %2140 = vadd.xlane.f32.xlu0 %v2139
        %v2141 = vpop.xlane.xlu0 %2140
        %v2142 = vrot.slane %v2141, 4
        %v2143 = vadd.f32 %v2141, %v2142
        %v2144 = vrot.slane %v2143, 2
        %v2145 = vadd.f32 %v2143, %v2144
        %v2146 = vrot.slane %v2145, 1
        %v2147 = vadd.f32 %v2145, %v2146
        %s2148 = vtos %v2147
        %v2149 = vstv %s2148
        %v2150 = vadd.f32 %v2149, 0.0
        %v2151 = vand.u32 2147483647, %v1866
        %v2152 = vand.u32 2147483647, %v1869
        %v2153 = vand.u32 2147483647, %v2043
        %v2154 = vand.u32 2147483647, %v2046
        %v2155 = vadd.f32 %v2151, %v2153
        %v2156 = vadd.f32 %v2152, %v2154
        %v2157 = vand.u32 2147483647, %v1874
        %v2158 = vand.u32 2147483647, %v1877
        %v2159 = vand.u32 2147483647, %v2051
        %v2160 = vand.u32 2147483647, %v2054
        %v2161 = vadd.f32 %v2157, %v2159
        %v2162 = vadd.f32 %v2158, %v2160
        %v2163 = vmax.f32 %v2155, %v2161
        %v2164 = vmax.f32 %v2156, %v2162
        %v2165 = vand.u32 2147483647, %v1882
        %v2166 = vand.u32 2147483647, %v1885
        %v2167 = vand.u32 2147483647, %v2059
        %v2168 = vand.u32 2147483647, %v2062
        %v2169 = vadd.f32 %v2165, %v2167
        %v2170 = vadd.f32 %v2166, %v2168
        %v2171 = vsub.f32 %v2163, %v2169
        %v2172 = vsub.f32 %v2164, %v2170
        %v2173 = vand.u32 2147483647, %v2171
        %v2174 = vand.u32 2147483647, %v2172
        %v2175 = vsel %vm630, %v2173, 0.0
        %v2176 = vsel %vm630, %v2174, 0.0
        %v2177 = vadd.f32 %v2175, %v2176
        %2178 = vadd.xlane.f32.xlu0 %v2177
        %v2179 = vpop.xlane.xlu0 %2178
        %v2180 = vrot.slane %v2179, 4
        %v2181 = vadd.f32 %v2179, %v2180
        %v2182 = vrot.slane %v2181, 2
        %v2183 = vadd.f32 %v2181, %v2182
        %v2184 = vrot.slane %v2183, 1
        %v2185 = vadd.f32 %v2183, %v2184
        %s2186 = vtos %v2185
        %v2187 = vstv %s2186
        %v2188 = vadd.f32 %v2150, %v2187
        %v2189 = vand.u32 2147483647, %v1890
        %v2190 = vand.u32 2147483647, %v1893
        %v2191 = vand.u32 2147483647, %v2067
        %v2192 = vand.u32 2147483647, %v2070
        %v2193 = vadd.f32 %v2189, %v2191
        %v2194 = vadd.f32 %v2190, %v2192
        %v2195 = vand.u32 2147483647, %v1898
        %v2196 = vand.u32 2147483647, %v1901
        %v2197 = vand.u32 2147483647, %v2075
        %v2198 = vand.u32 2147483647, %v2078
        %v2199 = vadd.f32 %v2195, %v2197
        %v2200 = vadd.f32 %v2196, %v2198
        %v2201 = vmax.f32 %v2193, %v2199
        %v2202 = vmax.f32 %v2194, %v2200
        %v2203 = vand.u32 2147483647, %v1906
        %v2204 = vand.u32 2147483647, %v1909
        %v2205 = vand.u32 2147483647, %v2083
        %v2206 = vand.u32 2147483647, %v2086
        %v2207 = vadd.f32 %v2203, %v2205
        %v2208 = vadd.f32 %v2204, %v2206
        %v2209 = vsub.f32 %v2201, %v2207
        %v2210 = vsub.f32 %v2202, %v2208
        %v2211 = vand.u32 2147483647, %v2209
        %v2212 = vand.u32 2147483647, %v2210
        %v2213 = vsel %vm630, %v2211, 0.0
        %v2214 = vsel %vm630, %v2212, 0.0
        %v2215 = vadd.f32 %v2213, %v2214
        %2216 = vadd.xlane.f32.xlu0 %v2215
        %v2217 = vpop.xlane.xlu0 %2216
        %v2218 = vrot.slane %v2217, 4
        %v2219 = vadd.f32 %v2217, %v2218
        %v2220 = vrot.slane %v2219, 2
        %v2221 = vadd.f32 %v2219, %v2220
        %v2222 = vrot.slane %v2221, 1
        %v2223 = vadd.f32 %v2221, %v2222
        %s2224 = vtos %v2223
        %v2225 = vstv %s2224
        %v2226 = vadd.f32 %v2188, %v2225
        %v2227 = vand.u32 2147483647, %v1914
        %v2228 = vand.u32 2147483647, %v1917
        %v2229 = vand.u32 2147483647, %v2091
        %v2230 = vand.u32 2147483647, %v2094
        %v2231 = vadd.f32 %v2227, %v2229
        %v2232 = vadd.f32 %v2228, %v2230
        %v2233 = vand.u32 2147483647, %v1922
        %v2234 = vand.u32 2147483647, %v1925
        %v2235 = vand.u32 2147483647, %v2099
        %v2236 = vand.u32 2147483647, %v2102
        %v2237 = vadd.f32 %v2233, %v2235
        %v2238 = vadd.f32 %v2234, %v2236
        %v2239 = vmax.f32 %v2231, %v2237
        %v2240 = vmax.f32 %v2232, %v2238
        %v2241 = vand.u32 2147483647, %v1930
        %v2242 = vand.u32 2147483647, %v1933
        %v2243 = vand.u32 2147483647, %v2107
        %v2244 = vand.u32 2147483647, %v2110
        %v2245 = vadd.f32 %v2241, %v2243
        %v2246 = vadd.f32 %v2242, %v2244
        %v2247 = vsub.f32 %v2239, %v2245
        %v2248 = vsub.f32 %v2240, %v2246
        %v2249 = vand.u32 2147483647, %v2247
        %v2250 = vand.u32 2147483647, %v2248
        %v2251 = vsel %vm630, %v2249, 0.0
        %v2252 = vsel %vm630, %v2250, 0.0
        %v2253 = vadd.f32 %v2251, %v2252
        %2254 = vadd.xlane.f32.xlu0 %v2253
        %v2255 = vpop.xlane.xlu0 %2254
        %v2256 = vrot.slane %v2255, 4
        %v2257 = vadd.f32 %v2255, %v2256
        %v2258 = vrot.slane %v2257, 2
        %v2259 = vadd.f32 %v2257, %v2258
        %v2260 = vrot.slane %v2259, 1
        %v2261 = vadd.f32 %v2259, %v2260
        %s2262 = vtos %v2261
        %v2263 = vstv %s2262
        %v2264 = vadd.f32 %v2226, %v2263
        %v2265 = vld [vmem:[#allocation8] sm:$0x1]
        %v2266 = vadd.f32 %v2265, %v2264
        %2267 = vst.msk [vmem:[#allocation8] sm:$0x1] %vm701, %v2266
        %v2268 = vmul.f32 %v591, %v591
        %v2269 = vmul.f32 %v592, %v592
        %v2270 = vmul.f32 %v589, %v589
        %v2271 = vmul.f32 %v590, %v590
        %v2272 = vmul.f32 %v591, %v589
        %v2273 = vmul.f32 %v592, %v590
        %v2274 = vmul.f32 %v602, %v602
        %v2275 = vmul.f32 %v603, %v603
        %v2276 = vmul.f32 %v600, %v600
        %v2277 = vmul.f32 %v601, %v601
        %v2278 = vmul.f32 %v602, %v600
        %v2279 = vmul.f32 %v603, %v601
        %v2280 = vmul.f32 %v613, %v613
        %v2281 = vmul.f32 %v614, %v614
        %v2282 = vmul.f32 %v611, %v611
        %v2283 = vmul.f32 %v612, %v612
        %v2284 = vmul.f32 %v613, %v611
        %v2285 = vmul.f32 %v614, %v612
        %v2286 = vmul.f32 %v624, %v624
        %v2287 = vmul.f32 %v625, %v625
        %v2288 = vmul.f32 %v622, %v622
        %v2289 = vmul.f32 %v623, %v623
        %v2290 = vmul.f32 %v624, %v622
        %v2291 = vmul.f32 %v625, %v623
        %v2293 = vsel %vm630, %v581, 0
        %v2296 = vsel %vm630, %v582, 0
        %2298 = vmatprep.subr.mxu0 0.0
        %2299 = vmatpush1.msra.mxu0 %v591
        %2300 = vmatprep.subr.mxu0 0.0
        %2301 = vmatpush1.msra.mxu0 %v592
        %2302 = vmatprep.subr.mxu0 0.0
        %2303 = vmatpush1.msra.mxu0 0.0
        %2304 = vmatprep.subr.mxu0 0.0
        %2305 = vmatpush1.msra.mxu0 0.0
        %2306 = vmatprep.subr.mxu0 0.0
        %2307 = vmatpush1.msra.mxu0 0.0
        %2308 = vmatprep.subr.mxu0 0.0
        %2309 = vmatpush1.msra.mxu0 0.0
        %2310 = vmatprep.subr.mxu0 0.0
        %2311 = vmatpush1.msra.mxu0 0.0
        %2312 = vmatprep.subr.mxu0 0.0
        %2313 = vmatpush1.msra.mxu0 0.0
        %2314 = vmatprep.subr.mxu0 0.0
        %2315 = vmatpush1.msra.mxu0 0.0
        %2316 = vmatprep.subr.mxu0 0.0
        %2317 = vmatpush1.msra.mxu0 0.0
        %2318 = vmatprep.subr.mxu0 0.0
        %2319 = vmatpush1.msra.mxu0 0.0
        %2320 = vmatprep.subr.mxu0 0.0
        %2321 = vmatpush1.msra.mxu0 0.0
        %2322 = vmatprep.subr.mxu0 0.0
        %2323 = vmatpush1.msra.mxu0 0.0
        %2324 = vmatprep.subr.mxu0 0.0
        %2325 = vmatpush1.msra.mxu0 0.0
        %2326 = vmatprep.subr.mxu0 0.0
        %2327 = vmatpush1.msra.mxu0 0.0
        %2328 = vmatprep.subr.mxu0 0.0
        %2329 = vmatpush1.msra.mxu0 0.0
        %2330 = vmatprep.subr.mxu0 0.0
        %2331 = vmatpush1.msra.mxu0 0.0
        %2332 = vmatprep.subr.mxu0 0.0
        %2333 = vmatpush1.msra.mxu0 0.0
        %2334 = vmatprep.subr.mxu0 0.0
        %2335 = vmatpush1.msra.mxu0 0.0
        %2336 = vmatprep.subr.mxu0 0.0
        %2337 = vmatpush1.msra.mxu0 0.0
        %2338 = vmatprep.subr.mxu0 0.0
        %2339 = vmatpush1.msra.mxu0 0.0
        %2340 = vmatprep.subr.mxu0 0.0
        %2341 = vmatpush1.msra.mxu0 0.0
        %2342 = vmatprep.subr.mxu0 0.0
        %2343 = vmatpush1.msra.mxu0 0.0
        %2344 = vmatprep.subr.mxu0 0.0
        %2345 = vmatpush1.msra.mxu0 0.0
        %2346 = vmatprep.subr.mxu0 0.0
        %2347 = vmatpush1.msra.mxu0 0.0
        %2348 = vmatprep.subr.mxu0 0.0
        %2349 = vmatpush1.msra.mxu0 0.0
        %2350 = vmatprep.subr.mxu0 0.0
        %2351 = vmatpush1.msra.mxu0 0.0
        %2352 = vmatprep.subr.mxu0 0.0
        %2353 = vmatpush1.msra.mxu0 0.0
        %2354 = vmatprep.subr.mxu0 0.0
        %2355 = vmatpush1.msra.mxu0 0.0
        %2356 = vmatprep.subr.mxu0 0.0
        %2357 = vmatpush1.msra.mxu0 0.0
        %2358 = vmatprep.subr.mxu0 0.0
        %2359 = vmatpush1.msra.mxu0 0.0
        %2360 = vmatprep.subr.mxu0 0.0
        %2361 = vmatpush1.msra.mxu0 0.0
        %2362 = vmatprep.mubr.f32.mxu0 0.0
        %2363 = vmatmul.mubr.f32.gmra.mrb[0].mxu0 %v2293
        %v2364 = vpop.f32.mrb[0].mxu0
        %v2365 = vadd.f32 0.0, %v2364
        %v2366 = vpop.f32.mrb[0].mxu0
        %2367 = vmatprep.mubr.f32.mxu0 0.0
        %2368 = vmatmul.mubr.f32.gmra.mrb[0].mxu0 %v2296
        %v2369 = vpop.f32.mrb[0].mxu0
        %v2370 = vadd.f32 0.0, %v2369
        %v2371 = vpop.f32.mrb[0].mxu0
        %2372 = vdwg.mxu0
        %2373 = vmatprep.subr.mxu0 0.0
        %2374 = vmatpush1.msra.mxu0 %v589
        %2375 = vmatprep.subr.mxu0 0.0
        %2376 = vmatpush1.msra.mxu0 %v590
        %2377 = vmatprep.subr.mxu0 0.0
        %2378 = vmatpush1.msra.mxu0 0.0
        %2379 = vmatprep.subr.mxu0 0.0
        %2380 = vmatpush1.msra.mxu0 0.0
        %2381 = vmatprep.subr.mxu0 0.0
        %2382 = vmatpush1.msra.mxu0 0.0
        %2383 = vmatprep.subr.mxu0 0.0
        %2384 = vmatpush1.msra.mxu0 0.0
        %2385 = vmatprep.subr.mxu0 0.0
        %2386 = vmatpush1.msra.mxu0 0.0
        %2387 = vmatprep.subr.mxu0 0.0
        %2388 = vmatpush1.msra.mxu0 0.0
        %2389 = vmatprep.subr.mxu0 0.0
        %2390 = vmatpush1.msra.mxu0 0.0
        %2391 = vmatprep.subr.mxu0 0.0
        %2392 = vmatpush1.msra.mxu0 0.0
        %2393 = vmatprep.subr.mxu0 0.0
        %2394 = vmatpush1.msra.mxu0 0.0
        %2395 = vmatprep.subr.mxu0 0.0
        %2396 = vmatpush1.msra.mxu0 0.0
        %2397 = vmatprep.subr.mxu0 0.0
        %2398 = vmatpush1.msra.mxu0 0.0
        %2399 = vmatprep.subr.mxu0 0.0
        %2400 = vmatpush1.msra.mxu0 0.0
        %2401 = vmatprep.subr.mxu0 0.0
        %2402 = vmatpush1.msra.mxu0 0.0
        %2403 = vmatprep.subr.mxu0 0.0
        %2404 = vmatpush1.msra.mxu0 0.0
        %2405 = vmatprep.subr.mxu0 0.0
        %2406 = vmatpush1.msra.mxu0 0.0
        %2407 = vmatprep.subr.mxu0 0.0
        %2408 = vmatpush1.msra.mxu0 0.0
        %2409 = vmatprep.subr.mxu0 0.0
        %2410 = vmatpush1.msra.mxu0 0.0
        %2411 = vmatprep.subr.mxu0 0.0
        %2412 = vmatpush1.msra.mxu0 0.0
        %2413 = vmatprep.subr.mxu0 0.0
        %2414 = vmatpush1.msra.mxu0 0.0
        %2415 = vmatprep.subr.mxu0 0.0
        %2416 = vmatpush1.msra.mxu0 0.0
        %2417 = vmatprep.subr.mxu0 0.0
        %2418 = vmatpush1.msra.mxu0 0.0
        %2419 = vmatprep.subr.mxu0 0.0
        %2420 = vmatpush1.msra.mxu0 0.0
        %2421 = vmatprep.subr.mxu0 0.0
        %2422 = vmatpush1.msra.mxu0 0.0
        %2423 = vmatprep.subr.mxu0 0.0
        %2424 = vmatpush1.msra.mxu0 0.0
        %2425 = vmatprep.subr.mxu0 0.0
        %2426 = vmatpush1.msra.mxu0 0.0
        %2427 = vmatprep.subr.mxu0 0.0
        %2428 = vmatpush1.msra.mxu0 0.0
        %2429 = vmatprep.subr.mxu0 0.0
        %2430 = vmatpush1.msra.mxu0 0.0
        %2431 = vmatprep.subr.mxu0 0.0
        %2432 = vmatpush1.msra.mxu0 0.0
        %2433 = vmatprep.subr.mxu0 0.0
        %2434 = vmatpush1.msra.mxu0 0.0
        %2435 = vmatprep.subr.mxu0 0.0
        %2436 = vmatpush1.msra.mxu0 0.0
        %2437 = vmatprep.mubr.f32.mxu0 0.0
        %2438 = vmatmul.mubr.f32.gmra.mrb[0].mxu0 %v2293
        %v2439 = vpop.f32.mrb[0].mxu0
        %v2440 = vadd.f32 0.0, %v2439
        %v2441 = vpop.f32.mrb[0].mxu0
        %2442 = vmatprep.mubr.f32.mxu0 0.0
        %2443 = vmatmul.mubr.f32.gmra.mrb[0].mxu0 %v2296
        %v2444 = vpop.f32.mrb[0].mxu0
        %v2445 = vadd.f32 0.0, %v2444
        %v2446 = vpop.f32.mrb[0].mxu0
        %2447 = vdwg.mxu0
        %2448 = vmatprep.subr.mxu0 0.0
        %2449 = vmatpush1.msra.mxu0 %v2268
        %2450 = vmatprep.subr.mxu0 0.0
        %2451 = vmatpush1.msra.mxu0 %v2269
        %2452 = vmatprep.subr.mxu0 0.0
        %2453 = vmatpush1.msra.mxu0 0.0
        %2454 = vmatprep.subr.mxu0 0.0
        %2455 = vmatpush1.msra.mxu0 0.0
        %2456 = vmatprep.subr.mxu0 0.0
        %2457 = vmatpush1.msra.mxu0 0.0
        %2458 = vmatprep.subr.mxu0 0.0
        %2459 = vmatpush1.msra.mxu0 0.0
        %2460 = vmatprep.subr.mxu0 0.0
        %2461 = vmatpush1.msra.mxu0 0.0
        %2462 = vmatprep.subr.mxu0 0.0
        %2463 = vmatpush1.msra.mxu0 0.0
        %2464 = vmatprep.subr.mxu0 0.0
        %2465 = vmatpush1.msra.mxu0 0.0
        %2466 = vmatprep.subr.mxu0 0.0
        %2467 = vmatpush1.msra.mxu0 0.0
        %2468 = vmatprep.subr.mxu0 0.0
        %2469 = vmatpush1.msra.mxu0 0.0
        %2470 = vmatprep.subr.mxu0 0.0
        %2471 = vmatpush1.msra.mxu0 0.0
        %2472 = vmatprep.subr.mxu0 0.0
        %2473 = vmatpush1.msra.mxu0 0.0
        %2474 = vmatprep.subr.mxu0 0.0
        %2475 = vmatpush1.msra.mxu0 0.0
        %2476 = vmatprep.subr.mxu0 0.0
        %2477 = vmatpush1.msra.mxu0 0.0
        %2478 = vmatprep.subr.mxu0 0.0
        %2479 = vmatpush1.msra.mxu0 0.0
        %2480 = vmatprep.subr.mxu0 0.0
        %2481 = vmatpush1.msra.mxu0 0.0
        %2482 = vmatprep.subr.mxu0 0.0
        %2483 = vmatpush1.msra.mxu0 0.0
        %2484 = vmatprep.subr.mxu0 0.0
        %2485 = vmatpush1.msra.mxu0 0.0
        %2486 = vmatprep.subr.mxu0 0.0
        %2487 = vmatpush1.msra.mxu0 0.0
        %2488 = vmatprep.subr.mxu0 0.0
        %2489 = vmatpush1.msra.mxu0 0.0
        %2490 = vmatprep.subr.mxu0 0.0
        %2491 = vmatpush1.msra.mxu0 0.0
        %2492 = vmatprep.subr.mxu0 0.0
        %2493 = vmatpush1.msra.mxu0 0.0
        %2494 = vmatprep.subr.mxu0 0.0
        %2495 = vmatpush1.msra.mxu0 0.0
        %2496 = vmatprep.subr.mxu0 0.0
        %2497 = vmatpush1.msra.mxu0 0.0
        %2498 = vmatprep.subr.mxu0 0.0
        %2499 = vmatpush1.msra.mxu0 0.0
        %2500 = vmatprep.subr.mxu0 0.0
        %2501 = vmatpush1.msra.mxu0 0.0
        %2502 = vmatprep.subr.mxu0 0.0
        %2503 = vmatpush1.msra.mxu0 0.0
        %2504 = vmatprep.subr.mxu0 0.0
        %2505 = vmatpush1.msra.mxu0 0.0
        %2506 = vmatprep.subr.mxu0 0.0
        %2507 = vmatpush1.msra.mxu0 0.0
        %2508 = vmatprep.subr.mxu0 0.0
        %2509 = vmatpush1.msra.mxu0 0.0
        %2510 = vmatprep.subr.mxu0 0.0
        %2511 = vmatpush1.msra.mxu0 0.0
        %2512 = vmatprep.mubr.f32.mxu0 0.0
        %2513 = vmatmul.mubr.f32.gmra.mrb[0].mxu0 %v2293
        %v2514 = vpop.f32.mrb[0].mxu0
        %v2515 = vadd.f32 0.0, %v2514
        %v2516 = vpop.f32.mrb[0].mxu0
        %2517 = vmatprep.mubr.f32.mxu0 0.0
        %2518 = vmatmul.mubr.f32.gmra.mrb[0].mxu0 %v2296
        %v2519 = vpop.f32.mrb[0].mxu0
        %v2520 = vadd.f32 0.0, %v2519
        %v2521 = vpop.f32.mrb[0].mxu0
        %2522 = vdwg.mxu0
        %2523 = vmatprep.subr.mxu0 0.0
        %2524 = vmatpush1.msra.mxu0 %v2270
        %2525 = vmatprep.subr.mxu0 0.0
        %2526 = vmatpush1.msra.mxu0 %v2271
        %2527 = vmatprep.subr.mxu0 0.0
        %2528 = vmatpush1.msra.mxu0 0.0
        %2529 = vmatprep.subr.mxu0 0.0
        %2530 = vmatpush1.msra.mxu0 0.0
        %2531 = vmatprep.subr.mxu0 0.0
        %2532 = vmatpush1.msra.mxu0 0.0
        %2533 = vmatprep.subr.mxu0 0.0
        %2534 = vmatpush1.msra.mxu0 0.0
        %2535 = vmatprep.subr.mxu0 0.0
        %2536 = vmatpush1.msra.mxu0 0.0
        %2537 = vmatprep.subr.mxu0 0.0
        %2538 = vmatpush1.msra.mxu0 0.0
        %2539 = vmatprep.subr.mxu0 0.0
        %2540 = vmatpush1.msra.mxu0 0.0
        %2541 = vmatprep.subr.mxu0 0.0
        %2542 = vmatpush1.msra.mxu0 0.0
        %2543 = vmatprep.subr.mxu0 0.0
        %2544 = vmatpush1.msra.mxu0 0.0
        %2545 = vmatprep.subr.mxu0 0.0
        %2546 = vmatpush1.msra.mxu0 0.0
        %2547 = vmatprep.subr.mxu0 0.0
        %2548 = vmatpush1.msra.mxu0 0.0
        %2549 = vmatprep.subr.mxu0 0.0
        %2550 = vmatpush1.msra.mxu0 0.0
        %2551 = vmatprep.subr.mxu0 0.0
        %2552 = vmatpush1.msra.mxu0 0.0
        %2553 = vmatprep.subr.mxu0 0.0
        %2554 = vmatpush1.msra.mxu0 0.0
        %2555 = vmatprep.subr.mxu0 0.0
        %2556 = vmatpush1.msra.mxu0 0.0
        %2557 = vmatprep.subr.mxu0 0.0
        %2558 = vmatpush1.msra.mxu0 0.0
        %2559 = vmatprep.subr.mxu0 0.0
        %2560 = vmatpush1.msra.mxu0 0.0
        %2561 = vmatprep.subr.mxu0 0.0
        %2562 = vmatpush1.msra.mxu0 0.0
        %2563 = vmatprep.subr.mxu0 0.0
        %2564 = vmatpush1.msra.mxu0 0.0
        %2565 = vmatprep.subr.mxu0 0.0
        %2566 = vmatpush1.msra.mxu0 0.0
        %2567 = vmatprep.subr.mxu0 0.0
        %2568 = vmatpush1.msra.mxu0 0.0
        %2569 = vmatprep.subr.mxu0 0.0
        %2570 = vmatpush1.msra.mxu0 0.0
        %2571 = vmatprep.subr.mxu0 0.0
        %2572 = vmatpush1.msra.mxu0 0.0
        %2573 = vmatprep.subr.mxu0 0.0
        %2574 = vmatpush1.msra.mxu0 0.0
        %2575 = vmatprep.subr.mxu0 0.0
        %2576 = vmatpush1.msra.mxu0 0.0
        %2577 = vmatprep.subr.mxu0 0.0
        %2578 = vmatpush1.msra.mxu0 0.0
        %2579 = vmatprep.subr.mxu0 0.0
        %2580 = vmatpush1.msra.mxu0 0.0
        %2581 = vmatprep.subr.mxu0 0.0
        %2582 = vmatpush1.msra.mxu0 0.0
        %2583 = vmatprep.subr.mxu0 0.0
        %2584 = vmatpush1.msra.mxu0 0.0
        %2585 = vmatprep.subr.mxu0 0.0
        %2586 = vmatpush1.msra.mxu0 0.0
        %2587 = vmatprep.mubr.f32.mxu0 0.0
        %2588 = vmatmul.mubr.f32.gmra.mrb[0].mxu0 %v2293
        %v2589 = vpop.f32.mrb[0].mxu0
        %v2590 = vadd.f32 0.0, %v2589
        %v2591 = vpop.f32.mrb[0].mxu0
        %2592 = vmatprep.mubr.f32.mxu0 0.0
        %2593 = vmatmul.mubr.f32.gmra.mrb[0].mxu0 %v2296
        %v2594 = vpop.f32.mrb[0].mxu0
        %v2595 = vadd.f32 0.0, %v2594
        %v2596 = vpop.f32.mrb[0].mxu0
        %2597 = vdwg.mxu0
        %2598 = vmatprep.subr.mxu0 0.0
        %2599 = vmatpush1.msra.mxu0 %v2272
        %2600 = vmatprep.subr.mxu0 0.0
        %2601 = vmatpush1.msra.mxu0 %v2273
        %2602 = vmatprep.subr.mxu0 0.0
        %2603 = vmatpush1.msra.mxu0 0.0
        %2604 = vmatprep.subr.mxu0 0.0
        %2605 = vmatpush1.msra.mxu0 0.0
        %2606 = vmatprep.subr.mxu0 0.0
        %2607 = vmatpush1.msra.mxu0 0.0
        %2608 = vmatprep.subr.mxu0 0.0
        %2609 = vmatpush1.msra.mxu0 0.0
        %2610 = vmatprep.subr.mxu0 0.0
        %2611 = vmatpush1.msra.mxu0 0.0
        %2612 = vmatprep.subr.mxu0 0.0
        %2613 = vmatpush1.msra.mxu0 0.0
        %2614 = vmatprep.subr.mxu0 0.0
        %2615 = vmatpush1.msra.mxu0 0.0
        %2616 = vmatprep.subr.mxu0 0.0
        %2617 = vmatpush1.msra.mxu0 0.0
        %2618 = vmatprep.subr.mxu0 0.0
        %2619 = vmatpush1.msra.mxu0 0.0
        %2620 = vmatprep.subr.mxu0 0.0
        %2621 = vmatpush1.msra.mxu0 0.0
        %2622 = vmatprep.subr.mxu0 0.0
        %2623 = vmatpush1.msra.mxu0 0.0
        %2624 = vmatprep.subr.mxu0 0.0
        %2625 = vmatpush1.msra.mxu0 0.0
        %2626 = vmatprep.subr.mxu0 0.0
        %2627 = vmatpush1.msra.mxu0 0.0
        %2628 = vmatprep.subr.mxu0 0.0
        %2629 = vmatpush1.msra.mxu0 0.0
        %2630 = vmatprep.subr.mxu0 0.0
        %2631 = vmatpush1.msra.mxu0 0.0
        %2632 = vmatprep.subr.mxu0 0.0
        %2633 = vmatpush1.msra.mxu0 0.0
        %2634 = vmatprep.subr.mxu0 0.0
        %2635 = vmatpush1.msra.mxu0 0.0
        %2636 = vmatprep.subr.mxu0 0.0
        %2637 = vmatpush1.msra.mxu0 0.0
        %2638 = vmatprep.subr.mxu0 0.0
        %2639 = vmatpush1.msra.mxu0 0.0
        %2640 = vmatprep.subr.mxu0 0.0
        %2641 = vmatpush1.msra.mxu0 0.0
        %2642 = vmatprep.subr.mxu0 0.0
        %2643 = vmatpush1.msra.mxu0 0.0
        %2644 = vmatprep.subr.mxu0 0.0
        %2645 = vmatpush1.msra.mxu0 0.0
        %2646 = vmatprep.subr.mxu0 0.0
        %2647 = vmatpush1.msra.mxu0 0.0
        %2648 = vmatprep.subr.mxu0 0.0
        %2649 = vmatpush1.msra.mxu0 0.0
        %2650 = vmatprep.subr.mxu0 0.0
        %2651 = vmatpush1.msra.mxu0 0.0
        %2652 = vmatprep.subr.mxu0 0.0
        %2653 = vmatpush1.msra.mxu0 0.0
        %2654 = vmatprep.subr.mxu0 0.0
        %2655 = vmatpush1.msra.mxu0 0.0
        %2656 = vmatprep.subr.mxu0 0.0
        %2657 = vmatpush1.msra.mxu0 0.0
        %2658 = vmatprep.subr.mxu0 0.0
        %2659 = vmatpush1.msra.mxu0 0.0
        %2660 = vmatprep.subr.mxu0 0.0
        %2661 = vmatpush1.msra.mxu0 0.0
        %2662 = vmatprep.mubr.f32.mxu0 0.0
        %2663 = vmatmul.mubr.f32.gmra.mrb[0].mxu0 %v2293
        %v2664 = vpop.f32.mrb[0].mxu0
        %v2665 = vadd.f32 0.0, %v2664
        %v2666 = vpop.f32.mrb[0].mxu0
        %2667 = vmatprep.mubr.f32.mxu0 0.0
        %2668 = vmatmul.mubr.f32.gmra.mrb[0].mxu0 %v2296
        %v2669 = vpop.f32.mrb[0].mxu0
        %v2670 = vadd.f32 0.0, %v2669
        %v2671 = vpop.f32.mrb[0].mxu0
        %2672 = vdwg.mxu0
        %2673 = vmatprep.subr.mxu0 0.0
        %2674 = vmatpush1.msra.mxu0 %v602
        %2675 = vmatprep.subr.mxu0 0.0
        %2676 = vmatpush1.msra.mxu0 %v603
        %2677 = vmatprep.subr.mxu0 0.0
        %2678 = vmatpush1.msra.mxu0 0.0
        %2679 = vmatprep.subr.mxu0 0.0
        %2680 = vmatpush1.msra.mxu0 0.0
        %2681 = vmatprep.subr.mxu0 0.0
        %2682 = vmatpush1.msra.mxu0 0.0
        %2683 = vmatprep.subr.mxu0 0.0
        %2684 = vmatpush1.msra.mxu0 0.0
        %2685 = vmatprep.subr.mxu0 0.0
        %2686 = vmatpush1.msra.mxu0 0.0
        %2687 = vmatprep.subr.mxu0 0.0
        %2688 = vmatpush1.msra.mxu0 0.0
        %2689 = vmatprep.subr.mxu0 0.0
        %2690 = vmatpush1.msra.mxu0 0.0
        %2691 = vmatprep.subr.mxu0 0.0
        %2692 = vmatpush1.msra.mxu0 0.0
        %2693 = vmatprep.subr.mxu0 0.0
        %2694 = vmatpush1.msra.mxu0 0.0
        %2695 = vmatprep.subr.mxu0 0.0
        %2696 = vmatpush1.msra.mxu0 0.0
        %2697 = vmatprep.subr.mxu0 0.0
        %2698 = vmatpush1.msra.mxu0 0.0
        %2699 = vmatprep.subr.mxu0 0.0
        %2700 = vmatpush1.msra.mxu0 0.0
        %2701 = vmatprep.subr.mxu0 0.0
        %2702 = vmatpush1.msra.mxu0 0.0
        %2703 = vmatprep.subr.mxu0 0.0
        %2704 = vmatpush1.msra.mxu0 0.0
        %2705 = vmatprep.subr.mxu0 0.0
        %2706 = vmatpush1.msra.mxu0 0.0
        %2707 = vmatprep.subr.mxu0 0.0
        %2708 = vmatpush1.msra.mxu0 0.0
        %2709 = vmatprep.subr.mxu0 0.0
        %2710 = vmatpush1.msra.mxu0 0.0
        %2711 = vmatprep.subr.mxu0 0.0
        %2712 = vmatpush1.msra.mxu0 0.0
        %2713 = vmatprep.subr.mxu0 0.0
        %2714 = vmatpush1.msra.mxu0 0.0
        %2715 = vmatprep.subr.mxu0 0.0
        %2716 = vmatpush1.msra.mxu0 0.0
        %2717 = vmatprep.subr.mxu0 0.0
        %2718 = vmatpush1.msra.mxu0 0.0
        %2719 = vmatprep.subr.mxu0 0.0
        %2720 = vmatpush1.msra.mxu0 0.0
        %2721 = vmatprep.subr.mxu0 0.0
        %2722 = vmatpush1.msra.mxu0 0.0
        %2723 = vmatprep.subr.mxu0 0.0
        %2724 = vmatpush1.msra.mxu0 0.0
        %2725 = vmatprep.subr.mxu0 0.0
        %2726 = vmatpush1.msra.mxu0 0.0
        %2727 = vmatprep.subr.mxu0 0.0
        %2728 = vmatpush1.msra.mxu0 0.0
        %2729 = vmatprep.subr.mxu0 0.0
        %2730 = vmatpush1.msra.mxu0 0.0
        %2731 = vmatprep.subr.mxu0 0.0
        %2732 = vmatpush1.msra.mxu0 0.0
        %2733 = vmatprep.subr.mxu0 0.0
        %2734 = vmatpush1.msra.mxu0 0.0
        %2735 = vmatprep.subr.mxu0 0.0
        %2736 = vmatpush1.msra.mxu0 0.0
        %2737 = vmatprep.mubr.f32.mxu0 0.0
        %2738 = vmatmul.mubr.f32.gmra.mrb[0].mxu0 %v2293
        %v2739 = vpop.f32.mrb[0].mxu0
        %v2740 = vadd.f32 0.0, %v2739
        %v2741 = vpop.f32.mrb[0].mxu0
        %2742 = vmatprep.mubr.f32.mxu0 0.0
        %2743 = vmatmul.mubr.f32.gmra.mrb[0].mxu0 %v2296
        %v2744 = vpop.f32.mrb[0].mxu0
        %v2745 = vadd.f32 0.0, %v2744
        %v2746 = vpop.f32.mrb[0].mxu0
        %2747 = vdwg.mxu0
        %2748 = vmatprep.subr.mxu0 0.0
        %2749 = vmatpush1.msra.mxu0 %v600
        %2750 = vmatprep.subr.mxu0 0.0
        %2751 = vmatpush1.msra.mxu0 %v601
        %2752 = vmatprep.subr.mxu0 0.0
        %2753 = vmatpush1.msra.mxu0 0.0
        %2754 = vmatprep.subr.mxu0 0.0
        %2755 = vmatpush1.msra.mxu0 0.0
        %2756 = vmatprep.subr.mxu0 0.0
        %2757 = vmatpush1.msra.mxu0 0.0
        %2758 = vmatprep.subr.mxu0 0.0
        %2759 = vmatpush1.msra.mxu0 0.0
        %2760 = vmatprep.subr.mxu0 0.0
        %2761 = vmatpush1.msra.mxu0 0.0
        %2762 = vmatprep.subr.mxu0 0.0
        %2763 = vmatpush1.msra.mxu0 0.0
        %2764 = vmatprep.subr.mxu0 0.0
        %2765 = vmatpush1.msra.mxu0 0.0
        %2766 = vmatprep.subr.mxu0 0.0
        %2767 = vmatpush1.msra.mxu0 0.0
        %2768 = vmatprep.subr.mxu0 0.0
        %2769 = vmatpush1.msra.mxu0 0.0
        %2770 = vmatprep.subr.mxu0 0.0
        %2771 = vmatpush1.msra.mxu0 0.0
        %2772 = vmatprep.subr.mxu0 0.0
        %2773 = vmatpush1.msra.mxu0 0.0
        %2774 = vmatprep.subr.mxu0 0.0
        %2775 = vmatpush1.msra.mxu0 0.0
        %2776 = vmatprep.subr.mxu0 0.0
        %2777 = vmatpush1.msra.mxu0 0.0
        %2778 = vmatprep.subr.mxu0 0.0
        %2779 = vmatpush1.msra.mxu0 0.0
        %2780 = vmatprep.subr.mxu0 0.0
        %2781 = vmatpush1.msra.mxu0 0.0
        %2782 = vmatprep.subr.mxu0 0.0
        %2783 = vmatpush1.msra.mxu0 0.0
        %2784 = vmatprep.subr.mxu0 0.0
        %2785 = vmatpush1.msra.mxu0 0.0
        %2786 = vmatprep.subr.mxu0 0.0
        %2787 = vmatpush1.msra.mxu0 0.0
        %2788 = vmatprep.subr.mxu0 0.0
        %2789 = vmatpush1.msra.mxu0 0.0
        %2790 = vmatprep.subr.mxu0 0.0
        %2791 = vmatpush1.msra.mxu0 0.0
        %2792 = vmatprep.subr.mxu0 0.0
        %2793 = vmatpush1.msra.mxu0 0.0
        %2794 = vmatprep.subr.mxu0 0.0
        %2795 = vmatpush1.msra.mxu0 0.0
        %2796 = vmatprep.subr.mxu0 0.0
        %2797 = vmatpush1.msra.mxu0 0.0
        %2798 = vmatprep.subr.mxu0 0.0
        %2799 = vmatpush1.msra.mxu0 0.0
        %2800 = vmatprep.subr.mxu0 0.0
        %2801 = vmatpush1.msra.mxu0 0.0
        %2802 = vmatprep.subr.mxu0 0.0
        %2803 = vmatpush1.msra.mxu0 0.0
        %2804 = vmatprep.subr.mxu0 0.0
        %2805 = vmatpush1.msra.mxu0 0.0
        %2806 = vmatprep.subr.mxu0 0.0
        %2807 = vmatpush1.msra.mxu0 0.0
        %2808 = vmatprep.subr.mxu0 0.0
        %2809 = vmatpush1.msra.mxu0 0.0
        %2810 = vmatprep.subr.mxu0 0.0
        %2811 = vmatpush1.msra.mxu0 0.0
        %2812 = vmatprep.mubr.f32.mxu0 0.0
        %2813 = vmatmul.mubr.f32.gmra.mrb[0].mxu0 %v2293
        %v2814 = vpop.f32.mrb[0].mxu0
        %v2815 = vadd.f32 0.0, %v2814
        %v2816 = vpop.f32.mrb[0].mxu0
        %2817 = vmatprep.mubr.f32.mxu0 0.0
        %2818 = vmatmul.mubr.f32.gmra.mrb[0].mxu0 %v2296
        %v2819 = vpop.f32.mrb[0].mxu0
        %v2820 = vadd.f32 0.0, %v2819
        %v2821 = vpop.f32.mrb[0].mxu0
        %2822 = vdwg.mxu0
        %2823 = vmatprep.subr.mxu0 0.0
        %2824 = vmatpush1.msra.mxu0 %v2274
        %2825 = vmatprep.subr.mxu0 0.0
        %2826 = vmatpush1.msra.mxu0 %v2275
        %2827 = vmatprep.subr.mxu0 0.0
        %2828 = vmatpush1.msra.mxu0 0.0
        %2829 = vmatprep.subr.mxu0 0.0
        %2830 = vmatpush1.msra.mxu0 0.0
        %2831 = vmatprep.subr.mxu0 0.0
        %2832 = vmatpush1.msra.mxu0 0.0
        %2833 = vmatprep.subr.mxu0 0.0
        %2834 = vmatpush1.msra.mxu0 0.0
        %2835 = vmatprep.subr.mxu0 0.0
        %2836 = vmatpush1.msra.mxu0 0.0
        %2837 = vmatprep.subr.mxu0 0.0
        %2838 = vmatpush1.msra.mxu0 0.0
        %2839 = vmatprep.subr.mxu0 0.0
        %2840 = vmatpush1.msra.mxu0 0.0
        %2841 = vmatprep.subr.mxu0 0.0
        %2842 = vmatpush1.msra.mxu0 0.0
        %2843 = vmatprep.subr.mxu0 0.0
        %2844 = vmatpush1.msra.mxu0 0.0
        %2845 = vmatprep.subr.mxu0 0.0
        %2846 = vmatpush1.msra.mxu0 0.0
        %2847 = vmatprep.subr.mxu0 0.0
        %2848 = vmatpush1.msra.mxu0 0.0
        %2849 = vmatprep.subr.mxu0 0.0
        %2850 = vmatpush1.msra.mxu0 0.0
        %2851 = vmatprep.subr.mxu0 0.0
        %2852 = vmatpush1.msra.mxu0 0.0
        %2853 = vmatprep.subr.mxu0 0.0
        %2854 = vmatpush1.msra.mxu0 0.0
        %2855 = vmatprep.subr.mxu0 0.0
        %2856 = vmatpush1.msra.mxu0 0.0
        %2857 = vmatprep.subr.mxu0 0.0
        %2858 = vmatpush1.msra.mxu0 0.0
        %2859 = vmatprep.subr.mxu0 0.0
        %2860 = vmatpush1.msra.mxu0 0.0
        %2861 = vmatprep.subr.mxu0 0.0
        %2862 = vmatpush1.msra.mxu0 0.0
        %2863 = vmatprep.subr.mxu0 0.0
        %2864 = vmatpush1.msra.mxu0 0.0
        %2865 = vmatprep.subr.mxu0 0.0
        %2866 = vmatpush1.msra.mxu0 0.0
        %2867 = vmatprep.subr.mxu0 0.0
        %2868 = vmatpush1.msra.mxu0 0.0
        %2869 = vmatprep.subr.mxu0 0.0
        %2870 = vmatpush1.msra.mxu0 0.0
        %2871 = vmatprep.subr.mxu0 0.0
        %2872 = vmatpush1.msra.mxu0 0.0
        %2873 = vmatprep.subr.mxu0 0.0
        %2874 = vmatpush1.msra.mxu0 0.0
        %2875 = vmatprep.subr.mxu0 0.0
        %2876 = vmatpush1.msra.mxu0 0.0
        %2877 = vmatprep.subr.mxu0 0.0
        %2878 = vmatpush1.msra.mxu0 0.0
        %2879 = vmatprep.subr.mxu0 0.0
        %2880 = vmatpush1.msra.mxu0 0.0
        %2881 = vmatprep.subr.mxu0 0.0
        %2882 = vmatpush1.msra.mxu0 0.0
        %2883 = vmatprep.subr.mxu0 0.0
        %2884 = vmatpush1.msra.mxu0 0.0
        %2885 = vmatprep.subr.mxu0 0.0
        %2886 = vmatpush1.msra.mxu0 0.0
        %2887 = vmatprep.mubr.f32.mxu0 0.0
        %2888 = vmatmul.mubr.f32.gmra.mrb[0].mxu0 %v2293
        %v2889 = vpop.f32.mrb[0].mxu0
        %v2890 = vadd.f32 0.0, %v2889
        %v2891 = vpop.f32.mrb[0].mxu0
        %2892 = vmatprep.mubr.f32.mxu0 0.0
        %2893 = vmatmul.mubr.f32.gmra.mrb[0].mxu0 %v2296
        %v2894 = vpop.f32.mrb[0].mxu0
        %v2895 = vadd.f32 0.0, %v2894
        %v2896 = vpop.f32.mrb[0].mxu0
        %2897 = vdwg.mxu0
        %2898 = vmatprep.subr.mxu0 0.0
        %2899 = vmatpush1.msra.mxu0 %v2276
        %2900 = vmatprep.subr.mxu0 0.0
        %2901 = vmatpush1.msra.mxu0 %v2277
        %2902 = vmatprep.subr.mxu0 0.0
        %2903 = vmatpush1.msra.mxu0 0.0
        %2904 = vmatprep.subr.mxu0 0.0
        %2905 = vmatpush1.msra.mxu0 0.0
        %2906 = vmatprep.subr.mxu0 0.0
        %2907 = vmatpush1.msra.mxu0 0.0
        %2908 = vmatprep.subr.mxu0 0.0
        %2909 = vmatpush1.msra.mxu0 0.0
        %2910 = vmatprep.subr.mxu0 0.0
        %2911 = vmatpush1.msra.mxu0 0.0
        %2912 = vmatprep.subr.mxu0 0.0
        %2913 = vmatpush1.msra.mxu0 0.0
        %2914 = vmatprep.subr.mxu0 0.0
        %2915 = vmatpush1.msra.mxu0 0.0
        %2916 = vmatprep.subr.mxu0 0.0
        %2917 = vmatpush1.msra.mxu0 0.0
        %2918 = vmatprep.subr.mxu0 0.0
        %2919 = vmatpush1.msra.mxu0 0.0
        %2920 = vmatprep.subr.mxu0 0.0
        %2921 = vmatpush1.msra.mxu0 0.0
        %2922 = vmatprep.subr.mxu0 0.0
        %2923 = vmatpush1.msra.mxu0 0.0
        %2924 = vmatprep.subr.mxu0 0.0
        %2925 = vmatpush1.msra.mxu0 0.0
        %2926 = vmatprep.subr.mxu0 0.0
        %2927 = vmatpush1.msra.mxu0 0.0
        %2928 = vmatprep.subr.mxu0 0.0
        %2929 = vmatpush1.msra.mxu0 0.0
        %2930 = vmatprep.subr.mxu0 0.0
        %2931 = vmatpush1.msra.mxu0 0.0
        %2932 = vmatprep.subr.mxu0 0.0
        %2933 = vmatpush1.msra.mxu0 0.0
        %2934 = vmatprep.subr.mxu0 0.0
        %2935 = vmatpush1.msra.mxu0 0.0
        %2936 = vmatprep.subr.mxu0 0.0
        %2937 = vmatpush1.msra.mxu0 0.0
        %2938 = vmatprep.subr.mxu0 0.0
        %2939 = vmatpush1.msra.mxu0 0.0
        %2940 = vmatprep.subr.mxu0 0.0
        %2941 = vmatpush1.msra.mxu0 0.0
        %2942 = vmatprep.subr.mxu0 0.0
        %2943 = vmatpush1.msra.mxu0 0.0
        %2944 = vmatprep.subr.mxu0 0.0
        %2945 = vmatpush1.msra.mxu0 0.0
        %2946 = vmatprep.subr.mxu0 0.0
        %2947 = vmatpush1.msra.mxu0 0.0
        %2948 = vmatprep.subr.mxu0 0.0
        %2949 = vmatpush1.msra.mxu0 0.0
        %2950 = vmatprep.subr.mxu0 0.0
        %2951 = vmatpush1.msra.mxu0 0.0
        %2952 = vmatprep.subr.mxu0 0.0
        %2953 = vmatpush1.msra.mxu0 0.0
        %2954 = vmatprep.subr.mxu0 0.0
        %2955 = vmatpush1.msra.mxu0 0.0
        %2956 = vmatprep.subr.mxu0 0.0
        %2957 = vmatpush1.msra.mxu0 0.0
        %2958 = vmatprep.subr.mxu0 0.0
        %2959 = vmatpush1.msra.mxu0 0.0
        %2960 = vmatprep.subr.mxu0 0.0
        %2961 = vmatpush1.msra.mxu0 0.0
        %2962 = vmatprep.mubr.f32.mxu0 0.0
        %2963 = vmatmul.mubr.f32.gmra.mrb[0].mxu0 %v2293
        %v2964 = vpop.f32.mrb[0].mxu0
        %v2965 = vadd.f32 0.0, %v2964
        %v2966 = vpop.f32.mrb[0].mxu0
        %2967 = vmatprep.mubr.f32.mxu0 0.0
        %2968 = vmatmul.mubr.f32.gmra.mrb[0].mxu0 %v2296
        %v2969 = vpop.f32.mrb[0].mxu0
        %v2970 = vadd.f32 0.0, %v2969
        %v2971 = vpop.f32.mrb[0].mxu0
        %2972 = vdwg.mxu0
        %2973 = vmatprep.subr.mxu0 0.0
        %2974 = vmatpush1.msra.mxu0 %v2278
        %2975 = vmatprep.subr.mxu0 0.0
        %2976 = vmatpush1.msra.mxu0 %v2279
        %2977 = vmatprep.subr.mxu0 0.0
        %2978 = vmatpush1.msra.mxu0 0.0
        %2979 = vmatprep.subr.mxu0 0.0
        %2980 = vmatpush1.msra.mxu0 0.0
        %2981 = vmatprep.subr.mxu0 0.0
        %2982 = vmatpush1.msra.mxu0 0.0
        %2983 = vmatprep.subr.mxu0 0.0
        %2984 = vmatpush1.msra.mxu0 0.0
        %2985 = vmatprep.subr.mxu0 0.0
        %2986 = vmatpush1.msra.mxu0 0.0
        %2987 = vmatprep.subr.mxu0 0.0
        %2988 = vmatpush1.msra.mxu0 0.0
        %2989 = vmatprep.subr.mxu0 0.0
        %2990 = vmatpush1.msra.mxu0 0.0
        %2991 = vmatprep.subr.mxu0 0.0
        %2992 = vmatpush1.msra.mxu0 0.0
        %2993 = vmatprep.subr.mxu0 0.0
        %2994 = vmatpush1.msra.mxu0 0.0
        %2995 = vmatprep.subr.mxu0 0.0
        %2996 = vmatpush1.msra.mxu0 0.0
        %2997 = vmatprep.subr.mxu0 0.0
        %2998 = vmatpush1.msra.mxu0 0.0
        %2999 = vmatprep.subr.mxu0 0.0
        %3000 = vmatpush1.msra.mxu0 0.0
        %3001 = vmatprep.subr.mxu0 0.0
        %3002 = vmatpush1.msra.mxu0 0.0
        %3003 = vmatprep.subr.mxu0 0.0
        %3004 = vmatpush1.msra.mxu0 0.0
        %3005 = vmatprep.subr.mxu0 0.0
        %3006 = vmatpush1.msra.mxu0 0.0
        %3007 = vmatprep.subr.mxu0 0.0
        %3008 = vmatpush1.msra.mxu0 0.0
        %3009 = vmatprep.subr.mxu0 0.0
        %3010 = vmatpush1.msra.mxu0 0.0
        %3011 = vmatprep.subr.mxu0 0.0
        %3012 = vmatpush1.msra.mxu0 0.0
        %3013 = vmatprep.subr.mxu0 0.0
        %3014 = vmatpush1.msra.mxu0 0.0
        %3015 = vmatprep.subr.mxu0 0.0
        %3016 = vmatpush1.msra.mxu0 0.0
        %3017 = vmatprep.subr.mxu0 0.0
        %3018 = vmatpush1.msra.mxu0 0.0
        %3019 = vmatprep.subr.mxu0 0.0
        %3020 = vmatpush1.msra.mxu0 0.0
        %3021 = vmatprep.subr.mxu0 0.0
        %3022 = vmatpush1.msra.mxu0 0.0
        %3023 = vmatprep.subr.mxu0 0.0
        %3024 = vmatpush1.msra.mxu0 0.0
        %3025 = vmatprep.subr.mxu0 0.0
        %3026 = vmatpush1.msra.mxu0 0.0
        %3027 = vmatprep.subr.mxu0 0.0
        %3028 = vmatpush1.msra.mxu0 0.0
        %3029 = vmatprep.subr.mxu0 0.0
        %3030 = vmatpush1.msra.mxu0 0.0
        %3031 = vmatprep.subr.mxu0 0.0
        %3032 = vmatpush1.msra.mxu0 0.0
        %3033 = vmatprep.subr.mxu0 0.0
        %3034 = vmatpush1.msra.mxu0 0.0
        %3035 = vmatprep.subr.mxu0 0.0
        %3036 = vmatpush1.msra.mxu0 0.0
        %3037 = vmatprep.mubr.f32.mxu0 0.0
        %3038 = vmatmul.mubr.f32.gmra.mrb[0].mxu0 %v2293
        %v3039 = vpop.f32.mrb[0].mxu0
        %v3040 = vadd.f32 0.0, %v3039
        %v3041 = vpop.f32.mrb[0].mxu0
        %3042 = vmatprep.mubr.f32.mxu0 0.0
        %3043 = vmatmul.mubr.f32.gmra.mrb[0].mxu0 %v2296
        %v3044 = vpop.f32.mrb[0].mxu0
        %v3045 = vadd.f32 0.0, %v3044
        %v3046 = vpop.f32.mrb[0].mxu0
        %3047 = vdwg.mxu0
        %3048 = vmatprep.subr.mxu0 0.0
        %3049 = vmatpush1.msra.mxu0 %v613
        %3050 = vmatprep.subr.mxu0 0.0
        %3051 = vmatpush1.msra.mxu0 %v614
        %3052 = vmatprep.subr.mxu0 0.0
        %3053 = vmatpush1.msra.mxu0 0.0
        %3054 = vmatprep.subr.mxu0 0.0
        %3055 = vmatpush1.msra.mxu0 0.0
        %3056 = vmatprep.subr.mxu0 0.0
        %3057 = vmatpush1.msra.mxu0 0.0
        %3058 = vmatprep.subr.mxu0 0.0
        %3059 = vmatpush1.msra.mxu0 0.0
        %3060 = vmatprep.subr.mxu0 0.0
        %3061 = vmatpush1.msra.mxu0 0.0
        %3062 = vmatprep.subr.mxu0 0.0
        %3063 = vmatpush1.msra.mxu0 0.0
        %3064 = vmatprep.subr.mxu0 0.0
        %3065 = vmatpush1.msra.mxu0 0.0
        %3066 = vmatprep.subr.mxu0 0.0
        %3067 = vmatpush1.msra.mxu0 0.0
        %3068 = vmatprep.subr.mxu0 0.0
        %3069 = vmatpush1.msra.mxu0 0.0
        %3070 = vmatprep.subr.mxu0 0.0
        %3071 = vmatpush1.msra.mxu0 0.0
        %3072 = vmatprep.subr.mxu0 0.0
        %3073 = vmatpush1.msra.mxu0 0.0
        %3074 = vmatprep.subr.mxu0 0.0
        %3075 = vmatpush1.msra.mxu0 0.0
        %3076 = vmatprep.subr.mxu0 0.0
        %3077 = vmatpush1.msra.mxu0 0.0
        %3078 = vmatprep.subr.mxu0 0.0
        %3079 = vmatpush1.msra.mxu0 0.0
        %3080 = vmatprep.subr.mxu0 0.0
        %3081 = vmatpush1.msra.mxu0 0.0
        %3082 = vmatprep.subr.mxu0 0.0
        %3083 = vmatpush1.msra.mxu0 0.0
        %3084 = vmatprep.subr.mxu0 0.0
        %3085 = vmatpush1.msra.mxu0 0.0
        %3086 = vmatprep.subr.mxu0 0.0
        %3087 = vmatpush1.msra.mxu0 0.0
        %3088 = vmatprep.subr.mxu0 0.0
        %3089 = vmatpush1.msra.mxu0 0.0
        %3090 = vmatprep.subr.mxu0 0.0
        %3091 = vmatpush1.msra.mxu0 0.0
        %3092 = vmatprep.subr.mxu0 0.0
        %3093 = vmatpush1.msra.mxu0 0.0
        %3094 = vmatprep.subr.mxu0 0.0
        %3095 = vmatpush1.msra.mxu0 0.0
        %3096 = vmatprep.subr.mxu0 0.0
        %3097 = vmatpush1.msra.mxu0 0.0
        %3098 = vmatprep.subr.mxu0 0.0
        %3099 = vmatpush1.msra.mxu0 0.0
        %3100 = vmatprep.subr.mxu0 0.0
        %3101 = vmatpush1.msra.mxu0 0.0
        %3102 = vmatprep.subr.mxu0 0.0
        %3103 = vmatpush1.msra.mxu0 0.0
        %3104 = vmatprep.subr.mxu0 0.0
        %3105 = vmatpush1.msra.mxu0 0.0
        %3106 = vmatprep.subr.mxu0 0.0
        %3107 = vmatpush1.msra.mxu0 0.0
        %3108 = vmatprep.subr.mxu0 0.0
        %3109 = vmatpush1.msra.mxu0 0.0
        %3110 = vmatprep.subr.mxu0 0.0
        %3111 = vmatpush1.msra.mxu0 0.0
        %3112 = vmatprep.mubr.f32.mxu0 0.0
        %3113 = vmatmul.mubr.f32.gmra.mrb[0].mxu0 %v2293
        %v3114 = vpop.f32.mrb[0].mxu0
        %v3115 = vadd.f32 0.0, %v3114
        %v3116 = vpop.f32.mrb[0].mxu0
        %3117 = vmatprep.mubr.f32.mxu0 0.0
        %3118 = vmatmul.mubr.f32.gmra.mrb[0].mxu0 %v2296
        %v3119 = vpop.f32.mrb[0].mxu0
        %v3120 = vadd.f32 0.0, %v3119
        %v3121 = vpop.f32.mrb[0].mxu0
        %3122 = vdwg.mxu0
        %3123 = vmatprep.subr.mxu0 0.0
        %3124 = vmatpush1.msra.mxu0 %v611
        %3125 = vmatprep.subr.mxu0 0.0
        %3126 = vmatpush1.msra.mxu0 %v612
        %3127 = vmatprep.subr.mxu0 0.0
        %3128 = vmatpush1.msra.mxu0 0.0
        %3129 = vmatprep.subr.mxu0 0.0
        %3130 = vmatpush1.msra.mxu0 0.0
        %3131 = vmatprep.subr.mxu0 0.0
        %3132 = vmatpush1.msra.mxu0 0.0
        %3133 = vmatprep.subr.mxu0 0.0
        %3134 = vmatpush1.msra.mxu0 0.0
        %3135 = vmatprep.subr.mxu0 0.0
        %3136 = vmatpush1.msra.mxu0 0.0
        %3137 = vmatprep.subr.mxu0 0.0
        %3138 = vmatpush1.msra.mxu0 0.0
        %3139 = vmatprep.subr.mxu0 0.0
        %3140 = vmatpush1.msra.mxu0 0.0
        %3141 = vmatprep.subr.mxu0 0.0
        %3142 = vmatpush1.msra.mxu0 0.0
        %3143 = vmatprep.subr.mxu0 0.0
        %3144 = vmatpush1.msra.mxu0 0.0
        %3145 = vmatprep.subr.mxu0 0.0
        %3146 = vmatpush1.msra.mxu0 0.0
        %3147 = vmatprep.subr.mxu0 0.0
        %3148 = vmatpush1.msra.mxu0 0.0
        %3149 = vmatprep.subr.mxu0 0.0
        %3150 = vmatpush1.msra.mxu0 0.0
        %3151 = vmatprep.subr.mxu0 0.0
        %3152 = vmatpush1.msra.mxu0 0.0
        %3153 = vmatprep.subr.mxu0 0.0
        %3154 = vmatpush1.msra.mxu0 0.0
        %3155 = vmatprep.subr.mxu0 0.0
        %3156 = vmatpush1.msra.mxu0 0.0
        %3157 = vmatprep.subr.mxu0 0.0
        %3158 = vmatpush1.msra.mxu0 0.0
        %3159 = vmatprep.subr.mxu0 0.0
        %3160 = vmatpush1.msra.mxu0 0.0
        %3161 = vmatprep.subr.mxu0 0.0
        %3162 = vmatpush1.msra.mxu0 0.0
        %3163 = vmatprep.subr.mxu0 0.0
        %3164 = vmatpush1.msra.mxu0 0.0
        %3165 = vmatprep.subr.mxu0 0.0
        %3166 = vmatpush1.msra.mxu0 0.0
        %3167 = vmatprep.subr.mxu0 0.0
        %3168 = vmatpush1.msra.mxu0 0.0
        %3169 = vmatprep.subr.mxu0 0.0
        %3170 = vmatpush1.msra.mxu0 0.0
        %3171 = vmatprep.subr.mxu0 0.0
        %3172 = vmatpush1.msra.mxu0 0.0
        %3173 = vmatprep.subr.mxu0 0.0
        %3174 = vmatpush1.msra.mxu0 0.0
        %3175 = vmatprep.subr.mxu0 0.0
        %3176 = vmatpush1.msra.mxu0 0.0
        %3177 = vmatprep.subr.mxu0 0.0
        %3178 = vmatpush1.msra.mxu0 0.0
        %3179 = vmatprep.subr.mxu0 0.0
        %3180 = vmatpush1.msra.mxu0 0.0
        %3181 = vmatprep.subr.mxu0 0.0
        %3182 = vmatpush1.msra.mxu0 0.0
        %3183 = vmatprep.subr.mxu0 0.0
        %3184 = vmatpush1.msra.mxu0 0.0
        %3185 = vmatprep.subr.mxu0 0.0
        %3186 = vmatpush1.msra.mxu0 0.0
        %3187 = vmatprep.mubr.f32.mxu0 0.0
        %3188 = vmatmul.mubr.f32.gmra.mrb[0].mxu0 %v2293
        %v3189 = vpop.f32.mrb[0].mxu0
        %v3190 = vadd.f32 0.0, %v3189
        %v3191 = vpop.f32.mrb[0].mxu0
        %3192 = vmatprep.mubr.f32.mxu0 0.0
        %3193 = vmatmul.mubr.f32.gmra.mrb[0].mxu0 %v2296
        %v3194 = vpop.f32.mrb[0].mxu0
        %v3195 = vadd.f32 0.0, %v3194
        %v3196 = vpop.f32.mrb[0].mxu0
        %3197 = vdwg.mxu0
        %3198 = vmatprep.subr.mxu0 0.0
        %3199 = vmatpush1.msra.mxu0 %v2280
        %3200 = vmatprep.subr.mxu0 0.0
        %3201 = vmatpush1.msra.mxu0 %v2281
        %3202 = vmatprep.subr.mxu0 0.0
        %3203 = vmatpush1.msra.mxu0 0.0
        %3204 = vmatprep.subr.mxu0 0.0
        %3205 = vmatpush1.msra.mxu0 0.0
        %3206 = vmatprep.subr.mxu0 0.0
        %3207 = vmatpush1.msra.mxu0 0.0
        %3208 = vmatprep.subr.mxu0 0.0
        %3209 = vmatpush1.msra.mxu0 0.0
        %3210 = vmatprep.subr.mxu0 0.0
        %3211 = vmatpush1.msra.mxu0 0.0
        %3212 = vmatprep.subr.mxu0 0.0
        %3213 = vmatpush1.msra.mxu0 0.0
        %3214 = vmatprep.subr.mxu0 0.0
        %3215 = vmatpush1.msra.mxu0 0.0
        %3216 = vmatprep.subr.mxu0 0.0
        %3217 = vmatpush1.msra.mxu0 0.0
        %3218 = vmatprep.subr.mxu0 0.0
        %3219 = vmatpush1.msra.mxu0 0.0
        %3220 = vmatprep.subr.mxu0 0.0
        %3221 = vmatpush1.msra.mxu0 0.0
        %3222 = vmatprep.subr.mxu0 0.0
        %3223 = vmatpush1.msra.mxu0 0.0
        %3224 = vmatprep.subr.mxu0 0.0
        %3225 = vmatpush1.msra.mxu0 0.0
        %3226 = vmatprep.subr.mxu0 0.0
        %3227 = vmatpush1.msra.mxu0 0.0
        %3228 = vmatprep.subr.mxu0 0.0
        %3229 = vmatpush1.msra.mxu0 0.0
        %3230 = vmatprep.subr.mxu0 0.0
        %3231 = vmatpush1.msra.mxu0 0.0
        %3232 = vmatprep.subr.mxu0 0.0
        %3233 = vmatpush1.msra.mxu0 0.0
        %3234 = vmatprep.subr.mxu0 0.0
        %3235 = vmatpush1.msra.mxu0 0.0
        %3236 = vmatprep.subr.mxu0 0.0
        %3237 = vmatpush1.msra.mxu0 0.0
        %3238 = vmatprep.subr.mxu0 0.0
        %3239 = vmatpush1.msra.mxu0 0.0
        %3240 = vmatprep.subr.mxu0 0.0
        %3241 = vmatpush1.msra.mxu0 0.0
        %3242 = vmatprep.subr.mxu0 0.0
        %3243 = vmatpush1.msra.mxu0 0.0
        %3244 = vmatprep.subr.mxu0 0.0
        %3245 = vmatpush1.msra.mxu0 0.0
        %3246 = vmatprep.subr.mxu0 0.0
        %3247 = vmatpush1.msra.mxu0 0.0
        %3248 = vmatprep.subr.mxu0 0.0
        %3249 = vmatpush1.msra.mxu0 0.0
        %3250 = vmatprep.subr.mxu0 0.0
        %3251 = vmatpush1.msra.mxu0 0.0
        %3252 = vmatprep.subr.mxu0 0.0
        %3253 = vmatpush1.msra.mxu0 0.0
        %3254 = vmatprep.subr.mxu0 0.0
        %3255 = vmatpush1.msra.mxu0 0.0
        %3256 = vmatprep.subr.mxu0 0.0
        %3257 = vmatpush1.msra.mxu0 0.0
        %3258 = vmatprep.subr.mxu0 0.0
        %3259 = vmatpush1.msra.mxu0 0.0
        %3260 = vmatprep.subr.mxu0 0.0
        %3261 = vmatpush1.msra.mxu0 0.0
        %3262 = vmatprep.mubr.f32.mxu0 0.0
        %3263 = vmatmul.mubr.f32.gmra.mrb[0].mxu0 %v2293
        %v3264 = vpop.f32.mrb[0].mxu0
        %v3265 = vadd.f32 0.0, %v3264
        %v3266 = vpop.f32.mrb[0].mxu0
        %3267 = vmatprep.mubr.f32.mxu0 0.0
        %3268 = vmatmul.mubr.f32.gmra.mrb[0].mxu0 %v2296
        %v3269 = vpop.f32.mrb[0].mxu0
        %v3270 = vadd.f32 0.0, %v3269
        %v3271 = vpop.f32.mrb[0].mxu0
        %3272 = vdwg.mxu0
        %3273 = vmatprep.subr.mxu0 0.0
        %3274 = vmatpush1.msra.mxu0 %v2282
        %3275 = vmatprep.subr.mxu0 0.0
        %3276 = vmatpush1.msra.mxu0 %v2283
        %3277 = vmatprep.subr.mxu0 0.0
        %3278 = vmatpush1.msra.mxu0 0.0
        %3279 = vmatprep.subr.mxu0 0.0
        %3280 = vmatpush1.msra.mxu0 0.0
        %3281 = vmatprep.subr.mxu0 0.0
        %3282 = vmatpush1.msra.mxu0 0.0
        %3283 = vmatprep.subr.mxu0 0.0
        %3284 = vmatpush1.msra.mxu0 0.0
        %3285 = vmatprep.subr.mxu0 0.0
        %3286 = vmatpush1.msra.mxu0 0.0
        %3287 = vmatprep.subr.mxu0 0.0
        %3288 = vmatpush1.msra.mxu0 0.0
        %3289 = vmatprep.subr.mxu0 0.0
        %3290 = vmatpush1.msra.mxu0 0.0
        %3291 = vmatprep.subr.mxu0 0.0
        %3292 = vmatpush1.msra.mxu0 0.0
        %3293 = vmatprep.subr.mxu0 0.0
        %3294 = vmatpush1.msra.mxu0 0.0
        %3295 = vmatprep.subr.mxu0 0.0
        %3296 = vmatpush1.msra.mxu0 0.0
        %3297 = vmatprep.subr.mxu0 0.0
        %3298 = vmatpush1.msra.mxu0 0.0
        %3299 = vmatprep.subr.mxu0 0.0
        %3300 = vmatpush1.msra.mxu0 0.0
        %3301 = vmatprep.subr.mxu0 0.0
        %3302 = vmatpush1.msra.mxu0 0.0
        %3303 = vmatprep.subr.mxu0 0.0
        %3304 = vmatpush1.msra.mxu0 0.0
        %3305 = vmatprep.subr.mxu0 0.0
        %3306 = vmatpush1.msra.mxu0 0.0
        %3307 = vmatprep.subr.mxu0 0.0
        %3308 = vmatpush1.msra.mxu0 0.0
        %3309 = vmatprep.subr.mxu0 0.0
        %3310 = vmatpush1.msra.mxu0 0.0
        %3311 = vmatprep.subr.mxu0 0.0
        %3312 = vmatpush1.msra.mxu0 0.0
        %3313 = vmatprep.subr.mxu0 0.0
        %3314 = vmatpush1.msra.mxu0 0.0
        %3315 = vmatprep.subr.mxu0 0.0
        %3316 = vmatpush1.msra.mxu0 0.0
        %3317 = vmatprep.subr.mxu0 0.0
        %3318 = vmatpush1.msra.mxu0 0.0
        %3319 = vmatprep.subr.mxu0 0.0
        %3320 = vmatpush1.msra.mxu0 0.0
        %3321 = vmatprep.subr.mxu0 0.0
        %3322 = vmatpush1.msra.mxu0 0.0
        %3323 = vmatprep.subr.mxu0 0.0
        %3324 = vmatpush1.msra.mxu0 0.0
        %3325 = vmatprep.subr.mxu0 0.0
        %3326 = vmatpush1.msra.mxu0 0.0
        %3327 = vmatprep.subr.mxu0 0.0
        %3328 = vmatpush1.msra.mxu0 0.0
        %3329 = vmatprep.subr.mxu0 0.0
        %3330 = vmatpush1.msra.mxu0 0.0
        %3331 = vmatprep.subr.mxu0 0.0
        %3332 = vmatpush1.msra.mxu0 0.0
        %3333 = vmatprep.subr.mxu0 0.0
        %3334 = vmatpush1.msra.mxu0 0.0
        %3335 = vmatprep.subr.mxu0 0.0
        %3336 = vmatpush1.msra.mxu0 0.0
        %3337 = vmatprep.mubr.f32.mxu0 0.0
        %3338 = vmatmul.mubr.f32.gmra.mrb[0].mxu0 %v2293
        %v3339 = vpop.f32.mrb[0].mxu0
        %v3340 = vadd.f32 0.0, %v3339
        %v3341 = vpop.f32.mrb[0].mxu0
        %3342 = vmatprep.mubr.f32.mxu0 0.0
        %3343 = vmatmul.mubr.f32.gmra.mrb[0].mxu0 %v2296
        %v3344 = vpop.f32.mrb[0].mxu0
        %v3345 = vadd.f32 0.0, %v3344
        %v3346 = vpop.f32.mrb[0].mxu0
        %3347 = vdwg.mxu0
        %3348 = vmatprep.subr.mxu0 0.0
        %3349 = vmatpush1.msra.mxu0 %v2284
        %3350 = vmatprep.subr.mxu0 0.0
        %3351 = vmatpush1.msra.mxu0 %v2285
        %3352 = vmatprep.subr.mxu0 0.0
        %3353 = vmatpush1.msra.mxu0 0.0
        %3354 = vmatprep.subr.mxu0 0.0
        %3355 = vmatpush1.msra.mxu0 0.0
        %3356 = vmatprep.subr.mxu0 0.0
        %3357 = vmatpush1.msra.mxu0 0.0
        %3358 = vmatprep.subr.mxu0 0.0
        %3359 = vmatpush1.msra.mxu0 0.0
        %3360 = vmatprep.subr.mxu0 0.0
        %3361 = vmatpush1.msra.mxu0 0.0
        %3362 = vmatprep.subr.mxu0 0.0
        %3363 = vmatpush1.msra.mxu0 0.0
        %3364 = vmatprep.subr.mxu0 0.0
        %3365 = vmatpush1.msra.mxu0 0.0
        %3366 = vmatprep.subr.mxu0 0.0
        %3367 = vmatpush1.msra.mxu0 0.0
        %3368 = vmatprep.subr.mxu0 0.0
        %3369 = vmatpush1.msra.mxu0 0.0
        %3370 = vmatprep.subr.mxu0 0.0
        %3371 = vmatpush1.msra.mxu0 0.0
        %3372 = vmatprep.subr.mxu0 0.0
        %3373 = vmatpush1.msra.mxu0 0.0
        %3374 = vmatprep.subr.mxu0 0.0
        %3375 = vmatpush1.msra.mxu0 0.0
        %3376 = vmatprep.subr.mxu0 0.0
        %3377 = vmatpush1.msra.mxu0 0.0
        %3378 = vmatprep.subr.mxu0 0.0
        %3379 = vmatpush1.msra.mxu0 0.0
        %3380 = vmatprep.subr.mxu0 0.0
        %3381 = vmatpush1.msra.mxu0 0.0
        %3382 = vmatprep.subr.mxu0 0.0
        %3383 = vmatpush1.msra.mxu0 0.0
        %3384 = vmatprep.subr.mxu0 0.0
        %3385 = vmatpush1.msra.mxu0 0.0
        %3386 = vmatprep.subr.mxu0 0.0
        %3387 = vmatpush1.msra.mxu0 0.0
        %3388 = vmatprep.subr.mxu0 0.0
        %3389 = vmatpush1.msra.mxu0 0.0
        %3390 = vmatprep.subr.mxu0 0.0
        %3391 = vmatpush1.msra.mxu0 0.0
        %3392 = vmatprep.subr.mxu0 0.0
        %3393 = vmatpush1.msra.mxu0 0.0
        %3394 = vmatprep.subr.mxu0 0.0
        %3395 = vmatpush1.msra.mxu0 0.0
        %3396 = vmatprep.subr.mxu0 0.0
        %3397 = vmatpush1.msra.mxu0 0.0
        %3398 = vmatprep.subr.mxu0 0.0
        %3399 = vmatpush1.msra.mxu0 0.0
        %3400 = vmatprep.subr.mxu0 0.0
        %3401 = vmatpush1.msra.mxu0 0.0
        %3402 = vmatprep.subr.mxu0 0.0
        %3403 = vmatpush1.msra.mxu0 0.0
        %3404 = vmatprep.subr.mxu0 0.0
        %3405 = vmatpush1.msra.mxu0 0.0
        %3406 = vmatprep.subr.mxu0 0.0
        %3407 = vmatpush1.msra.mxu0 0.0
        %3408 = vmatprep.subr.mxu0 0.0
        %3409 = vmatpush1.msra.mxu0 0.0
        %3410 = vmatprep.subr.mxu0 0.0
        %3411 = vmatpush1.msra.mxu0 0.0
        %3412 = vmatprep.mubr.f32.mxu0 0.0
        %3413 = vmatmul.mubr.f32.gmra.mrb[0].mxu0 %v2293
        %v3414 = vpop.f32.mrb[0].mxu0
        %v3415 = vadd.f32 0.0, %v3414
        %v3416 = vpop.f32.mrb[0].mxu0
        %3417 = vmatprep.mubr.f32.mxu0 0.0
        %3418 = vmatmul.mubr.f32.gmra.mrb[0].mxu0 %v2296
        %v3419 = vpop.f32.mrb[0].mxu0
        %v3420 = vadd.f32 0.0, %v3419
        %v3421 = vpop.f32.mrb[0].mxu0
        %3422 = vdwg.mxu0
        %3423 = vmatprep.subr.mxu0 0.0
        %3424 = vmatpush1.msra.mxu0 %v624
        %3425 = vmatprep.subr.mxu0 0.0
        %3426 = vmatpush1.msra.mxu0 %v625
        %3427 = vmatprep.subr.mxu0 0.0
        %3428 = vmatpush1.msra.mxu0 0.0
        %3429 = vmatprep.subr.mxu0 0.0
        %3430 = vmatpush1.msra.mxu0 0.0
        %3431 = vmatprep.subr.mxu0 0.0
        %3432 = vmatpush1.msra.mxu0 0.0
        %3433 = vmatprep.subr.mxu0 0.0
        %3434 = vmatpush1.msra.mxu0 0.0
        %3435 = vmatprep.subr.mxu0 0.0
        %3436 = vmatpush1.msra.mxu0 0.0
        %3437 = vmatprep.subr.mxu0 0.0
        %3438 = vmatpush1.msra.mxu0 0.0
        %3439 = vmatprep.subr.mxu0 0.0
        %3440 = vmatpush1.msra.mxu0 0.0
        %3441 = vmatprep.subr.mxu0 0.0
        %3442 = vmatpush1.msra.mxu0 0.0
        %3443 = vmatprep.subr.mxu0 0.0
        %3444 = vmatpush1.msra.mxu0 0.0
        %3445 = vmatprep.subr.mxu0 0.0
        %3446 = vmatpush1.msra.mxu0 0.0
        %3447 = vmatprep.subr.mxu0 0.0
        %3448 = vmatpush1.msra.mxu0 0.0
        %3449 = vmatprep.subr.mxu0 0.0
        %3450 = vmatpush1.msra.mxu0 0.0
        %3451 = vmatprep.subr.mxu0 0.0
        %3452 = vmatpush1.msra.mxu0 0.0
        %3453 = vmatprep.subr.mxu0 0.0
        %3454 = vmatpush1.msra.mxu0 0.0
        %3455 = vmatprep.subr.mxu0 0.0
        %3456 = vmatpush1.msra.mxu0 0.0
        %3457 = vmatprep.subr.mxu0 0.0
        %3458 = vmatpush1.msra.mxu0 0.0
        %3459 = vmatprep.subr.mxu0 0.0
        %3460 = vmatpush1.msra.mxu0 0.0
        %3461 = vmatprep.subr.mxu0 0.0
        %3462 = vmatpush1.msra.mxu0 0.0
        %3463 = vmatprep.subr.mxu0 0.0
        %3464 = vmatpush1.msra.mxu0 0.0
        %3465 = vmatprep.subr.mxu0 0.0
        %3466 = vmatpush1.msra.mxu0 0.0
        %3467 = vmatprep.subr.mxu0 0.0
        %3468 = vmatpush1.msra.mxu0 0.0
        %3469 = vmatprep.subr.mxu0 0.0
        %3470 = vmatpush1.msra.mxu0 0.0
        %3471 = vmatprep.subr.mxu0 0.0
        %3472 = vmatpush1.msra.mxu0 0.0
        %3473 = vmatprep.subr.mxu0 0.0
        %3474 = vmatpush1.msra.mxu0 0.0
        %3475 = vmatprep.subr.mxu0 0.0
        %3476 = vmatpush1.msra.mxu0 0.0
        %3477 = vmatprep.subr.mxu0 0.0
        %3478 = vmatpush1.msra.mxu0 0.0
        %3479 = vmatprep.subr.mxu0 0.0
        %3480 = vmatpush1.msra.mxu0 0.0
        %3481 = vmatprep.subr.mxu0 0.0
        %3482 = vmatpush1.msra.mxu0 0.0
        %3483 = vmatprep.subr.mxu0 0.0
        %3484 = vmatpush1.msra.mxu0 0.0
        %3485 = vmatprep.subr.mxu0 0.0
        %3486 = vmatpush1.msra.mxu0 0.0
        %3487 = vmatprep.mubr.f32.mxu0 0.0
        %3488 = vmatmul.mubr.f32.gmra.mrb[0].mxu0 %v2293
        %v3489 = vpop.f32.mrb[0].mxu0
        %v3490 = vadd.f32 0.0, %v3489
        %v3491 = vpop.f32.mrb[0].mxu0
        %3492 = vmatprep.mubr.f32.mxu0 0.0
        %3493 = vmatmul.mubr.f32.gmra.mrb[0].mxu0 %v2296
        %v3494 = vpop.f32.mrb[0].mxu0
        %v3495 = vadd.f32 0.0, %v3494
        %v3496 = vpop.f32.mrb[0].mxu0
        %3497 = vdwg.mxu0
        %3498 = vmatprep.subr.mxu0 0.0
        %3499 = vmatpush1.msra.mxu0 %v622
        %3500 = vmatprep.subr.mxu0 0.0
        %3501 = vmatpush1.msra.mxu0 %v623
        %3502 = vmatprep.subr.mxu0 0.0
        %3503 = vmatpush1.msra.mxu0 0.0
        %3504 = vmatprep.subr.mxu0 0.0
        %3505 = vmatpush1.msra.mxu0 0.0
        %3506 = vmatprep.subr.mxu0 0.0
        %3507 = vmatpush1.msra.mxu0 0.0
        %3508 = vmatprep.subr.mxu0 0.0
        %3509 = vmatpush1.msra.mxu0 0.0
        %3510 = vmatprep.subr.mxu0 0.0
        %3511 = vmatpush1.msra.mxu0 0.0
        %3512 = vmatprep.subr.mxu0 0.0
        %3513 = vmatpush1.msra.mxu0 0.0
        %3514 = vmatprep.subr.mxu0 0.0
        %3515 = vmatpush1.msra.mxu0 0.0
        %3516 = vmatprep.subr.mxu0 0.0
        %3517 = vmatpush1.msra.mxu0 0.0
        %3518 = vmatprep.subr.mxu0 0.0
        %3519 = vmatpush1.msra.mxu0 0.0
        %3520 = vmatprep.subr.mxu0 0.0
        %3521 = vmatpush1.msra.mxu0 0.0
        %3522 = vmatprep.subr.mxu0 0.0
        %3523 = vmatpush1.msra.mxu0 0.0
        %3524 = vmatprep.subr.mxu0 0.0
        %3525 = vmatpush1.msra.mxu0 0.0
        %3526 = vmatprep.subr.mxu0 0.0
        %3527 = vmatpush1.msra.mxu0 0.0
        %3528 = vmatprep.subr.mxu0 0.0
        %3529 = vmatpush1.msra.mxu0 0.0
        %3530 = vmatprep.subr.mxu0 0.0
        %3531 = vmatpush1.msra.mxu0 0.0
        %3532 = vmatprep.subr.mxu0 0.0
        %3533 = vmatpush1.msra.mxu0 0.0
        %3534 = vmatprep.subr.mxu0 0.0
        %3535 = vmatpush1.msra.mxu0 0.0
        %3536 = vmatprep.subr.mxu0 0.0
        %3537 = vmatpush1.msra.mxu0 0.0
        %3538 = vmatprep.subr.mxu0 0.0
        %3539 = vmatpush1.msra.mxu0 0.0
        %3540 = vmatprep.subr.mxu0 0.0
        %3541 = vmatpush1.msra.mxu0 0.0
        %3542 = vmatprep.subr.mxu0 0.0
        %3543 = vmatpush1.msra.mxu0 0.0
        %3544 = vmatprep.subr.mxu0 0.0
        %3545 = vmatpush1.msra.mxu0 0.0
        %3546 = vmatprep.subr.mxu0 0.0
        %3547 = vmatpush1.msra.mxu0 0.0
        %3548 = vmatprep.subr.mxu0 0.0
        %3549 = vmatpush1.msra.mxu0 0.0
        %3550 = vmatprep.subr.mxu0 0.0
        %3551 = vmatpush1.msra.mxu0 0.0
        %3552 = vmatprep.subr.mxu0 0.0
        %3553 = vmatpush1.msra.mxu0 0.0
        %3554 = vmatprep.subr.mxu0 0.0
        %3555 = vmatpush1.msra.mxu0 0.0
        %3556 = vmatprep.subr.mxu0 0.0
        %3557 = vmatpush1.msra.mxu0 0.0
        %3558 = vmatprep.subr.mxu0 0.0
        %3559 = vmatpush1.msra.mxu0 0.0
        %3560 = vmatprep.subr.mxu0 0.0
        %3561 = vmatpush1.msra.mxu0 0.0
        %3562 = vmatprep.mubr.f32.mxu0 0.0
        %3563 = vmatmul.mubr.f32.gmra.mrb[0].mxu0 %v2293
        %v3564 = vpop.f32.mrb[0].mxu0
        %v3565 = vadd.f32 0.0, %v3564
        %v3566 = vpop.f32.mrb[0].mxu0
        %3567 = vmatprep.mubr.f32.mxu0 0.0
        %3568 = vmatmul.mubr.f32.gmra.mrb[0].mxu0 %v2296
        %v3569 = vpop.f32.mrb[0].mxu0
        %v3570 = vadd.f32 0.0, %v3569
        %v3571 = vpop.f32.mrb[0].mxu0
        %3572 = vdwg.mxu0
        %3573 = vmatprep.subr.mxu0 0.0
        %3574 = vmatpush1.msra.mxu0 %v2286
        %3575 = vmatprep.subr.mxu0 0.0
        %3576 = vmatpush1.msra.mxu0 %v2287
        %3577 = vmatprep.subr.mxu0 0.0
        %3578 = vmatpush1.msra.mxu0 0.0
        %3579 = vmatprep.subr.mxu0 0.0
        %3580 = vmatpush1.msra.mxu0 0.0
        %3581 = vmatprep.subr.mxu0 0.0
        %3582 = vmatpush1.msra.mxu0 0.0
        %3583 = vmatprep.subr.mxu0 0.0
        %3584 = vmatpush1.msra.mxu0 0.0
        %3585 = vmatprep.subr.mxu0 0.0
        %3586 = vmatpush1.msra.mxu0 0.0
        %3587 = vmatprep.subr.mxu0 0.0
        %3588 = vmatpush1.msra.mxu0 0.0
        %3589 = vmatprep.subr.mxu0 0.0
        %3590 = vmatpush1.msra.mxu0 0.0
        %3591 = vmatprep.subr.mxu0 0.0
        %3592 = vmatpush1.msra.mxu0 0.0
        %3593 = vmatprep.subr.mxu0 0.0
        %3594 = vmatpush1.msra.mxu0 0.0
        %3595 = vmatprep.subr.mxu0 0.0
        %3596 = vmatpush1.msra.mxu0 0.0
        %3597 = vmatprep.subr.mxu0 0.0
        %3598 = vmatpush1.msra.mxu0 0.0
        %3599 = vmatprep.subr.mxu0 0.0
        %3600 = vmatpush1.msra.mxu0 0.0
        %3601 = vmatprep.subr.mxu0 0.0
        %3602 = vmatpush1.msra.mxu0 0.0
        %3603 = vmatprep.subr.mxu0 0.0
        %3604 = vmatpush1.msra.mxu0 0.0
        %3605 = vmatprep.subr.mxu0 0.0
        %3606 = vmatpush1.msra.mxu0 0.0
        %3607 = vmatprep.subr.mxu0 0.0
        %3608 = vmatpush1.msra.mxu0 0.0
        %3609 = vmatprep.subr.mxu0 0.0
        %3610 = vmatpush1.msra.mxu0 0.0
        %3611 = vmatprep.subr.mxu0 0.0
        %3612 = vmatpush1.msra.mxu0 0.0
        %3613 = vmatprep.subr.mxu0 0.0
        %3614 = vmatpush1.msra.mxu0 0.0
        %3615 = vmatprep.subr.mxu0 0.0
        %3616 = vmatpush1.msra.mxu0 0.0
        %3617 = vmatprep.subr.mxu0 0.0
        %3618 = vmatpush1.msra.mxu0 0.0
        %3619 = vmatprep.subr.mxu0 0.0
        %3620 = vmatpush1.msra.mxu0 0.0
        %3621 = vmatprep.subr.mxu0 0.0
        %3622 = vmatpush1.msra.mxu0 0.0
        %3623 = vmatprep.subr.mxu0 0.0
        %3624 = vmatpush1.msra.mxu0 0.0
        %3625 = vmatprep.subr.mxu0 0.0
        %3626 = vmatpush1.msra.mxu0 0.0
        %3627 = vmatprep.subr.mxu0 0.0
        %3628 = vmatpush1.msra.mxu0 0.0
        %3629 = vmatprep.subr.mxu0 0.0
        %3630 = vmatpush1.msra.mxu0 0.0
        %3631 = vmatprep.subr.mxu0 0.0
        %3632 = vmatpush1.msra.mxu0 0.0
        %3633 = vmatprep.subr.mxu0 0.0
        %3634 = vmatpush1.msra.mxu0 0.0
        %3635 = vmatprep.subr.mxu0 0.0
        %3636 = vmatpush1.msra.mxu0 0.0
        %3637 = vmatprep.mubr.f32.mxu0 0.0
        %3638 = vmatmul.mubr.f32.gmra.mrb[0].mxu0 %v2293
        %v3639 = vpop.f32.mrb[0].mxu0
        %v3640 = vadd.f32 0.0, %v3639
        %v3641 = vpop.f32.mrb[0].mxu0
        %3642 = vmatprep.mubr.f32.mxu0 0.0
        %3643 = vmatmul.mubr.f32.gmra.mrb[0].mxu0 %v2296
        %v3644 = vpop.f32.mrb[0].mxu0
        %v3645 = vadd.f32 0.0, %v3644
        %v3646 = vpop.f32.mrb[0].mxu0
        %3647 = vdwg.mxu0
        %3648 = vmatprep.subr.mxu0 0.0
        %3649 = vmatpush1.msra.mxu0 %v2288
        %3650 = vmatprep.subr.mxu0 0.0
        %3651 = vmatpush1.msra.mxu0 %v2289
        %3652 = vmatprep.subr.mxu0 0.0
        %3653 = vmatpush1.msra.mxu0 0.0
        %3654 = vmatprep.subr.mxu0 0.0
        %3655 = vmatpush1.msra.mxu0 0.0
        %3656 = vmatprep.subr.mxu0 0.0
        %3657 = vmatpush1.msra.mxu0 0.0
        %3658 = vmatprep.subr.mxu0 0.0
        %3659 = vmatpush1.msra.mxu0 0.0
        %3660 = vmatprep.subr.mxu0 0.0
        %3661 = vmatpush1.msra.mxu0 0.0
        %3662 = vmatprep.subr.mxu0 0.0
        %3663 = vmatpush1.msra.mxu0 0.0
        %3664 = vmatprep.subr.mxu0 0.0
        %3665 = vmatpush1.msra.mxu0 0.0
        %3666 = vmatprep.subr.mxu0 0.0
        %3667 = vmatpush1.msra.mxu0 0.0
        %3668 = vmatprep.subr.mxu0 0.0
        %3669 = vmatpush1.msra.mxu0 0.0
        %3670 = vmatprep.subr.mxu0 0.0
        %3671 = vmatpush1.msra.mxu0 0.0
        %3672 = vmatprep.subr.mxu0 0.0
        %3673 = vmatpush1.msra.mxu0 0.0
        %3674 = vmatprep.subr.mxu0 0.0
        %3675 = vmatpush1.msra.mxu0 0.0
        %3676 = vmatprep.subr.mxu0 0.0
        %3677 = vmatpush1.msra.mxu0 0.0
        %3678 = vmatprep.subr.mxu0 0.0
        %3679 = vmatpush1.msra.mxu0 0.0
        %3680 = vmatprep.subr.mxu0 0.0
        %3681 = vmatpush1.msra.mxu0 0.0
        %3682 = vmatprep.subr.mxu0 0.0
        %3683 = vmatpush1.msra.mxu0 0.0
        %3684 = vmatprep.subr.mxu0 0.0
        %3685 = vmatpush1.msra.mxu0 0.0
        %3686 = vmatprep.subr.mxu0 0.0
        %3687 = vmatpush1.msra.mxu0 0.0
        %3688 = vmatprep.subr.mxu0 0.0
        %3689 = vmatpush1.msra.mxu0 0.0
        %3690 = vmatprep.subr.mxu0 0.0
        %3691 = vmatpush1.msra.mxu0 0.0
        %3692 = vmatprep.subr.mxu0 0.0
        %3693 = vmatpush1.msra.mxu0 0.0
        %3694 = vmatprep.subr.mxu0 0.0
        %3695 = vmatpush1.msra.mxu0 0.0
        %3696 = vmatprep.subr.mxu0 0.0
        %3697 = vmatpush1.msra.mxu0 0.0
        %3698 = vmatprep.subr.mxu0 0.0
        %3699 = vmatpush1.msra.mxu0 0.0
        %3700 = vmatprep.subr.mxu0 0.0
        %3701 = vmatpush1.msra.mxu0 0.0
        %3702 = vmatprep.subr.mxu0 0.0
        %3703 = vmatpush1.msra.mxu0 0.0
        %3704 = vmatprep.subr.mxu0 0.0
        %3705 = vmatpush1.msra.mxu0 0.0
        %3706 = vmatprep.subr.mxu0 0.0
        %3707 = vmatpush1.msra.mxu0 0.0
        %3708 = vmatprep.subr.mxu0 0.0
        %3709 = vmatpush1.msra.mxu0 0.0
        %3710 = vmatprep.subr.mxu0 0.0
        %3711 = vmatpush1.msra.mxu0 0.0
        %3712 = vmatprep.mubr.f32.mxu0 0.0
        %3713 = vmatmul.mubr.f32.gmra.mrb[0].mxu0 %v2293
        %v3714 = vpop.f32.mrb[0].mxu0
        %v3715 = vadd.f32 0.0, %v3714
        %v3716 = vpop.f32.mrb[0].mxu0
        %3717 = vmatprep.mubr.f32.mxu0 0.0
        %3718 = vmatmul.mubr.f32.gmra.mrb[0].mxu0 %v2296
        %v3719 = vpop.f32.mrb[0].mxu0
        %v3720 = vadd.f32 0.0, %v3719
        %v3721 = vpop.f32.mrb[0].mxu0
        %3722 = vdwg.mxu0
        %3723 = vmatprep.subr.mxu0 0.0
        %3724 = vmatpush1.msra.mxu0 %v2290
        %3725 = vmatprep.subr.mxu0 0.0
        %3726 = vmatpush1.msra.mxu0 %v2291
        %3727 = vmatprep.subr.mxu0 0.0
        %3728 = vmatpush1.msra.mxu0 0.0
        %3729 = vmatprep.subr.mxu0 0.0
        %3730 = vmatpush1.msra.mxu0 0.0
        %3731 = vmatprep.subr.mxu0 0.0
        %3732 = vmatpush1.msra.mxu0 0.0
        %3733 = vmatprep.subr.mxu0 0.0
        %3734 = vmatpush1.msra.mxu0 0.0
        %3735 = vmatprep.subr.mxu0 0.0
        %3736 = vmatpush1.msra.mxu0 0.0
        %3737 = vmatprep.subr.mxu0 0.0
        %3738 = vmatpush1.msra.mxu0 0.0
        %3739 = vmatprep.subr.mxu0 0.0
        %3740 = vmatpush1.msra.mxu0 0.0
        %3741 = vmatprep.subr.mxu0 0.0
        %3742 = vmatpush1.msra.mxu0 0.0
        %3743 = vmatprep.subr.mxu0 0.0
        %3744 = vmatpush1.msra.mxu0 0.0
        %3745 = vmatprep.subr.mxu0 0.0
        %3746 = vmatpush1.msra.mxu0 0.0
        %3747 = vmatprep.subr.mxu0 0.0
        %3748 = vmatpush1.msra.mxu0 0.0
        %3749 = vmatprep.subr.mxu0 0.0
        %3750 = vmatpush1.msra.mxu0 0.0
        %3751 = vmatprep.subr.mxu0 0.0
        %3752 = vmatpush1.msra.mxu0 0.0
        %3753 = vmatprep.subr.mxu0 0.0
        %3754 = vmatpush1.msra.mxu0 0.0
        %3755 = vmatprep.subr.mxu0 0.0
        %3756 = vmatpush1.msra.mxu0 0.0
        %3757 = vmatprep.subr.mxu0 0.0
        %3758 = vmatpush1.msra.mxu0 0.0
        %3759 = vmatprep.subr.mxu0 0.0
        %3760 = vmatpush1.msra.mxu0 0.0
        %3761 = vmatprep.subr.mxu0 0.0
        %3762 = vmatpush1.msra.mxu0 0.0
        %3763 = vmatprep.subr.mxu0 0.0
        %3764 = vmatpush1.msra.mxu0 0.0
        %3765 = vmatprep.subr.mxu0 0.0
        %3766 = vmatpush1.msra.mxu0 0.0
        %3767 = vmatprep.subr.mxu0 0.0
        %3768 = vmatpush1.msra.mxu0 0.0
        %3769 = vmatprep.subr.mxu0 0.0
        %3770 = vmatpush1.msra.mxu0 0.0
        %3771 = vmatprep.subr.mxu0 0.0
        %3772 = vmatpush1.msra.mxu0 0.0
        %3773 = vmatprep.subr.mxu0 0.0
        %3774 = vmatpush1.msra.mxu0 0.0
        %3775 = vmatprep.subr.mxu0 0.0
        %3776 = vmatpush1.msra.mxu0 0.0
        %3777 = vmatprep.subr.mxu0 0.0
        %3778 = vmatpush1.msra.mxu0 0.0
        %3779 = vmatprep.subr.mxu0 0.0
        %3780 = vmatpush1.msra.mxu0 0.0
        %3781 = vmatprep.subr.mxu0 0.0
        %3782 = vmatpush1.msra.mxu0 0.0
        %3783 = vmatprep.subr.mxu0 0.0
        %3784 = vmatpush1.msra.mxu0 0.0
        %3785 = vmatprep.subr.mxu0 0.0
        %3786 = vmatpush1.msra.mxu0 0.0
        %3787 = vmatprep.mubr.f32.mxu0 0.0
        %3788 = vmatmul.mubr.f32.gmra.mrb[0].mxu0 %v2293
        %v3789 = vpop.f32.mrb[0].mxu0
        %v3790 = vadd.f32 0.0, %v3789
        %v3791 = vpop.f32.mrb[0].mxu0
        %3792 = vmatprep.mubr.f32.mxu0 0.0
        %3793 = vmatmul.mubr.f32.gmra.mrb[0].mxu0 %v2296
        %v3794 = vpop.f32.mrb[0].mxu0
        %v3795 = vadd.f32 0.0, %v3794
        %v3796 = vpop.f32.mrb[0].mxu0
        %3797 = vdwg.mxu0
        %v3799 = vsel %vm630, %v2365, 0
        %v3802 = vsel %vm630, %v2370, 0
        %v3805 = vsel %vm630, %v2440, 0
        %v3808 = vsel %vm630, %v2445, 0
        %v3811 = vsel %vm630, %v2515, 0
        %v3814 = vsel %vm630, %v2520, 0
        %v3817 = vsel %vm630, %v2590, 0
        %v3820 = vsel %vm630, %v2595, 0
        %v3823 = vsel %vm630, %v2665, 0
        %v3826 = vsel %vm630, %v2670, 0
        %v3829 = vsel %vm630, %v2740, 0
        %v3832 = vsel %vm630, %v2745, 0
        %v3835 = vsel %vm630, %v2815, 0
        %v3838 = vsel %vm630, %v2820, 0
        %v3841 = vsel %vm630, %v2890, 0
        %v3844 = vsel %vm630, %v2895, 0
        %v3847 = vsel %vm630, %v2965, 0
        %v3850 = vsel %vm630, %v2970, 0
        %v3853 = vsel %vm630, %v3040, 0
        %v3856 = vsel %vm630, %v3045, 0
        %v3859 = vsel %vm630, %v3115, 0
        %v3862 = vsel %vm630, %v3120, 0
        %v3865 = vsel %vm630, %v3190, 0
        %v3868 = vsel %vm630, %v3195, 0
        %v3871 = vsel %vm630, %v3265, 0
        %v3874 = vsel %vm630, %v3270, 0
        %v3877 = vsel %vm630, %v3340, 0
        %v3880 = vsel %vm630, %v3345, 0
        %v3883 = vsel %vm630, %v3415, 0
        %v3886 = vsel %vm630, %v3420, 0
        %v3889 = vsel %vm630, %v3490, 0
        %v3892 = vsel %vm630, %v3495, 0
        %v3895 = vsel %vm630, %v3565, 0
        %v3898 = vsel %vm630, %v3570, 0
        %v3901 = vsel %vm630, %v3640, 0
        %v3904 = vsel %vm630, %v3645, 0
        %v3907 = vsel %vm630, %v3715, 0
        %v3910 = vsel %vm630, %v3720, 0
        %v3913 = vsel %vm630, %v3790, 0
        %v3916 = vsel %vm630, %v3795, 0
        %3918 = vmatprep.subr.mxu0 0.0
        %3919 = vmatpush1.msra.mxu0 %v583
        %3920 = vmatprep.subr.mxu0 0.0
        %3921 = vmatpush1.msra.mxu0 %v584
        %3922 = vmatprep.subr.mxu0 0.0
        %3923 = vmatpush1.msra.mxu0 0.0
        %3924 = vmatprep.subr.mxu0 0.0
        %3925 = vmatpush1.msra.mxu0 0.0
        %3926 = vmatprep.subr.mxu0 0.0
        %3927 = vmatpush1.msra.mxu0 0.0
        %3928 = vmatprep.subr.mxu0 0.0
        %3929 = vmatpush1.msra.mxu0 0.0
        %3930 = vmatprep.subr.mxu0 0.0
        %3931 = vmatpush1.msra.mxu0 0.0
        %3932 = vmatprep.subr.mxu0 0.0
        %3933 = vmatpush1.msra.mxu0 0.0
        %3934 = vmatprep.subr.mxu0 0.0
        %3935 = vmatpush1.msra.mxu0 0.0
        %3936 = vmatprep.subr.mxu0 0.0
        %3937 = vmatpush1.msra.mxu0 0.0
        %3938 = vmatprep.subr.mxu0 0.0
        %3939 = vmatpush1.msra.mxu0 0.0
        %3940 = vmatprep.subr.mxu0 0.0
        %3941 = vmatpush1.msra.mxu0 0.0
        %3942 = vmatprep.subr.mxu0 0.0
        %3943 = vmatpush1.msra.mxu0 0.0
        %3944 = vmatprep.subr.mxu0 0.0
        %3945 = vmatpush1.msra.mxu0 0.0
        %3946 = vmatprep.subr.mxu0 0.0
        %3947 = vmatpush1.msra.mxu0 0.0
        %3948 = vmatprep.subr.mxu0 0.0
        %3949 = vmatpush1.msra.mxu0 0.0
        %3950 = vmatprep.subr.mxu0 0.0
        %3951 = vmatpush1.msra.mxu0 0.0
        %3952 = vmatprep.subr.mxu0 0.0
        %3953 = vmatpush1.msra.mxu0 0.0
        %3954 = vmatprep.subr.mxu0 0.0
        %3955 = vmatpush1.msra.mxu0 0.0
        %3956 = vmatprep.subr.mxu0 0.0
        %3957 = vmatpush1.msra.mxu0 0.0
        %3958 = vmatprep.subr.mxu0 0.0
        %3959 = vmatpush1.msra.mxu0 0.0
        %3960 = vmatprep.subr.mxu0 0.0
        %3961 = vmatpush1.msra.mxu0 0.0
        %3962 = vmatprep.subr.mxu0 0.0
        %3963 = vmatpush1.msra.mxu0 0.0
        %3964 = vmatprep.subr.mxu0 0.0
        %3965 = vmatpush1.msra.mxu0 0.0
        %3966 = vmatprep.subr.mxu0 0.0
        %3967 = vmatpush1.msra.mxu0 0.0
        %3968 = vmatprep.subr.mxu0 0.0
        %3969 = vmatpush1.msra.mxu0 0.0
        %3970 = vmatprep.subr.mxu0 0.0
        %3971 = vmatpush1.msra.mxu0 0.0
        %3972 = vmatprep.subr.mxu0 0.0
        %3973 = vmatpush1.msra.mxu0 0.0
        %3974 = vmatprep.subr.mxu0 0.0
        %3975 = vmatpush1.msra.mxu0 0.0
        %3976 = vmatprep.subr.mxu0 0.0
        %3977 = vmatpush1.msra.mxu0 0.0
        %3978 = vmatprep.subr.mxu0 0.0
        %3979 = vmatpush1.msra.mxu0 0.0
        %3980 = vmatprep.subr.mxu0 0.0
        %3981 = vmatpush1.msra.mxu0 0.0
        %3982 = vmatprep.mubr.f32.mxu0 0.0
        %3983 = vmatmul.mubr.f32.gmra.mrb[0].mxu0 %v3799
        %v3984 = vpop.f32.mrb[0].mxu0
        %v3985 = vadd.f32 0.0, %v3984
        %v3986 = vpop.f32.mrb[0].mxu0
        %3987 = vmatprep.mubr.f32.mxu0 0.0
        %3988 = vmatmul.mubr.f32.gmra.mrb[0].mxu0 %v3802
        %v3989 = vpop.f32.mrb[0].mxu0
        %v3990 = vadd.f32 0.0, %v3989
        %v3991 = vpop.f32.mrb[0].mxu0
        %3992 = vmatprep.mubr.f32.mxu0 0.0
        %3993 = vmatmul.mubr.f32.gmra.mrb[0].mxu0 %v3805
        %v3994 = vpop.f32.mrb[0].mxu0
        %v3995 = vadd.f32 0.0, %v3994
        %v3996 = vpop.f32.mrb[0].mxu0
        %3997 = vmatprep.mubr.f32.mxu0 0.0
        %3998 = vmatmul.mubr.f32.gmra.mrb[0].mxu0 %v3808
        %v3999 = vpop.f32.mrb[0].mxu0
        %v4000 = vadd.f32 0.0, %v3999
        %v4001 = vpop.f32.mrb[0].mxu0
        %4002 = vmatprep.mubr.f32.mxu0 0.0
        %4003 = vmatmul.mubr.f32.gmra.mrb[0].mxu0 %v3811
        %v4004 = vpop.f32.mrb[0].mxu0
        %v4005 = vadd.f32 0.0, %v4004
        %v4006 = vpop.f32.mrb[0].mxu0
        %4007 = vmatprep.mubr.f32.mxu0 0.0
        %4008 = vmatmul.mubr.f32.gmra.mrb[0].mxu0 %v3814
        %v4009 = vpop.f32.mrb[0].mxu0
        %v4010 = vadd.f32 0.0, %v4009
        %v4011 = vpop.f32.mrb[0].mxu0
        %4012 = vmatprep.mubr.f32.mxu0 0.0
        %4013 = vmatmul.mubr.f32.gmra.mrb[0].mxu0 %v3817
        %v4014 = vpop.f32.mrb[0].mxu0
        %v4015 = vadd.f32 0.0, %v4014
        %v4016 = vpop.f32.mrb[0].mxu0
        %4017 = vmatprep.mubr.f32.mxu0 0.0
        %4018 = vmatmul.mubr.f32.gmra.mrb[0].mxu0 %v3820
        %v4019 = vpop.f32.mrb[0].mxu0
        %v4020 = vadd.f32 0.0, %v4019
        %v4021 = vpop.f32.mrb[0].mxu0
        %4022 = vmatprep.mubr.f32.mxu0 0.0
        %4023 = vmatmul.mubr.f32.gmra.mrb[0].mxu0 %v3823
        %v4024 = vpop.f32.mrb[0].mxu0
        %v4025 = vadd.f32 0.0, %v4024
        %v4026 = vpop.f32.mrb[0].mxu0
        %4027 = vmatprep.mubr.f32.mxu0 0.0
        %4028 = vmatmul.mubr.f32.gmra.mrb[0].mxu0 %v3826
        %v4029 = vpop.f32.mrb[0].mxu0
        %v4030 = vadd.f32 0.0, %v4029
        %v4031 = vpop.f32.mrb[0].mxu0
        %4032 = vmatprep.mubr.f32.mxu0 0.0
        %4033 = vmatmul.mubr.f32.gmra.mrb[0].mxu0 %v3829
        %v4034 = vpop.f32.mrb[0].mxu0
        %v4035 = vadd.f32 0.0, %v4034
        %v4036 = vpop.f32.mrb[0].mxu0
        %4037 = vmatprep.mubr.f32.mxu0 0.0
        %4038 = vmatmul.mubr.f32.gmra.mrb[0].mxu0 %v3832
        %v4039 = vpop.f32.mrb[0].mxu0
        %v4040 = vadd.f32 0.0, %v4039
        %v4041 = vpop.f32.mrb[0].mxu0
        %4042 = vmatprep.mubr.f32.mxu0 0.0
        %4043 = vmatmul.mubr.f32.gmra.mrb[0].mxu0 %v3835
        %v4044 = vpop.f32.mrb[0].mxu0
        %v4045 = vadd.f32 0.0, %v4044
        %v4046 = vpop.f32.mrb[0].mxu0
        %4047 = vmatprep.mubr.f32.mxu0 0.0
        %4048 = vmatmul.mubr.f32.gmra.mrb[0].mxu0 %v3838
        %v4049 = vpop.f32.mrb[0].mxu0
        %v4050 = vadd.f32 0.0, %v4049
        %v4051 = vpop.f32.mrb[0].mxu0
        %4052 = vmatprep.mubr.f32.mxu0 0.0
        %4053 = vmatmul.mubr.f32.gmra.mrb[0].mxu0 %v3841
        %v4054 = vpop.f32.mrb[0].mxu0
        %v4055 = vadd.f32 0.0, %v4054
        %v4056 = vpop.f32.mrb[0].mxu0
        %4057 = vmatprep.mubr.f32.mxu0 0.0
        %4058 = vmatmul.mubr.f32.gmra.mrb[0].mxu0 %v3844
        %v4059 = vpop.f32.mrb[0].mxu0
        %v4060 = vadd.f32 0.0, %v4059
        %v4061 = vpop.f32.mrb[0].mxu0
        %4062 = vmatprep.mubr.f32.mxu0 0.0
        %4063 = vmatmul.mubr.f32.gmra.mrb[0].mxu0 %v3847
        %v4064 = vpop.f32.mrb[0].mxu0
        %v4065 = vadd.f32 0.0, %v4064
        %v4066 = vpop.f32.mrb[0].mxu0
        %4067 = vmatprep.mubr.f32.mxu0 0.0
        %4068 = vmatmul.mubr.f32.gmra.mrb[0].mxu0 %v3850
        %v4069 = vpop.f32.mrb[0].mxu0
        %v4070 = vadd.f32 0.0, %v4069
        %v4071 = vpop.f32.mrb[0].mxu0
        %4072 = vmatprep.mubr.f32.mxu0 0.0
        %4073 = vmatmul.mubr.f32.gmra.mrb[0].mxu0 %v3853
        %v4074 = vpop.f32.mrb[0].mxu0
        %v4075 = vadd.f32 0.0, %v4074
        %v4076 = vpop.f32.mrb[0].mxu0
        %4077 = vmatprep.mubr.f32.mxu0 0.0
        %4078 = vmatmul.mubr.f32.gmra.mrb[0].mxu0 %v3856
        %v4079 = vpop.f32.mrb[0].mxu0
        %v4080 = vadd.f32 0.0, %v4079
        %v4081 = vpop.f32.mrb[0].mxu0
        %4082 = vmatprep.mubr.f32.mxu0 0.0
        %4083 = vmatmul.mubr.f32.gmra.mrb[0].mxu0 %v3859
        %v4084 = vpop.f32.mrb[0].mxu0
        %v4085 = vadd.f32 0.0, %v4084
        %v4086 = vpop.f32.mrb[0].mxu0
        %4087 = vmatprep.mubr.f32.mxu0 0.0
        %4088 = vmatmul.mubr.f32.gmra.mrb[0].mxu0 %v3862
        %v4089 = vpop.f32.mrb[0].mxu0
        %v4090 = vadd.f32 0.0, %v4089
        %v4091 = vpop.f32.mrb[0].mxu0
        %4092 = vmatprep.mubr.f32.mxu0 0.0
        %4093 = vmatmul.mubr.f32.gmra.mrb[0].mxu0 %v3865
        %v4094 = vpop.f32.mrb[0].mxu0
        %v4095 = vadd.f32 0.0, %v4094
        %v4096 = vpop.f32.mrb[0].mxu0
        %4097 = vmatprep.mubr.f32.mxu0 0.0
        %4098 = vmatmul.mubr.f32.gmra.mrb[0].mxu0 %v3868
        %v4099 = vpop.f32.mrb[0].mxu0
        %v4100 = vadd.f32 0.0, %v4099
        %v4101 = vpop.f32.mrb[0].mxu0
        %4102 = vmatprep.mubr.f32.mxu0 0.0
        %4103 = vmatmul.mubr.f32.gmra.mrb[0].mxu0 %v3871
        %v4104 = vpop.f32.mrb[0].mxu0
        %v4105 = vadd.f32 0.0, %v4104
        %v4106 = vpop.f32.mrb[0].mxu0
        %4107 = vmatprep.mubr.f32.mxu0 0.0
        %4108 = vmatmul.mubr.f32.gmra.mrb[0].mxu0 %v3874
        %v4109 = vpop.f32.mrb[0].mxu0
        %v4110 = vadd.f32 0.0, %v4109
        %v4111 = vpop.f32.mrb[0].mxu0
        %4112 = vmatprep.mubr.f32.mxu0 0.0
        %4113 = vmatmul.mubr.f32.gmra.mrb[0].mxu0 %v3877
        %v4114 = vpop.f32.mrb[0].mxu0
        %v4115 = vadd.f32 0.0, %v4114
        %v4116 = vpop.f32.mrb[0].mxu0
        %4117 = vmatprep.mubr.f32.mxu0 0.0
        %4118 = vmatmul.mubr.f32.gmra.mrb[0].mxu0 %v3880
        %v4119 = vpop.f32.mrb[0].mxu0
        %v4120 = vadd.f32 0.0, %v4119
        %v4121 = vpop.f32.mrb[0].mxu0
        %4122 = vmatprep.mubr.f32.mxu0 0.0
        %4123 = vmatmul.mubr.f32.gmra.mrb[0].mxu0 %v3883
        %v4124 = vpop.f32.mrb[0].mxu0
        %v4125 = vadd.f32 0.0, %v4124
        %v4126 = vpop.f32.mrb[0].mxu0
        %4127 = vmatprep.mubr.f32.mxu0 0.0
        %4128 = vmatmul.mubr.f32.gmra.mrb[0].mxu0 %v3886
        %v4129 = vpop.f32.mrb[0].mxu0
        %v4130 = vadd.f32 0.0, %v4129
        %v4131 = vpop.f32.mrb[0].mxu0
        %4132 = vmatprep.mubr.f32.mxu0 0.0
        %4133 = vmatmul.mubr.f32.gmra.mrb[0].mxu0 %v3889
        %v4134 = vpop.f32.mrb[0].mxu0
        %v4135 = vadd.f32 0.0, %v4134
        %v4136 = vpop.f32.mrb[0].mxu0
        %4137 = vmatprep.mubr.f32.mxu0 0.0
        %4138 = vmatmul.mubr.f32.gmra.mrb[0].mxu0 %v3892
        %v4139 = vpop.f32.mrb[0].mxu0
        %v4140 = vadd.f32 0.0, %v4139
        %v4141 = vpop.f32.mrb[0].mxu0
        %4142 = vmatprep.mubr.f32.mxu0 0.0
        %4143 = vmatmul.mubr.f32.gmra.mrb[0].mxu0 %v3895
        %v4144 = vpop.f32.mrb[0].mxu0
        %v4145 = vadd.f32 0.0, %v4144
        %v4146 = vpop.f32.mrb[0].mxu0
        %4147 = vmatprep.mubr.f32.mxu0 0.0
        %4148 = vmatmul.mubr.f32.gmra.mrb[0].mxu0 %v3898
        %v4149 = vpop.f32.mrb[0].mxu0
        %v4150 = vadd.f32 0.0, %v4149
        %v4151 = vpop.f32.mrb[0].mxu0
        %4152 = vmatprep.mubr.f32.mxu0 0.0
        %4153 = vmatmul.mubr.f32.gmra.mrb[0].mxu0 %v3901
        %v4154 = vpop.f32.mrb[0].mxu0
        %v4155 = vadd.f32 0.0, %v4154
        %v4156 = vpop.f32.mrb[0].mxu0
        %4157 = vmatprep.mubr.f32.mxu0 0.0
        %4158 = vmatmul.mubr.f32.gmra.mrb[0].mxu0 %v3904
        %v4159 = vpop.f32.mrb[0].mxu0
        %v4160 = vadd.f32 0.0, %v4159
        %v4161 = vpop.f32.mrb[0].mxu0
        %4162 = vmatprep.mubr.f32.mxu0 0.0
        %4163 = vmatmul.mubr.f32.gmra.mrb[0].mxu0 %v3907
        %v4164 = vpop.f32.mrb[0].mxu0
        %v4165 = vadd.f32 0.0, %v4164
        %v4166 = vpop.f32.mrb[0].mxu0
        %4167 = vmatprep.mubr.f32.mxu0 0.0
        %4168 = vmatmul.mubr.f32.gmra.mrb[0].mxu0 %v3910
        %v4169 = vpop.f32.mrb[0].mxu0
        %v4170 = vadd.f32 0.0, %v4169
        %v4171 = vpop.f32.mrb[0].mxu0
        %4172 = vmatprep.mubr.f32.mxu0 0.0
        %4173 = vmatmul.mubr.f32.gmra.mrb[0].mxu0 %v3913
        %v4174 = vpop.f32.mrb[0].mxu0
        %v4175 = vadd.f32 0.0, %v4174
        %v4176 = vpop.f32.mrb[0].mxu0
        %4177 = vmatprep.mubr.f32.mxu0 0.0
        %4178 = vmatmul.mubr.f32.gmra.mrb[0].mxu0 %v3916
        %v4179 = vpop.f32.mrb[0].mxu0
        %v4180 = vadd.f32 0.0, %v4179
        %v4181 = vpop.f32.mrb[0].mxu0
        %4182 = vdwg.mxu0
        %v4183 = vmul.f32 %v3985, %v3985
        %v4184 = vmul.f32 %v3990, %v3990
        %v4185 = vsub.f32 %v4005, %v4183
        %v4186 = vsub.f32 %v4010, %v4184
        %v4187 = vmul.f32 %v3995, %v3995
        %v4188 = vmul.f32 %v4000, %v4000
        %v4189 = vsub.f32 %v4015, %v4187
        %v4190 = vsub.f32 %v4020, %v4188
        %v4191 = vmul.f32 %v3985, %v3995
        %v4192 = vmul.f32 %v3990, %v4000
        %v4193 = vsub.f32 %v4025, %v4191
        %v4194 = vsub.f32 %v4030, %v4192
        %v4195 = vmul.f32 %v3985, 2.0
        %v4196 = vmul.f32 %v3990, 2.0
        %v4197 = vmul.f32 %v4195, %v3995
        %v4198 = vmul.f32 %v4196, %v4000
        %v4199 = vadd.f32 %v4197, 0.0001
        %v4200 = vadd.f32 %v4198, 0.0001
        %v4201 = vmul.f32 %v4193, 2.0
        %v4202 = vmul.f32 %v4194, 2.0
        %v4203 = vadd.f32 %v4201, 0.0009
        %v4204 = vadd.f32 %v4202, 0.0009
        %v4205 = vmul.f32 %v4199, %v4203
        %v4206 = vmul.f32 %v4200, %v4204
        %v4207 = vadd.f32 %v4183, %v4187
        %v4208 = vadd.f32 %v4184, %v4188
        %v4209 = vadd.f32 %v4207, 0.0001
        %v4210 = vadd.f32 %v4208, 0.0001
        %v4211 = vadd.f32 %v4185, %v4189
        %v4212 = vadd.f32 %v4186, %v4190
        %v4213 = vadd.f32 %v4211, 0.0009
        %v4214 = vadd.f32 %v4212, 0.0009
        %v4215 = vmul.f32 %v4209, %v4213
        %v4216 = vmul.f32 %v4210, %v4214
        %v4217 = vrcp.pop %v4215
        %v4218 = vmul.f32 %v4205, %v4217
        %v4219 = vrcp.pop %v4216
        %v4220 = vmul.f32 %v4206, %v4219
        %v4221 = vsel %vm630, %v4218, 0.0
        %v4222 = vsel %vm630, %v4220, 0.0
        %v4223 = vadd.f32 %v4221, %v4222
        %4224 = vadd.xlane.f32.xlu0 %v4223
        %v4225 = vpop.xlane.xlu0 %4224
        %v4226 = vrot.slane %v4225, 4
        %v4227 = vadd.f32 %v4225, %v4226
        %v4228 = vrot.slane %v4227, 2
        %v4229 = vadd.f32 %v4227, %v4228
        %v4230 = vrot.slane %v4229, 1
        %v4231 = vadd.f32 %v4229, %v4230
        %s4232 = vtos %v4231
        %v4233 = vstv %s4232
        %v4234 = vadd.f32 %v4233, 0.0
        %v4235 = vmul.f32 %v4035, %v4035
        %v4236 = vmul.f32 %v4040, %v4040
        %v4237 = vsub.f32 %v4055, %v4235
        %v4238 = vsub.f32 %v4060, %v4236
        %v4239 = vmul.f32 %v4045, %v4045
        %v4240 = vmul.f32 %v4050, %v4050
        %v4241 = vsub.f32 %v4065, %v4239
        %v4242 = vsub.f32 %v4070, %v4240
        %v4243 = vmul.f32 %v4035, %v4045
        %v4244 = vmul.f32 %v4040, %v4050
        %v4245 = vsub.f32 %v4075, %v4243
        %v4246 = vsub.f32 %v4080, %v4244
        %v4247 = vmul.f32 %v4035, 2.0
        %v4248 = vmul.f32 %v4040, 2.0
        %v4249 = vmul.f32 %v4247, %v4045
        %v4250 = vmul.f32 %v4248, %v4050
        %v4251 = vadd.f32 %v4249, 0.0001
        %v4252 = vadd.f32 %v4250, 0.0001
        %v4253 = vmul.f32 %v4245, 2.0
        %v4254 = vmul.f32 %v4246, 2.0
        %v4255 = vadd.f32 %v4253, 0.0009
        %v4256 = vadd.f32 %v4254, 0.0009
        %v4257 = vmul.f32 %v4251, %v4255
        %v4258 = vmul.f32 %v4252, %v4256
        %v4259 = vadd.f32 %v4235, %v4239
        %v4260 = vadd.f32 %v4236, %v4240
        %v4261 = vadd.f32 %v4259, 0.0001
        %v4262 = vadd.f32 %v4260, 0.0001
        %v4263 = vadd.f32 %v4237, %v4241
        %v4264 = vadd.f32 %v4238, %v4242
        %v4265 = vadd.f32 %v4263, 0.0009
        %v4266 = vadd.f32 %v4264, 0.0009
        %v4267 = vmul.f32 %v4261, %v4265
        %v4268 = vmul.f32 %v4262, %v4266
        %v4269 = vrcp.pop %v4267
        %v4270 = vmul.f32 %v4257, %v4269
        %v4271 = vrcp.pop %v4268
        %v4272 = vmul.f32 %v4258, %v4271
        %v4273 = vsel %vm630, %v4270, 0.0
        %v4274 = vsel %vm630, %v4272, 0.0
        %v4275 = vadd.f32 %v4273, %v4274
        %4276 = vadd.xlane.f32.xlu0 %v4275
        %v4277 = vpop.xlane.xlu0 %4276
        %v4278 = vrot.slane %v4277, 4
        %v4279 = vadd.f32 %v4277, %v4278
        %v4280 = vrot.slane %v4279, 2
        %v4281 = vadd.f32 %v4279, %v4280
        %v4282 = vrot.slane %v4281, 1
        %v4283 = vadd.f32 %v4281, %v4282
        %s4284 = vtos %v4283
        %v4285 = vstv %s4284
        %v4286 = vadd.f32 %v4234, %v4285
        %v4287 = vmul.f32 %v4085, %v4085
        %v4288 = vmul.f32 %v4090, %v4090
        %v4289 = vsub.f32 %v4105, %v4287
        %v4290 = vsub.f32 %v4110, %v4288
        %v4291 = vmul.f32 %v4095, %v4095
        %v4292 = vmul.f32 %v4100, %v4100
        %v4293 = vsub.f32 %v4115, %v4291
        %v4294 = vsub.f32 %v4120, %v4292
        %v4295 = vmul.f32 %v4085, %v4095
        %v4296 = vmul.f32 %v4090, %v4100
        %v4297 = vsub.f32 %v4125, %v4295
        %v4298 = vsub.f32 %v4130, %v4296
        %v4299 = vmul.f32 %v4085, 2.0
        %v4300 = vmul.f32 %v4090, 2.0
        %v4301 = vmul.f32 %v4299, %v4095
        %v4302 = vmul.f32 %v4300, %v4100
        %v4303 = vadd.f32 %v4301, 0.0001
        %v4304 = vadd.f32 %v4302, 0.0001
        %v4305 = vmul.f32 %v4297, 2.0
        %v4306 = vmul.f32 %v4298, 2.0
        %v4307 = vadd.f32 %v4305, 0.0009
        %v4308 = vadd.f32 %v4306, 0.0009
        %v4309 = vmul.f32 %v4303, %v4307
        %v4310 = vmul.f32 %v4304, %v4308
        %v4311 = vadd.f32 %v4287, %v4291
        %v4312 = vadd.f32 %v4288, %v4292
        %v4313 = vadd.f32 %v4311, 0.0001
        %v4314 = vadd.f32 %v4312, 0.0001
        %v4315 = vadd.f32 %v4289, %v4293
        %v4316 = vadd.f32 %v4290, %v4294
        %v4317 = vadd.f32 %v4315, 0.0009
        %v4318 = vadd.f32 %v4316, 0.0009
        %v4319 = vmul.f32 %v4313, %v4317
        %v4320 = vmul.f32 %v4314, %v4318
        %v4321 = vrcp.pop %v4319
        %v4322 = vmul.f32 %v4309, %v4321
        %v4323 = vrcp.pop %v4320
        %v4324 = vmul.f32 %v4310, %v4323
        %v4325 = vsel %vm630, %v4322, 0.0
        %v4326 = vsel %vm630, %v4324, 0.0
        %v4327 = vadd.f32 %v4325, %v4326
        %4328 = vadd.xlane.f32.xlu0 %v4327
        %v4329 = vpop.xlane.xlu0 %4328
        %v4330 = vrot.slane %v4329, 4
        %v4331 = vadd.f32 %v4329, %v4330
        %v4332 = vrot.slane %v4331, 2
        %v4333 = vadd.f32 %v4331, %v4332
        %v4334 = vrot.slane %v4333, 1
        %v4335 = vadd.f32 %v4333, %v4334
        %s4336 = vtos %v4335
        %v4337 = vstv %s4336
        %v4338 = vadd.f32 %v4286, %v4337
        %v4339 = vmul.f32 %v4135, %v4135
        %v4340 = vmul.f32 %v4140, %v4140
        %v4341 = vsub.f32 %v4155, %v4339
        %v4342 = vsub.f32 %v4160, %v4340
        %v4343 = vmul.f32 %v4145, %v4145
        %v4344 = vmul.f32 %v4150, %v4150
        %v4345 = vsub.f32 %v4165, %v4343
        %v4346 = vsub.f32 %v4170, %v4344
        %v4347 = vmul.f32 %v4135, %v4145
        %v4348 = vmul.f32 %v4140, %v4150
        %v4349 = vsub.f32 %v4175, %v4347
        %v4350 = vsub.f32 %v4180, %v4348
        %v4351 = vmul.f32 %v4135, 2.0
        %v4352 = vmul.f32 %v4140, 2.0
        %v4353 = vmul.f32 %v4351, %v4145
        %v4354 = vmul.f32 %v4352, %v4150
        %v4355 = vadd.f32 %v4353, 0.0001
        %v4356 = vadd.f32 %v4354, 0.0001
        %v4357 = vmul.f32 %v4349, 2.0
        %v4358 = vmul.f32 %v4350, 2.0
        %v4359 = vadd.f32 %v4357, 0.0009
        %v4360 = vadd.f32 %v4358, 0.0009
        %v4361 = vmul.f32 %v4355, %v4359
        %v4362 = vmul.f32 %v4356, %v4360
        %v4363 = vadd.f32 %v4339, %v4343
        %v4364 = vadd.f32 %v4340, %v4344
        %v4365 = vadd.f32 %v4363, 0.0001
        %v4366 = vadd.f32 %v4364, 0.0001
        %v4367 = vadd.f32 %v4341, %v4345
        %v4368 = vadd.f32 %v4342, %v4346
        %v4369 = vadd.f32 %v4367, 0.0009
        %v4370 = vadd.f32 %v4368, 0.0009
        %v4371 = vmul.f32 %v4365, %v4369
        %v4372 = vmul.f32 %v4366, %v4370
        %v4373 = vrcp.pop %v4371
        %v4374 = vmul.f32 %v4361, %v4373
        %v4375 = vrcp.pop %v4372
        %v4376 = vmul.f32 %v4362, %v4375
        %v4377 = vsel %vm630, %v4374, 0.0
        %v4378 = vsel %vm630, %v4376, 0.0
        %v4379 = vadd.f32 %v4377, %v4378
        %4380 = vadd.xlane.f32.xlu0 %v4379
        %v4381 = vpop.xlane.xlu0 %4380
        %v4382 = vrot.slane %v4381, 4
        %v4383 = vadd.f32 %v4381, %v4382
        %v4384 = vrot.slane %v4383, 2
        %v4385 = vadd.f32 %v4383, %v4384
        %v4386 = vrot.slane %v4385, 1
        %v4387 = vadd.f32 %v4385, %v4386
        %s4388 = vtos %v4387
        %v4389 = vstv %s4388
        %v4390 = vadd.f32 %v4338, %v4389
        %v4391 = vld [vmem:[#allocation10] sm:$0x1]
        %v4392 = vadd.f32 %v4391, %v4390
        %4393 = vst.msk [vmem:[#allocation10] sm:$0x1] %vm701, %v4392
        %p4394 = scmp.eq.s32.totalorder %s32, 1
        // Predicated region
        $region57: #{tpu_custom_call.1} parent=35 // pred_check
          %p4395 = pneg %p4394
        $region58: #{tpu_custom_call.1} parent=35 // pred_check_branch
          %4397 = sbr.rel (%p4395) target = $region60
        $region59: #{tpu_custom_call.1} parent=35 // pred_region
          %v4398 = vlaneseq
          %v4399 = vshrl.u32 %v4398, 7
          %v4400 = vlaneseq
          %v4401 = vand.u32 %v4400, 127
          %vm4402 = vcmp.eq.s32.totalorder %v4399, 0
          %vm4403 = vcmp.eq.s32.totalorder %v4401, 0
          %vm4404 = vmand %vm4402, %vm4403
          %v4405 = vld [vmem:[#allocation7] sm:$0x1]
          %v4407 = vlaneseq
          %v4408 = vshrl.u32 %v4407, 7
          %v4409 = vsub.s32 0, %v4408
          %v4410 = vrot.slane %v4405, %v4409
          %4411 = vset.pattern.permute.xlu0 0
          %4412 = vperm.xlu0 %4411, %v4410
          %v4413 = vpop.permute.xlu0 %4412
          %v4415 = vsel %vm4404, %v4413, 0.0
          %vm4416 = vcmp.eq.s32.totalorder %v4401, 1
          %vm4417 = vmand %vm4402, %vm4416
          %v4418 = vld [vmem:[#allocation8] sm:$0x1]
          %v4420 = vlaneseq
          %v4421 = vshrl.u32 %v4420, 7
          %v4422 = vsub.s32 0, %v4421
          %v4423 = vrot.slane %v4418, %v4422
          %4424 = vset.pattern.permute.xlu0 0
          %4425 = vperm.xlu0 %4424, %v4423
          %v4426 = vpop.permute.xlu0 %4425
          %v4428 = vsel %vm4417, %v4426, 0.0
          %v4429 = vadd.f32 %v4415, %v4428
          %vm4430 = vcmp.eq.s32.totalorder %v4401, 2
          %vm4431 = vmand %vm4402, %vm4430
          %v4432 = vld [vmem:[#allocation9] sm:$0x1]
          %v4434 = vlaneseq
          %v4435 = vshrl.u32 %v4434, 7
          %v4436 = vsub.s32 0, %v4435
          %v4437 = vrot.slane %v4432, %v4436
          %4438 = vset.pattern.permute.xlu0 0
          %4439 = vperm.xlu0 %4438, %v4437
          %v4440 = vpop.permute.xlu0 %4439
          %v4442 = vsel %vm4431, %v4440, 0.0
          %v4443 = vadd.f32 %v4429, %v4442
          %vm4444 = vcmp.eq.s32.totalorder %v4401, 3
          %vm4445 = vmand %vm4402, %vm4444
          %v4446 = vld [vmem:[#allocation10] sm:$0x1]
          %v4448 = vlaneseq
          %v4449 = vshrl.u32 %v4448, 7
          %v4450 = vsub.s32 0, %v4449
          %v4451 = vrot.slane %v4446, %v4450
          %4452 = vset.pattern.permute.xlu0 0
          %4453 = vperm.xlu0 %4452, %v4451
          %v4454 = vpop.permute.xlu0 %4453
          %v4456 = vsel %vm4445, %v4454, 0.0
          %v4457 = vadd.f32 %v4443, %v4456
          %4458 = vst [vmem:[%s372] sm:$0xff] %v4457
        $region60: #{tpu_custom_call.1} parent=35 // pred_fallthru
          _
        %s4459 = sand.u32 %s167, 1
        %s4460 = scalar_lea.sflag [#allocation13], %s4459
        %s4461 = sand.u32 %s167, 1
        %s4462 = smul.addr %s4461, 8
        %s4463 = scalar_lea.vmem [#allocation19], %s4462
        // Predicated region
        $region61: #{tpu_custom_call.1} parent=35 // pred_check
          %p4464 = pneg %p177
        $region62: #{tpu_custom_call.1} parent=35 // pred_check_branch
          %4466 = sbr.rel (%p4464) target = $region64
        $region63: #{tpu_custom_call.1} parent=35 // pred_region
          %s4468 = ssub.s32 128, 128
          %4469 = vsyncadd %s4460, %s4468
          %s4470 = smul.addr %s31, 128
          %s4471 = scalar_lea.hbm %s4, %s4470
          %s4473 = sshll.u32 %s4463, 4
          %s4474 = int_to_ptr.vmem [resolvable:$true] %s4473
          %4476 = dma.vmem_to_hbm [thread:$0]  %s4474, 128, %s4471, %s4460
        $region64: #{tpu_custom_call.1} parent=35 // pred_fallthru
          _
      $region36: #{tpu_custom_call.1} parent=5 // pred_fallthru
        _
      %p4477 = scmp.le.s32.totalorder 2, %s22
      // Predicated region
      $region65: #{tpu_custom_call.1} parent=5 // pred_check
        %p4478 = pneg %p4477
      $region66: #{tpu_custom_call.1} parent=5 // pred_check_branch
        %4480 = sbr.rel (%p4478) target = $region68
      $region67: #{tpu_custom_call.1} parent=5 // pred_region
        %s4481 = ssub.s32 %s22, 2
        // Predicated region
        $region69: #{tpu_custom_call.1} parent=67 // pred_check
          %p4482 = pneg %p183
        $region70: #{tpu_custom_call.1} parent=67 // pred_check_branch
          %4484 = sbr.rel (%p4482) target = $region72
        $region71: #{tpu_custom_call.1} parent=67 // pred_region
          %s4485 = sand.u32 %s168, 1
          %s4486 = scalar_lea.sflag [#allocation13], %s4485
          %s4487 = sand.u32 %s168, 1
          %s4488 = smul.addr %s4487, 8
          %s4489 = scalar_lea.vmem [#allocation19], %s4488
          %4490 = dma.done %s4486, 128
        $region72: #{tpu_custom_call.1} parent=67 // pred_fallthru
          _
      $region68: #{tpu_custom_call.1} parent=5 // pred_fallthru
        _
    $region6: #{tpu_custom_call.1} parent=1 // loop_footer
      %s26 = sadd.s32 1, %s22
    $region7: #{tpu_custom_call.1} parent=1 // loop_footer_branch
      %21 = sbr.rel target = $region3
    $region8: #{tpu_custom_call.1} parent=1 // loop_exit
      _
    %4491 = vsyncpa [#allocation12], 1
    %s4492 = scalar_lea.sflag [#allocation12], 1
    %4493 = vsyncpa %s4492, 1
    %4494 = vsyncpa [#allocation15], 1
    %s4495 = scalar_lea.sflag [#allocation15], 1
    %4496 = vsyncpa %s4495, 1
    %4497 = vsyncpa [#allocation18], 1
    %s4498 = scalar_lea.sflag [#allocation18], 1
    %4499 = vsyncpa %s4498, 1
    %4500 = vsyncpa [#allocation13], 1
    %s4501 = scalar_lea.sflag [#allocation13], 1
    %4502 = vsyncpa %s4501, 1

</llo_original>
